<compile_context>
chip_gen: v6e
topology: v6e:2x2x1
jax: 0.10.0
libtpu: 0.0.40
codegen_flags: <defaults>
</compile_context>

<pallas_src>
import functools

import jax
import jax.numpy as jnp
from jax.experimental import pallas as pl
from jax.experimental.pallas import tpu as pltpu


_CP = 128      # padded channel width: lane-dense MXU N dim and output stores
_EPS = 1e-5    # PyTorch BatchNorm2d default


# ----------------------------------------------------------------------------
# Fused (conv3x3 + BN + ReLU) x 2 kernel — one grid step per batch image
# ----------------------------------------------------------------------------
def _fused_conv_block_kernel(xcol_ref, w1_ref, s1_ref, t1_ref,
                             w2_ref, s2_ref, t2_ref, o_ref, y1s_ref,
                             *, h, w, lead, trail):
    """One grid step = one batch image, fully resident in VMEM.

    xcol_ref: (h*wp, 9*cin) bf16   im2col'd network input (wp = w + 2)
    w1_ref  : (9*cin, 128)  bf16   conv1 weights, Cout padded to 128 lanes
    s1/t1   : (1, 128)      f32    folded BN1 scale / (conv-bias + BN1) shift
    w2_ref  : (9, 128, 128) bf16   conv2 taps, Cin & Cout padded to 128
    s2/t2   : (1, 128)      f32    folded BN2 scale / shift
    o_ref   : (h*wp, 128)   f32    fused output (overhang cols w, w+1 and
                                   channels >= cout are sliced off by wrapper)
    y1s_ref : (lead + h*wp + trail, 128) f32 scratch — conv1 output staged as
              conv2's zero-padded input (flattened rows of width wp).
    """
    wp = w + 2
    hwp = h * wp
    cp = o_ref.shape[-1]

    # ---- conv1: one MXU matmul (K = 9*cin), f32 epilogue -------------------
    a1 = jnp.dot(xcol_ref[...], w1_ref[...], preferred_element_type=jnp.float32)
    y1 = jnp.maximum(a1 * s1_ref[...] + t1_ref[...], 0.0)

    # Columns c in {w, w+1} of each flattened row are exactly the positions
    # that become conv2's width halo — force them to zero before staging.
    col = jax.lax.broadcasted_iota(jnp.int32, (hwp, 1), 0) % wp
    y1 = jnp.where(col < w, y1, 0.0)
    # Round to bf16 (matmul-operand precision of the second layer), keep the
    # staged buffer in f32 so all sublane-shifted reads use the 32-bit path.
    y1 = y1.astype(jnp.bfloat16).astype(jnp.float32)

    # ---- stage conv1 output as conv2's spatially padded input (VMEM only) --
    # Rows [0, lead) and [lead+hwp, end) are the top/bottom zero halo; the
    # payload store at offset `lead` is sublane-aligned by construction.
    y1s_ref[pl.ds(0, lead), :] = jnp.zeros((lead, cp), y1s_ref.dtype)
    y1s_ref[pl.ds(lead + hwp, trail), :] = jnp.zeros((trail, cp), y1s_ref.dtype)
    y1s_ref[pl.ds(lead, hwp), :] = y1

    # ---- conv2: nine shifted K=128 matmuls, f32 accumulation on the MXU ----
    base = lead - wp - 1                     # static, >= 0 by construction
    acc = jnp.zeros((hwp, cp), jnp.float32)
    for dy in range(3):
        for dx in range(3):
            win = y1s_ref[pl.ds(base + dy * wp + dx, hwp), :]
            acc = acc + jnp.dot(win.astype(jnp.bfloat16), w2_ref[dy * 3 + dx],
                                preferred_element_type=jnp.float32)

    # Fused BN + ReLU epilogue and a single lane-dense (128-wide) f32 store.
    o_ref[...] = jnp.maximum(acc * s2_ref[...] + t2_ref[...], 0.0).astype(o_ref.dtype)


# ----------------------------------------------------------------------------
# Wrapper
# ----------------------------------------------------------------------------
def _fold_bn(p, eps=_EPS):
    s = p["gamma"] / jnp.sqrt(p["var"] + eps)
    return s, (p["b"] - p["mean"]) * s + p["beta"]


def _padded_vmem_bytes(shape, dtype):
    """Real VMEM footprint: last dim padded to 128 lanes, second-to-last to the
    dtype's sublane tile (8 for 4-byte, 16 for 2-byte, 32 for 1-byte types)."""
    item = jnp.dtype(dtype).itemsize
    sub = {4: 8, 2: 16, 1: 32}[item]
    dims = list(shape)
    dims[-1] = -(-dims[-1] // 128) * 128
    if len(dims) >= 2:
        dims[-2] = -(-dims[-2] // sub) * sub
    total = item
    for d in dims:
        total *= d
    return total


def conv_block_pallas(x_nhwc, p1, p2):
    """relu(BN2(conv2(relu(BN1(conv1(x)))))) with BN running stats folded in."""
    n, h, w, cin = x_nhwc.shape
    cmid = p1["w"].shape[0]
    cout = p2["w"].shape[0]
    if cmid > _CP or cout > _CP:
        # TODO(synk): block over output channels for widths > 128.
        raise NotImplementedError("channel widths > 128 not supported")

    wp = w + 2                                  # one halo column each side
    hwp = h * wp
    lead = -(-(wp + 1) // 16) * 16              # sublane-aligned top halo
    trail = lead                                # bottom halo (>= wp + 1)

    # Fold conv bias + BatchNorm (inference) into per-channel scale / shift.
    s1, t1 = _fold_bn(p1)
    s2, t2 = _fold_bn(p2)

    # Wrapper-side im2col of the (tiny) network input -> K = 9*cin.
    # Padding: 1 row top/bottom, 1 col left, 3 cols right (1 'same' halo + 2 so
    # the two discarded overhang columns of each flattened row stay in bounds).
    xpad = jnp.pad(x_nhwc, ((0, 0), (1, 1), (1, 3), (0, 0))).astype(jnp.bfloat16)
    taps = [xpad[:, dy:dy + h, dx:dx + wp, :]
            for dy in range(3) for dx in range(3)]
    xcol = jnp.concatenate(taps, axis=-1).reshape(n, hwp, 9 * cin)

    # Weights / epilogue constants, channel dims padded to 128 lanes.
    w1 = jnp.transpose(p1["w"], (2, 3, 1, 0)).reshape(9 * cin, cmid)
    w1 = jnp.pad(w1, ((0, 0), (0, _CP - cmid))).astype(jnp.bfloat16)
    w2 = jnp.transpose(p2["w"], (2, 3, 1, 0)).reshape(9, cmid, cout)
    w2 = jnp.pad(w2, ((0, 0), (0, _CP - cmid), (0, _CP - cout))).astype(jnp.bfloat16)

    def pad_vec(v, c):
        return jnp.pad(v, (0, _CP - c)).reshape(1, _CP).astype(jnp.float32)

    s1p, t1p = pad_vec(s1, cmid), pad_vec(t1, cmid)
    s2p, t2p = pad_vec(s2, cout), pad_vec(t2, cout)

    # Corrected (lane/sublane padded) VMEM accounting.
    working = (
        2 * _padded_vmem_bytes((hwp, 9 * cin), jnp.bfloat16)          # xcol (dbl buf)
        + 2 * _padded_vmem_bytes((9 * cin, _CP), jnp.bfloat16)        # w1
        + 2 * _padded_vmem_bytes((9, _CP, _CP), jnp.bfloat16)         # w2
        + 8 * _padded_vmem_bytes((1, _CP), jnp.float32)               # scales/shifts
        + 2 * _padded_vmem_bytes((hwp, _CP), jnp.float32)             # out (dbl buf)
        + _padded_vmem_bytes((lead + hwp + trail, _CP), jnp.float32)  # y1 stage
        + 3 * _padded_vmem_bytes((hwp, _CP), jnp.float32)             # live f32 temps
    )
    try:
        # Quarter of physical VMEM per core (v7x: both TCs allocate their own
        # copy out of 64 MiB), capped so it also fits v5e's 16 MiB default
        # scoped limit without raising vmem_limit_bytes.
        budget = min(pltpu.get_tpu_info().vmem_capacity_bytes // 4, 12 << 20)
    except Exception:
        budget = 12 << 20
    if working > budget:
        # TODO(synk): row-tiled (halo) + double-buffered variant for big images.
        raise NotImplementedError(
            f"padded VMEM working set {working >> 20} MiB exceeds "
            f"{budget >> 20} MiB; a row-tiled variant is required")

    out = pl.pallas_call(
        functools.partial(_fused_conv_block_kernel,
                          h=h, w=w, lead=lead, trail=trail),
        out_shape=jax.ShapeDtypeStruct((n, hwp, _CP), jnp.float32),
        grid_spec=pltpu.PrefetchScalarGridSpec(
            num_scalar_prefetch=0,
            grid=(n,),                                   # one step per image
            in_specs=[
                pl.BlockSpec((None, hwp, 9 * cin), lambda b: (b, 0, 0)),
                pl.BlockSpec((9 * cin, _CP), lambda b: (0, 0)),
                pl.BlockSpec((1, _CP), lambda b: (0, 0)),
                pl.BlockSpec((1, _CP), lambda b: (0, 0)),
                pl.BlockSpec((9, _CP, _CP), lambda b: (0, 0, 0)),
                pl.BlockSpec((1, _CP), lambda b: (0, 0)),
                pl.BlockSpec((1, _CP), lambda b: (0, 0)),
            ],
            out_specs=pl.BlockSpec((None, hwp, _CP), lambda b: (b, 0, 0)),
            scratch_shapes=[
                pltpu.VMEM((lead + hwp + trail, _CP), jnp.float32),
            ],
        ),
        # Batch axis parallel: both v7x TensorCores get work when n >= 2.
        compiler_params=pltpu.CompilerParams(
            dimension_semantics=("parallel",)),
    )(xcol, w1, s1p, t1p, w2, s2p, t2p)

    # Drop the two width-overhang columns and the padded channels.
    return out.reshape(n, h, wp, _CP)[:, :, :w, :cout]


# ----------------------------------------------------------------------------
# conv_block forward (PyTorch NCHW interface)
# ----------------------------------------------------------------------------
def conv_block_fwd(params, x_nchw):
    x = jnp.transpose(x_nchw, (0, 2, 3, 1)).astype(jnp.float32)    # NHWC
    y = conv_block_pallas(x, params["conv1"], params["conv2"])
    return jnp.transpose(y, (0, 3, 1, 2))                          # NCHW


# ----------------------------------------------------------------------------
# Pure-JAX reference (same bf16 operand rounding, f32 accumulation)
# ----------------------------------------------------------------------------
def _ref_layer(x_nhwc, p, eps=_EPS):
    xb = x_nhwc.astype(jnp.bfloat16).astype(jnp.float32)
    wb = p["w"].astype(jnp.bfloat16).astype(jnp.float32)
    y = jax.lax.conv_general_dilated(
        xb, jnp.transpose(wb, (2, 3, 1, 0)), (1, 1), "SAME",
        dimension_numbers=("NHWC", "HWIO", "NHWC"))
    s = p["gamma"] / jnp.sqrt(p["var"] + eps)
    return jnp.maximum(y * s + ((p["b"] - p["mean"]) * s + p["beta"]), 0.0)


def conv_block_ref(params, x_nchw):
    x = jnp.transpose(x_nchw, (0, 2, 3, 1)).astype(jnp.float32)
    x = _ref_layer(x, params["conv1"])
    x = _ref_layer(x, params["conv2"])
    return jnp.transpose(x, (0, 3, 1, 2))


# ----------------------------------------------------------------------------
# Deterministic parameter init
# ----------------------------------------------------------------------------
def init_params(key, cin, cmid, cout):
    def conv_bn(k, ci, co):
        k1, k2, k3, k4, k5, k6 = jax.random.split(k, 6)
        return {
            "w": jax.random.normal(k1, (co, ci, 3, 3), jnp.float32)
                 / jnp.sqrt(float(ci * 9)),
            "b": 0.01 * jax.random.normal(k2, (co,), jnp.float32),
            "gamma": 1.0 + 0.1 * jax.random.normal(k3, (co,), jnp.float32),
            "beta": 0.1 * jax.random.normal(k4, (co,), jnp.float32),
            "mean": 0.1 * jax.random.normal(k5, (co,), jnp.float32),
            "var": jax.random.uniform(k6, (co,), jnp.float32, 0.5, 1.5),
        }

    ka, kb = jax.random.split(key)
    return {"conv1": conv_bn(ka, cin, cmid), "conv2": conv_bn(kb, cmid, cout)}


# ----------------------------------------------------------------------------
if __name__ == "__main__":
    key = jax.random.PRNGKey(0)
    kp, kx = jax.random.split(key)

    N, CIN, H, W = 2, 4, 16, 16
    CMID = COUT = 32
    params = init_params(kp, CIN, CMID, COUT)
    x = jax.random.normal(kx, (N, CIN, H, W), jnp.float32)

    fwd = jax.jit(conv_block_fwd)
    out = jax.block_until_ready(fwd(params, x))

    assert out.shape == (N, COUT, H, W), out.shape
    assert bool(jnp.all(jnp.isfinite(out)))
    assert bool(jnp.all(out >= 0.0))            # ReLU output is non-negative

    ref = conv_block_ref(params, x)
    err = float(jnp.max(jnp.abs(out - ref)))
    assert err < 2e-2, f"max |kernel - reference| = {err}"

    print("KERNEL_OK")
</pallas_src>

<mosaic_0001>
module attributes {stable_mosaic.version = 11 : i64} {
  func.func @_fused_conv_block_kernel(%arg0: i32, %arg1: memref<1x288x36xbf16, #tpu.memory_space<vmem>>, %arg2: memref<36x128xbf16, #tpu.memory_space<vmem>>, %arg3: memref<1x128xf32, #tpu.memory_space<vmem>>, %arg4: memref<1x128xf32, #tpu.memory_space<vmem>>, %arg5: memref<9x128x128xbf16, #tpu.memory_space<vmem>>, %arg6: memref<1x128xf32, #tpu.memory_space<vmem>>, %arg7: memref<1x128xf32, #tpu.memory_space<vmem>>, %arg8: memref<1x288x128xf32, #tpu.memory_space<vmem>>, %arg9: memref<352x128xf32, #tpu.memory_space<vmem>>) attributes {dimension_semantics = [#tpu.dimension_semantics<parallel>], iteration_bounds = array<i64: 2>, scalar_prefetch = 0 : i64, scratch_operands = 1 : i64, tpu.core_type = #tpu.core_type<tc>, window_params = [{transform_indices = @transform_0, window_bounds = array<i64: 1, 288, 36>}, {pipeline_mode = #tpu.pipeline_mode<synchronous>, transform_indices = @transform_1, window_bounds = array<i64: 36, 128>}, {pipeline_mode = #tpu.pipeline_mode<synchronous>, transform_indices = @transform_2, window_bounds = array<i64: 1, 128>}, {pipeline_mode = #tpu.pipeline_mode<synchronous>, transform_indices = @transform_3, window_bounds = array<i64: 1, 128>}, {pipeline_mode = #tpu.pipeline_mode<synchronous>, transform_indices = @transform_4, window_bounds = array<i64: 9, 128, 128>}, {pipeline_mode = #tpu.pipeline_mode<synchronous>, transform_indices = @transform_5, window_bounds = array<i64: 1, 128>}, {pipeline_mode = #tpu.pipeline_mode<synchronous>, transform_indices = @transform_6, window_bounds = array<i64: 1, 128>}, {transform_indices = @transform_7, window_bounds = array<i64: 1, 288, 128>}]} {
    %c0 = arith.constant 0 : index
    %c0_0 = arith.constant 0 : index
    %c0_1 = arith.constant 0 : index
    %0 = vector.load %arg1[%c0, %c0_0, %c0_1] : memref<1x288x36xbf16, #tpu.memory_space<vmem>>, vector<1x288x36xbf16>
    %1 = vector.shape_cast %0 : vector<1x288x36xbf16> to vector<288x36xbf16>
    %c0_2 = arith.constant 0 : index
    %c0_3 = arith.constant 0 : index
    %2 = vector.load %arg2[%c0_2, %c0_3] : memref<36x128xbf16, #tpu.memory_space<vmem>>, vector<36x128xbf16>
    %cst = arith.constant dense<0.000000e+00> : vector<288x128xf32>
    %3 = tpu.matmul %1, %2, %cst {dimension_numbers = #tpu.dot_dimension_numbers<[1], [0], [0], [1], [0, 0, 1, 1], [], []>} : vector<288x36xbf16>, vector<36x128xbf16>, vector<288x128xf32> -> vector<288x128xf32>
    %c0_4 = arith.constant 0 : index
    %c0_5 = arith.constant 0 : index
    %4 = vector.load %arg3[%c0_4, %c0_5] : memref<1x128xf32, #tpu.memory_space<vmem>>, vector<1x128xf32>
    %5 = vector.broadcast %4 : vector<1x128xf32> to vector<288x128xf32>
    %6 = arith.mulf %3, %5 : vector<288x128xf32>
    %c0_6 = arith.constant 0 : index
    %c0_7 = arith.constant 0 : index
    %7 = vector.load %arg4[%c0_6, %c0_7] : memref<1x128xf32, #tpu.memory_space<vmem>>, vector<1x128xf32>
    %8 = vector.broadcast %7 : vector<1x128xf32> to vector<288x128xf32>
    %9 = arith.addf %6, %8 : vector<288x128xf32>
    %cst_8 = arith.constant 0.000000e+00 : f32
    %10 = vector.broadcast %cst_8 : f32 to vector<288x128xf32>
    %11 = arith.maximumf %9, %10 : vector<288x128xf32>
    %12 = tpu.iota {dimensions = array<i32: 0>} : vector<288x1xi32>
    %c18_i32 = arith.constant 18 : i32
    %c0_i32 = arith.constant 0 : i32
    %13 = arith.cmpi eq, %c18_i32, %c0_i32 : i32
    %c1_i32 = arith.constant 1 : i32
    %14 = arith.select %13, %c1_i32, %c18_i32 : i32
    %15 = vector.broadcast %14 : i32 to vector<288x1xi32>
    %16 = arith.remsi %12, %15 : vector<288x1xi32>
    %c0_i32_9 = arith.constant 0 : i32
    %17 = vector.broadcast %c0_i32_9 : i32 to vector<288x1xi32>
    %18 = arith.cmpi ne, %16, %17 : vector<288x1xi32>
    %c0_i32_10 = arith.constant 0 : i32
    %19 = vector.broadcast %c0_i32_10 : i32 to vector<288x1xi32>
    %20 = arith.cmpi slt, %16, %19 : vector<288x1xi32>
    %c0_i32_11 = arith.constant 0 : i32
    %21 = arith.cmpi slt, %14, %c0_i32_11 : i32
    %22 = vector.broadcast %21 : i1 to vector<288x1xi1>
    %23 = vector.broadcast %22 : vector<288x1xi1> to vector<288x1xi1>
    %24 = arith.xori %20, %23 : vector<288x1xi1>
    %25 = arith.andi %24, %18 : vector<288x1xi1>
    %26 = vector.broadcast %14 : i32 to vector<288x1xi32>
    %27 = arith.addi %16, %26 : vector<288x1xi32>
    %28 = arith.select %25, %27, %16 : vector<288x1xi1>, vector<288x1xi32>
    %c16_i32 = arith.constant 16 : i32
    %29 = vector.broadcast %c16_i32 : i32 to vector<288x1xi32>
    %30 = arith.cmpi slt, %28, %29 : vector<288x1xi32>
    %cst_12 = arith.constant 0.000000e+00 : f32
    %31 = vector.shape_cast %30 : vector<288x1xi1> to vector<288x1xi1>
    %32 = vector.broadcast %31 : vector<288x1xi1> to vector<288x128xi1>
    %33 = vector.broadcast %cst_12 : f32 to vector<288x128xf32>
    %34 = arith.select %32, %11, %33 : vector<288x128xi1>, vector<288x128xf32>
    %35 = arith.truncf %34 : vector<288x128xf32> to vector<288x128xbf16>
    %36 = arith.extf %35 : vector<288x128xbf16> to vector<288x128xf32>
    %cst_13 = arith.constant 0.000000e+00 : f32
    %37 = vector.broadcast %cst_13 : f32 to vector<32x128xf32>
    %c0_14 = arith.constant 0 : index
    %c0_15 = arith.constant 0 : index
    %38 = vector.load %arg9[%c0_14, %c0_15] : memref<352x128xf32, #tpu.memory_space<vmem>>, vector<32x128xf32>
    tpu.vector_store %arg9[%c0_14, %c0_15], %37 {strides = array<i32>} : memref<352x128xf32, #tpu.memory_space<vmem>>, vector<32x128xf32>,
    %cst_16 = arith.constant 0.000000e+00 : f32
    %39 = vector.broadcast %cst_16 : f32 to vector<32x128xf32>
    %c320 = arith.constant 320 : index
    %c0_17 = arith.constant 0 : index
    %40 = vector.load %arg9[%c320, %c0_17] : memref<352x128xf32, #tpu.memory_space<vmem>>, vector<32x128xf32>
    tpu.vector_store %arg9[%c320, %c0_17], %39 {strides = array<i32>} : memref<352x128xf32, #tpu.memory_space<vmem>>, vector<32x128xf32>,
    %c32 = arith.constant 32 : index
    %c0_18 = arith.constant 0 : index
    %41 = vector.load %arg9[%c32, %c0_18] : memref<352x128xf32, #tpu.memory_space<vmem>>, vector<288x128xf32>
    tpu.vector_store %arg9[%c32, %c0_18], %36 {strides = array<i32>} : memref<352x128xf32, #tpu.memory_space<vmem>>, vector<288x128xf32>,
    %cst_19 = arith.constant 0.000000e+00 : f32
    %42 = vector.broadcast %cst_19 : f32 to vector<288x128xf32>
    %c13 = arith.constant 13 : index
    %c0_20 = arith.constant 0 : index
    %43 = vector.load %arg9[%c13, %c0_20] : memref<352x128xf32, #tpu.memory_space<vmem>>, vector<288x128xf32>
    %44 = arith.truncf %43 : vector<288x128xf32> to vector<288x128xbf16>
    %c0_21 = arith.constant 0 : index
    %c0_22 = arith.constant 0 : index
    %c0_23 = arith.constant 0 : index
    %45 = vector.load %arg5[%c0_21, %c0_22, %c0_23] : memref<9x128x128xbf16, #tpu.memory_space<vmem>>, vector<1x128x128xbf16>
    %46 = vector.shape_cast %45 : vector<1x128x128xbf16> to vector<128x128xbf16>
    %cst_24 = arith.constant dense<0.000000e+00> : vector<288x128xf32>
    %47 = tpu.matmul %44, %46, %cst_24 {dimension_numbers = #tpu.dot_dimension_numbers<[1], [0], [0], [1], [0, 0, 1, 1], [], []>} : vector<288x128xbf16>, vector<128x128xbf16>, vector<288x128xf32> -> vector<288x128xf32>
    %48 = arith.addf %42, %47 : vector<288x128xf32>
    %c14 = arith.constant 14 : index
    %c0_25 = arith.constant 0 : index
    %49 = vector.load %arg9[%c14, %c0_25] : memref<352x128xf32, #tpu.memory_space<vmem>>, vector<288x128xf32>
    %50 = arith.truncf %49 : vector<288x128xf32> to vector<288x128xbf16>
    %c1 = arith.constant 1 : index
    %c0_26 = arith.constant 0 : index
    %c0_27 = arith.constant 0 : index
    %51 = vector.load %arg5[%c1, %c0_26, %c0_27] : memref<9x128x128xbf16, #tpu.memory_space<vmem>>, vector<1x128x128xbf16>
    %52 = vector.shape_cast %51 : vector<1x128x128xbf16> to vector<128x128xbf16>
    %cst_28 = arith.constant dense<0.000000e+00> : vector<288x128xf32>
    %53 = tpu.matmul %50, %52, %cst_28 {dimension_numbers = #tpu.dot_dimension_numbers<[1], [0], [0], [1], [0, 0, 1, 1], [], []>} : vector<288x128xbf16>, vector<128x128xbf16>, vector<288x128xf32> -> vector<288x128xf32>
    %54 = arith.addf %48, %53 : vector<288x128xf32>
    %c15 = arith.constant 15 : index
    %c0_29 = arith.constant 0 : index
    %55 = vector.load %arg9[%c15, %c0_29] : memref<352x128xf32, #tpu.memory_space<vmem>>, vector<288x128xf32>
    %56 = arith.truncf %55 : vector<288x128xf32> to vector<288x128xbf16>
    %c2 = arith.constant 2 : index
    %c0_30 = arith.constant 0 : index
    %c0_31 = arith.constant 0 : index
    %57 = vector.load %arg5[%c2, %c0_30, %c0_31] : memref<9x128x128xbf16, #tpu.memory_space<vmem>>, vector<1x128x128xbf16>
    %58 = vector.shape_cast %57 : vector<1x128x128xbf16> to vector<128x128xbf16>
    %cst_32 = arith.constant dense<0.000000e+00> : vector<288x128xf32>
    %59 = tpu.matmul %56, %58, %cst_32 {dimension_numbers = #tpu.dot_dimension_numbers<[1], [0], [0], [1], [0, 0, 1, 1], [], []>} : vector<288x128xbf16>, vector<128x128xbf16>, vector<288x128xf32> -> vector<288x128xf32>
    %60 = arith.addf %54, %59 : vector<288x128xf32>
    %c31 = arith.constant 31 : index
    %c0_33 = arith.constant 0 : index
    %61 = vector.load %arg9[%c31, %c0_33] : memref<352x128xf32, #tpu.memory_space<vmem>>, vector<288x128xf32>
    %62 = arith.truncf %61 : vector<288x128xf32> to vector<288x128xbf16>
    %c3 = arith.constant 3 : index
    %c0_34 = arith.constant 0 : index
    %c0_35 = arith.constant 0 : index
    %63 = vector.load %arg5[%c3, %c0_34, %c0_35] : memref<9x128x128xbf16, #tpu.memory_space<vmem>>, vector<1x128x128xbf16>
    %64 = vector.shape_cast %63 : vector<1x128x128xbf16> to vector<128x128xbf16>
    %cst_36 = arith.constant dense<0.000000e+00> : vector<288x128xf32>
    %65 = tpu.matmul %62, %64, %cst_36 {dimension_numbers = #tpu.dot_dimension_numbers<[1], [0], [0], [1], [0, 0, 1, 1], [], []>} : vector<288x128xbf16>, vector<128x128xbf16>, vector<288x128xf32> -> vector<288x128xf32>
    %66 = arith.addf %60, %65 : vector<288x128xf32>
    %c32_37 = arith.constant 32 : index
    %c0_38 = arith.constant 0 : index
    %67 = vector.load %arg9[%c32_37, %c0_38] : memref<352x128xf32, #tpu.memory_space<vmem>>, vector<288x128xf32>
    %68 = arith.truncf %67 : vector<288x128xf32> to vector<288x128xbf16>
    %c4 = arith.constant 4 : index
    %c0_39 = arith.constant 0 : index
    %c0_40 = arith.constant 0 : index
    %69 = vector.load %arg5[%c4, %c0_39, %c0_40] : memref<9x128x128xbf16, #tpu.memory_space<vmem>>, vector<1x128x128xbf16>
    %70 = vector.shape_cast %69 : vector<1x128x128xbf16> to vector<128x128xbf16>
    %cst_41 = arith.constant dense<0.000000e+00> : vector<288x128xf32>
    %71 = tpu.matmul %68, %70, %cst_41 {dimension_numbers = #tpu.dot_dimension_numbers<[1], [0], [0], [1], [0, 0, 1, 1], [], []>} : vector<288x128xbf16>, vector<128x128xbf16>, vector<288x128xf32> -> vector<288x128xf32>
    %72 = arith.addf %66, %71 : vector<288x128xf32>
    %c33 = arith.constant 33 : index
    %c0_42 = arith.constant 0 : index
    %73 = vector.load %arg9[%c33, %c0_42] : memref<352x128xf32, #tpu.memory_space<vmem>>, vector<288x128xf32>
    %74 = arith.truncf %73 : vector<288x128xf32> to vector<288x128xbf16>
    %c5 = arith.constant 5 : index
    %c0_43 = arith.constant 0 : index
    %c0_44 = arith.constant 0 : index
    %75 = vector.load %arg5[%c5, %c0_43, %c0_44] : memref<9x128x128xbf16, #tpu.memory_space<vmem>>, vector<1x128x128xbf16>
    %76 = vector.shape_cast %75 : vector<1x128x128xbf16> to vector<128x128xbf16>
    %cst_45 = arith.constant dense<0.000000e+00> : vector<288x128xf32>
    %77 = tpu.matmul %74, %76, %cst_45 {dimension_numbers = #tpu.dot_dimension_numbers<[1], [0], [0], [1], [0, 0, 1, 1], [], []>} : vector<288x128xbf16>, vector<128x128xbf16>, vector<288x128xf32> -> vector<288x128xf32>
    %78 = arith.addf %72, %77 : vector<288x128xf32>
    %c49 = arith.constant 49 : index
    %c0_46 = arith.constant 0 : index
    %79 = vector.load %arg9[%c49, %c0_46] : memref<352x128xf32, #tpu.memory_space<vmem>>, vector<288x128xf32>
    %80 = arith.truncf %79 : vector<288x128xf32> to vector<288x128xbf16>
    %c6 = arith.constant 6 : index
    %c0_47 = arith.constant 0 : index
    %c0_48 = arith.constant 0 : index
    %81 = vector.load %arg5[%c6, %c0_47, %c0_48] : memref<9x128x128xbf16, #tpu.memory_space<vmem>>, vector<1x128x128xbf16>
    %82 = vector.shape_cast %81 : vector<1x128x128xbf16> to vector<128x128xbf16>
    %cst_49 = arith.constant dense<0.000000e+00> : vector<288x128xf32>
    %83 = tpu.matmul %80, %82, %cst_49 {dimension_numbers = #tpu.dot_dimension_numbers<[1], [0], [0], [1], [0, 0, 1, 1], [], []>} : vector<288x128xbf16>, vector<128x128xbf16>, vector<288x128xf32> -> vector<288x128xf32>
    %84 = arith.addf %78, %83 : vector<288x128xf32>
    %c50 = arith.constant 50 : index
    %c0_50 = arith.constant 0 : index
    %85 = vector.load %arg9[%c50, %c0_50] : memref<352x128xf32, #tpu.memory_space<vmem>>, vector<288x128xf32>
    %86 = arith.truncf %85 : vector<288x128xf32> to vector<288x128xbf16>
    %c7 = arith.constant 7 : index
    %c0_51 = arith.constant 0 : index
    %c0_52 = arith.constant 0 : index
    %87 = vector.load %arg5[%c7, %c0_51, %c0_52] : memref<9x128x128xbf16, #tpu.memory_space<vmem>>, vector<1x128x128xbf16>
    %88 = vector.shape_cast %87 : vector<1x128x128xbf16> to vector<128x128xbf16>
    %cst_53 = arith.constant dense<0.000000e+00> : vector<288x128xf32>
    %89 = tpu.matmul %86, %88, %cst_53 {dimension_numbers = #tpu.dot_dimension_numbers<[1], [0], [0], [1], [0, 0, 1, 1], [], []>} : vector<288x128xbf16>, vector<128x128xbf16>, vector<288x128xf32> -> vector<288x128xf32>
    %90 = arith.addf %84, %89 : vector<288x128xf32>
    %c51 = arith.constant 51 : index
    %c0_54 = arith.constant 0 : index
    %91 = vector.load %arg9[%c51, %c0_54] : memref<352x128xf32, #tpu.memory_space<vmem>>, vector<288x128xf32>
    %92 = arith.truncf %91 : vector<288x128xf32> to vector<288x128xbf16>
    %c8 = arith.constant 8 : index
    %c0_55 = arith.constant 0 : index
    %c0_56 = arith.constant 0 : index
    %93 = vector.load %arg5[%c8, %c0_55, %c0_56] : memref<9x128x128xbf16, #tpu.memory_space<vmem>>, vector<1x128x128xbf16>
    %94 = vector.shape_cast %93 : vector<1x128x128xbf16> to vector<128x128xbf16>
    %cst_57 = arith.constant dense<0.000000e+00> : vector<288x128xf32>
    %95 = tpu.matmul %92, %94, %cst_57 {dimension_numbers = #tpu.dot_dimension_numbers<[1], [0], [0], [1], [0, 0, 1, 1], [], []>} : vector<288x128xbf16>, vector<128x128xbf16>, vector<288x128xf32> -> vector<288x128xf32>
    %96 = arith.addf %90, %95 : vector<288x128xf32>
    %c0_58 = arith.constant 0 : index
    %c0_59 = arith.constant 0 : index
    %97 = vector.load %arg6[%c0_58, %c0_59] : memref<1x128xf32, #tpu.memory_space<vmem>>, vector<1x128xf32>
    %98 = vector.broadcast %97 : vector<1x128xf32> to vector<288x128xf32>
    %99 = arith.mulf %96, %98 : vector<288x128xf32>
    %c0_60 = arith.constant 0 : index
    %c0_61 = arith.constant 0 : index
    %100 = vector.load %arg7[%c0_60, %c0_61] : memref<1x128xf32, #tpu.memory_space<vmem>>, vector<1x128xf32>
    %101 = vector.broadcast %100 : vector<1x128xf32> to vector<288x128xf32>
    %102 = arith.addf %99, %101 : vector<288x128xf32>
    %cst_62 = arith.constant 0.000000e+00 : f32
    %103 = vector.broadcast %cst_62 : f32 to vector<288x128xf32>
    %104 = arith.maximumf %102, %103 : vector<288x128xf32>
    %c0_63 = arith.constant 0 : index
    %c0_64 = arith.constant 0 : index
    %c0_65 = arith.constant 0 : index
    %105 = vector.load %arg8[%c0_63, %c0_64, %c0_65] : memref<1x288x128xf32, #tpu.memory_space<vmem>>, vector<1x288x128xf32>
    %106 = vector.shape_cast %105 : vector<1x288x128xf32> to vector<288x128xf32>
    %107 = vector.shape_cast %104 : vector<288x128xf32> to vector<1x288x128xf32>
    tpu.vector_store %arg8[%c0_63, %c0_64, %c0_65], %107 {strides = array<i32>} : memref<1x288x128xf32, #tpu.memory_space<vmem>>, vector<1x288x128xf32>,
    return
  }
  func.func @transform_0(%arg0: i32) -> (i32, i32, i32) {
    %c0_i32 = arith.constant 0 : i32
    %c0_i32_0 = arith.constant 0 : i32
    %c0_i32_1 = arith.constant 0 : i32
    return %arg0, %c0_i32, %c0_i32_0 : i32, i32, i32
  }
  func.func @transform_1(%arg0: i32) -> (i32, i32) {
    %c0_i32 = arith.constant 0 : i32
    %c0_i32_0 = arith.constant 0 : i32
    %c0_i32_1 = arith.constant 0 : i32
    return %c0_i32, %c0_i32_0 : i32, i32
  }
  func.func @transform_2(%arg0: i32) -> (i32, i32) {
    %c0_i32 = arith.constant 0 : i32
    %c0_i32_0 = arith.constant 0 : i32
    %c0_i32_1 = arith.constant 0 : i32
    return %c0_i32, %c0_i32_0 : i32, i32
  }
  func.func @transform_3(%arg0: i32) -> (i32, i32) {
    %c0_i32 = arith.constant 0 : i32
    %c0_i32_0 = arith.constant 0 : i32
    %c0_i32_1 = arith.constant 0 : i32
    return %c0_i32, %c0_i32_0 : i32, i32
  }
  func.func @transform_4(%arg0: i32) -> (i32, i32, i32) {
    %c0_i32 = arith.constant 0 : i32
    %c0_i32_0 = arith.constant 0 : i32
    %c0_i32_1 = arith.constant 0 : i32
    %c0_i32_2 = arith.constant 0 : i32
    return %c0_i32, %c0_i32_0, %c0_i32_1 : i32, i32, i32
  }
  func.func @transform_5(%arg0: i32) -> (i32, i32) {
    %c0_i32 = arith.constant 0 : i32
    %c0_i32_0 = arith.constant 0 : i32
    %c0_i32_1 = arith.constant 0 : i32
    return %c0_i32, %c0_i32_0 : i32, i32
  }
  func.func @transform_6(%arg0: i32) -> (i32, i32) {
    %c0_i32 = arith.constant 0 : i32
    %c0_i32_0 = arith.constant 0 : i32
    %c0_i32_1 = arith.constant 0 : i32
    return %c0_i32, %c0_i32_0 : i32, i32
  }
  func.func @transform_7(%arg0: i32) -> (i32, i32, i32) {
    %c0_i32 = arith.constant 0 : i32
    %c0_i32_0 = arith.constant 0 : i32
    %c0_i32_1 = arith.constant 0 : i32
    return %arg0, %c0_i32, %c0_i32_0 : i32, i32, i32
  }
}

</mosaic_0001>

<llo_original>
// kernel: conv_block_fwd.1
$region0: #{conv_block_fwd.1}
  #allocation0 [shape = 'u32[]', space=smem, size = 0x4, offset = 0x4, fixed_abs, tag = 'smem constant byte address 0x4 - core index']
  #allocation1 [shape = 'u32[144,128]{1,0:T(1,128)}', space=vmem, size = 0x12000, scoped, tag = 'internal scratch']
  #allocation2 [shape = 'f32[352,128]{1,0:T(8,128)}', space=vmem, size = 0x2c000, scoped, tag = 'scratch operand']
  %s0 = inlined_call_operand.vmem [shape: bf16[2,288,36], index: 0, kind: input, shape index: {}]
  %s1 = inlined_call_operand.vmem [shape: bf16[36,128], index: 1, kind: input, shape index: {}]
  %s2 = inlined_call_operand.vmem [shape: f32[1,128], index: 2, kind: input, shape index: {}]
  %s3 = inlined_call_operand.vmem [shape: f32[1,128], index: 3, kind: input, shape index: {}]
  %s4 = inlined_call_operand.vmem [shape: bf16[9,128,128], index: 4, kind: input, shape index: {}]
  %s5 = inlined_call_operand.vmem [shape: f32[1,128], index: 5, kind: input, shape index: {}]
  %s6 = inlined_call_operand.vmem [shape: f32[1,128], index: 6, kind: input, shape index: {}]
  %s7 = inlined_call_operand.vmem [shape: f32[2,288,128], index: 7, kind: output, shape index: {}]
  %s8 = sld [smem:[#allocation0]]
  $region61: #{conv_block_fwd.1} parent=0
    _
  %s10 = ssub.s32 1, %s8
  %s11 = scalar_select 0, %s10, %s8
  loop: start=0, step=1, limit=4
  $region2: #{conv_block_fwd.1} parent=0 // loop_pre_header
    _
  $region3: #{conv_block_fwd.1} parent=0 // loop_header
    %s13 = sphi 0, %s17
    %p14 = scmp.ge.s32.totalorder %s13, 4
    %s23 = sphi 0, %s25
    %s26 = sphi 0, %s23
    %s27 = sphi 0, %s26
    %s43 = sphi 0, %s27
    %s47 = sphi 0, %s47
    %s49 = sphi 0, %s47
    %s50 = sphi 0, %s49
    %s64 = sphi 0, %s50
    %s68 = sphi 0, %s68
    %s70 = sphi 0, %s68
    %s71 = sphi 0, %s70
    %s85 = sphi 0, %s71
    %s89 = sphi 0, %s89
    %s91 = sphi 0, %s89
    %s92 = sphi 0, %s91
    %s106 = sphi 0, %s92
    %s110 = sphi 0, %s110
    %s112 = sphi 0, %s110
    %s113 = sphi 0, %s112
    %s127 = sphi 0, %s113
    %s131 = sphi 0, %s131
    %s133 = sphi 0, %s131
    %s134 = sphi 0, %s133
    %s148 = sphi 0, %s134
    %s152 = sphi 0, %s152
    %s154 = sphi 0, %s152
    %s155 = sphi 0, %s154
    %s169 = sphi 0, %s155
    %s175 = sphi 0, %s177
    %s178 = sphi 0, %s175
    %s179 = sphi 0, %s178
    %s195 = sphi 0, %s179
  $region4: #{conv_block_fwd.1} parent=0 // loop_header_branch
    %16 = sbr.rel (%p14) target = $region8
  $region5: #{conv_block_fwd.1} parent=0 // loop_body
    %s18 = ssub.s32 %s13, 1
    %s19 = ssub.s32 %s13, 2
    %s20 = sadd.s32 %s13, 1
    %s21 = ssub.s32 %s13, %s20
    %p22 = scmp.eq.s32.totalorder %s21, 0
    %s24 = sadd.s32 %s23, 1
    %s25 = scalar_select %p22, %s23, %s24
    %p28 = pneg %p22
    %p29 = scmp.eq.s32.totalorder %s13, 1
    %p30 = por %p28, %p29
    %p31 = scmp.ne.s32.totalorder %s23, %s26
    %p32 = scmp.eq.s32.totalorder %s13, 0
    %p33 = por %p31, %p32
    %p34 = scmp.ne.s32.totalorder %s23, %s26
    %p35 = scmp.eq.s32.totalorder %s18, 1
    %p36 = por %p34, %p35
    %p37 = scmp.ne.s32.totalorder %s26, %s27
    %p38 = scmp.eq.s32.totalorder %s18, 0
    %p39 = por %p37, %p38
    %p40 = scmp.ne.s32.totalorder %s26, %s27
    %p41 = scmp.eq.s32.totalorder %s19, 1
    %p42 = por %p40, %p41
    %p44 = scmp.ne.s32.totalorder %s27, %s43
    %p45 = scmp.eq.s32.totalorder %s19, 0
    %p46 = por %p44, %p45
    %s48 = sadd.s32 %s47, 1
    %p51 = scmp.eq.s32.totalorder %s13, 1
    %p52 = scmp.ne.s32.totalorder %s47, %s49
    %p53 = scmp.eq.s32.totalorder %s13, 0
    %p54 = por %p52, %p53
    %p55 = scmp.ne.s32.totalorder %s47, %s49
    %p56 = scmp.eq.s32.totalorder %s18, 1
    %p57 = por %p55, %p56
    %p58 = scmp.ne.s32.totalorder %s49, %s50
    %p59 = scmp.eq.s32.totalorder %s18, 0
    %p60 = por %p58, %p59
    %p61 = scmp.ne.s32.totalorder %s49, %s50
    %p62 = scmp.eq.s32.totalorder %s19, 1
    %p63 = por %p61, %p62
    %p65 = scmp.ne.s32.totalorder %s50, %s64
    %p66 = scmp.eq.s32.totalorder %s19, 0
    %p67 = por %p65, %p66
    %s69 = sadd.s32 %s68, 1
    %p72 = scmp.eq.s32.totalorder %s13, 1
    %p73 = scmp.ne.s32.totalorder %s68, %s70
    %p74 = scmp.eq.s32.totalorder %s13, 0
    %p75 = por %p73, %p74
    %p76 = scmp.ne.s32.totalorder %s68, %s70
    %p77 = scmp.eq.s32.totalorder %s18, 1
    %p78 = por %p76, %p77
    %p79 = scmp.ne.s32.totalorder %s70, %s71
    %p80 = scmp.eq.s32.totalorder %s18, 0
    %p81 = por %p79, %p80
    %p82 = scmp.ne.s32.totalorder %s70, %s71
    %p83 = scmp.eq.s32.totalorder %s19, 1
    %p84 = por %p82, %p83
    %p86 = scmp.ne.s32.totalorder %s71, %s85
    %p87 = scmp.eq.s32.totalorder %s19, 0
    %p88 = por %p86, %p87
    %s90 = sadd.s32 %s89, 1
    %p93 = scmp.eq.s32.totalorder %s13, 1
    %p94 = scmp.ne.s32.totalorder %s89, %s91
    %p95 = scmp.eq.s32.totalorder %s13, 0
    %p96 = por %p94, %p95
    %p97 = scmp.ne.s32.totalorder %s89, %s91
    %p98 = scmp.eq.s32.totalorder %s18, 1
    %p99 = por %p97, %p98
    %p100 = scmp.ne.s32.totalorder %s91, %s92
    %p101 = scmp.eq.s32.totalorder %s18, 0
    %p102 = por %p100, %p101
    %p103 = scmp.ne.s32.totalorder %s91, %s92
    %p104 = scmp.eq.s32.totalorder %s19, 1
    %p105 = por %p103, %p104
    %p107 = scmp.ne.s32.totalorder %s92, %s106
    %p108 = scmp.eq.s32.totalorder %s19, 0
    %p109 = por %p107, %p108
    %s111 = sadd.s32 %s110, 1
    %p114 = scmp.eq.s32.totalorder %s13, 1
    %p115 = scmp.ne.s32.totalorder %s110, %s112
    %p116 = scmp.eq.s32.totalorder %s13, 0
    %p117 = por %p115, %p116
    %p118 = scmp.ne.s32.totalorder %s110, %s112
    %p119 = scmp.eq.s32.totalorder %s18, 1
    %p120 = por %p118, %p119
    %p121 = scmp.ne.s32.totalorder %s112, %s113
    %p122 = scmp.eq.s32.totalorder %s18, 0
    %p123 = por %p121, %p122
    %p124 = scmp.ne.s32.totalorder %s112, %s113
    %p125 = scmp.eq.s32.totalorder %s19, 1
    %p126 = por %p124, %p125
    %p128 = scmp.ne.s32.totalorder %s113, %s127
    %p129 = scmp.eq.s32.totalorder %s19, 0
    %p130 = por %p128, %p129
    %s132 = sadd.s32 %s131, 1
    %p135 = scmp.eq.s32.totalorder %s13, 1
    %p136 = scmp.ne.s32.totalorder %s131, %s133
    %p137 = scmp.eq.s32.totalorder %s13, 0
    %p138 = por %p136, %p137
    %p139 = scmp.ne.s32.totalorder %s131, %s133
    %p140 = scmp.eq.s32.totalorder %s18, 1
    %p141 = por %p139, %p140
    %p142 = scmp.ne.s32.totalorder %s133, %s134
    %p143 = scmp.eq.s32.totalorder %s18, 0
    %p144 = por %p142, %p143
    %p145 = scmp.ne.s32.totalorder %s133, %s134
    %p146 = scmp.eq.s32.totalorder %s19, 1
    %p147 = por %p145, %p146
    %p149 = scmp.ne.s32.totalorder %s134, %s148
    %p150 = scmp.eq.s32.totalorder %s19, 0
    %p151 = por %p149, %p150
    %s153 = sadd.s32 %s152, 1
    %p156 = scmp.eq.s32.totalorder %s13, 1
    %p157 = scmp.ne.s32.totalorder %s152, %s154
    %p158 = scmp.eq.s32.totalorder %s13, 0
    %p159 = por %p157, %p158
    %p160 = scmp.ne.s32.totalorder %s152, %s154
    %p161 = scmp.eq.s32.totalorder %s18, 1
    %p162 = por %p160, %p161
    %p163 = scmp.ne.s32.totalorder %s154, %s155
    %p164 = scmp.eq.s32.totalorder %s18, 0
    %p165 = por %p163, %p164
    %p166 = scmp.ne.s32.totalorder %s154, %s155
    %p167 = scmp.eq.s32.totalorder %s19, 1
    %p168 = por %p166, %p167
    %p170 = scmp.ne.s32.totalorder %s155, %s169
    %p171 = scmp.eq.s32.totalorder %s19, 0
    %p172 = por %p170, %p171
    %s173 = ssub.s32 %s13, %s20
    %p174 = scmp.eq.s32.totalorder %s173, 0
    %s176 = sadd.s32 %s175, 1
    %s177 = scalar_select %p174, %s175, %s176
    %p180 = pneg %p174
    %p181 = scmp.eq.s32.totalorder %s13, 1
    %p182 = por %p180, %p181
    %p183 = scmp.ne.s32.totalorder %s175, %s178
    %p184 = scmp.eq.s32.totalorder %s13, 0
    %p185 = por %p183, %p184
    %p186 = scmp.ne.s32.totalorder %s175, %s178
    %p187 = scmp.eq.s32.totalorder %s18, 1
    %p188 = por %p186, %p187
    %p189 = scmp.ne.s32.totalorder %s178, %s179
    %p190 = scmp.eq.s32.totalorder %s18, 0
    %p191 = por %p189, %p190
    %p192 = scmp.ne.s32.totalorder %s178, %s179
    %p193 = scmp.eq.s32.totalorder %s19, 1
    %p194 = por %p192, %p193
    %p196 = scmp.ne.s32.totalorder %s179, %s195
    %p197 = scmp.eq.s32.totalorder %s19, 0
    %p198 = por %p196, %p197
    %p199 = scmp.le.s32.totalorder 1, %s13
    %p200 = scmp.lt.s32.totalorder %s13, 3
    %p201 = pnand %p199, %p200
    %p202 = pneg %p201
    // Predicated region
    $region9: #{conv_block_fwd.1} parent=5 // pred_check
      _
    $region10: #{conv_block_fwd.1} parent=5 // pred_check_branch
      %204 = sbr.rel (%p201) target = $region12
    $region11: #{conv_block_fwd.1} parent=5 // pred_region
      %s205 = ssub.s32 %s13, 1
      // Predicated region
      $region13: #{conv_block_fwd.1} parent=11 // pred_check
        %p206 = pneg %p60
      $region14: #{conv_block_fwd.1} parent=11 // pred_check_branch
        %208 = sbr.rel (%p206) target = $region16
      $region15: #{conv_block_fwd.1} parent=11 // pred_region
        _
      $region16: #{conv_block_fwd.1} parent=11 // pred_fallthru
        _
      // Predicated region
      $region17: #{conv_block_fwd.1} parent=11 // pred_check
        %p209 = pneg %p81
      $region18: #{conv_block_fwd.1} parent=11 // pred_check_branch
        %211 = sbr.rel (%p209) target = $region20
      $region19: #{conv_block_fwd.1} parent=11 // pred_region
        _
      $region20: #{conv_block_fwd.1} parent=11 // pred_fallthru
        _
      // Predicated region
      $region21: #{conv_block_fwd.1} parent=11 // pred_check
        %p212 = pneg %p102
      $region22: #{conv_block_fwd.1} parent=11 // pred_check_branch
        %214 = sbr.rel (%p212) target = $region24
      $region23: #{conv_block_fwd.1} parent=11 // pred_region
        _
      $region24: #{conv_block_fwd.1} parent=11 // pred_fallthru
        _
      // Predicated region
      $region25: #{conv_block_fwd.1} parent=11 // pred_check
        %p215 = pneg %p123
      $region26: #{conv_block_fwd.1} parent=11 // pred_check_branch
        %217 = sbr.rel (%p215) target = $region28
      $region27: #{conv_block_fwd.1} parent=11 // pred_region
        _
      $region28: #{conv_block_fwd.1} parent=11 // pred_fallthru
        _
      // Predicated region
      $region29: #{conv_block_fwd.1} parent=11 // pred_check
        %p218 = pneg %p144
      $region30: #{conv_block_fwd.1} parent=11 // pred_check_branch
        %220 = sbr.rel (%p218) target = $region32
      $region31: #{conv_block_fwd.1} parent=11 // pred_region
        _
      $region32: #{conv_block_fwd.1} parent=11 // pred_fallthru
        _
      // Predicated region
      $region33: #{conv_block_fwd.1} parent=11 // pred_check
        %p221 = pneg %p165
      $region34: #{conv_block_fwd.1} parent=11 // pred_check_branch
        %223 = sbr.rel (%p221) target = $region36
      $region35: #{conv_block_fwd.1} parent=11 // pred_region
        _
      $region36: #{conv_block_fwd.1} parent=11 // pred_fallthru
        _
    $region12: #{conv_block_fwd.1} parent=5 // pred_fallthru
      _
    %p224 = scmp.lt.s32.totalorder %s13, 2
    // Predicated region
    $region37: #{conv_block_fwd.1} parent=5 // pred_check
      %p225 = pneg %p224
    $region38: #{conv_block_fwd.1} parent=5 // pred_check_branch
      %227 = sbr.rel (%p225) target = $region40
    $region39: #{conv_block_fwd.1} parent=5 // pred_region
      // Predicated region
      $region41: #{conv_block_fwd.1} parent=39 // pred_check
        %p228 = pneg %p33
      $region42: #{conv_block_fwd.1} parent=39 // pred_check_branch
        %230 = sbr.rel (%p228) target = $region44
      $region43: #{conv_block_fwd.1} parent=39 // pred_region
        %p231 = scmp.lt.s32.totalorder %s13, 1
        %s232 = scalar_select %p231, %s13, 1
        %s233 = smul.addr %s232, 36
        %s234 = smul.addr %s233, 4
        %s235 = scalar_lea.vmem %s0, %s234
      $region44: #{conv_block_fwd.1} parent=39 // pred_fallthru
        _
    $region40: #{conv_block_fwd.1} parent=5 // pred_fallthru
      _
    %p236 = scmp.le.s32.totalorder 1, %s13
    %p237 = scmp.lt.s32.totalorder %s13, 3
    %p238 = pnand %p236, %p237
    %p239 = pneg %p238
    // Predicated region
    $region45: #{conv_block_fwd.1} parent=5 // pred_check
      _
    $region46: #{conv_block_fwd.1} parent=5 // pred_check_branch
      %241 = sbr.rel (%p238) target = $region48
    $region47: #{conv_block_fwd.1} parent=5 // pred_region
      %s242 = ssub.s32 %s13, 1
      %p243 = scmp.lt.s32.totalorder %s18, 1
      %s244 = scalar_select %p243, %s18, 1
      %s245 = smul.addr %s244, 36
      %s246 = smul.addr %s245, 4
      %s247 = scalar_lea.vmem %s0, %s246
      %p248 = pneg %p39
      %p249 = pneg %p36
      %p250 = pneg %p60
      %p251 = pneg %p57
      %p252 = pneg %p81
      %p253 = pneg %p78
      %p254 = pneg %p102
      %p255 = pneg %p99
      %p256 = pneg %p123
      %p257 = pneg %p120
      %p258 = pneg %p144
      %p259 = pneg %p141
      %p260 = pneg %p165
      %p261 = pneg %p162
      %p262 = pneg %p191
      %p263 = pneg %p188
      %p264 = scmp.lt.s32.totalorder %s18, 1
      %s265 = scalar_select %p264, %s18, 1
      %s266 = smul.addr %s265, 36
      %s267 = smul.addr %s266, 8
      %s268 = scalar_lea.vmem %s7, %s267
      %p269 = scmp.lt.s32.totalorder %s18, 1
      %s270 = scalar_select %p269, %s18, 1
      %s271 = smul.addr %s270, 36
      %s272 = smul.addr %s271, 4
      %s273 = scalar_lea.vmem %s0, %s272
      %p274 = scmp.lt.s32.totalorder %s18, 1
      %s275 = scalar_select %p274, %s18, 1
      %s276 = smul.addr %s275, 36
      %s277 = smul.addr %s276, 8
      %s278 = scalar_lea.vmem %s7, %s277
      %v280 = vld [vmem:[%s273] sm:$0xf]
      %v281 = vld [vmem:[%s273 + $0x4] sm:$0xf]
      %v282 = vld [vmem:[%s273 + $0x8] sm:$0xf]
      %v283 = vld [vmem:[%s273 + $0xc] sm:$0xf]
      %v284 = vld [vmem:[%s273 + $0x10] sm:$0xf]
      %v285 = vld [vmem:[%s273 + $0x14] sm:$0xf]
      %v286 = vld [vmem:[%s273 + $0x18] sm:$0xf]
      %v287 = vld [vmem:[%s273 + $0x1c] sm:$0xf]
      %v288 = vld [vmem:[%s273 + $0x20] sm:$0xf]
      %v289 = vld [vmem:[%s273 + $0x24] sm:$0xf]
      %v290 = vld [vmem:[%s273 + $0x28] sm:$0xf]
      %v291 = vld [vmem:[%s273 + $0x2c] sm:$0xf]
      %v292 = vld [vmem:[%s273 + $0x30] sm:$0xf]
      %v293 = vld [vmem:[%s273 + $0x34] sm:$0xf]
      %v294 = vld [vmem:[%s273 + $0x38] sm:$0xf]
      %v295 = vld [vmem:[%s273 + $0x3c] sm:$0xf]
      %v296 = vld [vmem:[%s273 + $0x40] sm:$0xf]
      %v297 = vld [vmem:[%s273 + $0x44] sm:$0xf]
      %v298 = vld [vmem:[%s273 + $0x48] sm:$0xf]
      %v299 = vld [vmem:[%s273 + $0x4c] sm:$0xf]
      %v300 = vld [vmem:[%s273 + $0x50] sm:$0xf]
      %v301 = vld [vmem:[%s273 + $0x54] sm:$0xf]
      %v302 = vld [vmem:[%s273 + $0x58] sm:$0xf]
      %v303 = vld [vmem:[%s273 + $0x5c] sm:$0xf]
      %v304 = vld [vmem:[%s273 + $0x60] sm:$0xf]
      %v305 = vld [vmem:[%s273 + $0x64] sm:$0xf]
      %v306 = vld [vmem:[%s273 + $0x68] sm:$0xf]
      %v307 = vld [vmem:[%s273 + $0x6c] sm:$0xf]
      %v308 = vld [vmem:[%s273 + $0x70] sm:$0xf]
      %v309 = vld [vmem:[%s273 + $0x74] sm:$0xf]
      %v310 = vld [vmem:[%s273 + $0x78] sm:$0xf]
      %v311 = vld [vmem:[%s273 + $0x7c] sm:$0xf]
      %v312 = vld [vmem:[%s273 + $0x80] sm:$0xf]
      %v313 = vld [vmem:[%s273 + $0x84] sm:$0xf]
      %v314 = vld [vmem:[%s273 + $0x88] sm:$0xf]
      %v315 = vld [vmem:[%s273 + $0x8c] sm:$0xf]
      %v316 = vld [vmem:[%s1] sm:$0xf]
      %v317 = vld [vmem:[%s1 + $0x4] sm:$0xf]
      %v318 = vld [vmem:[%s1 + $0x8] sm:$0xf]
      %v319 = vld [vmem:[%s1 + $0xc] sm:$0xf]
      %v320 = vld [vmem:[%s1 + $0x10] sm:$0x3]
      %v357 = vunpack.c.l.b16 %v280
      %v358 = vunpack.c.l.b16 %v281
      %v359 = vunpack.c.l.b16 %v282
      %v360 = vunpack.c.l.b16 %v283
      %v361 = vunpack.c.l.b16 %v284
      %v362 = vunpack.c.l.b16 %v285
      %v363 = vunpack.c.l.b16 %v286
      %v364 = vunpack.c.l.b16 %v287
      %v365 = vunpack.c.l.b16 %v288
      %v366 = vunpack.c.l.b16 %v289
      %v367 = vunpack.c.l.b16 %v290
      %v368 = vunpack.c.l.b16 %v291
      %v369 = vunpack.c.l.b16 %v292
      %v370 = vunpack.c.l.b16 %v293
      %v371 = vunpack.c.l.b16 %v294
      %v372 = vunpack.c.l.b16 %v295
      %v373 = vunpack.c.l.b16 %v296
      %v374 = vunpack.c.l.b16 %v297
      %v375 = vunpack.c.l.b16 %v298
      %v376 = vunpack.c.l.b16 %v299
      %v377 = vunpack.c.l.b16 %v300
      %v378 = vunpack.c.l.b16 %v301
      %v379 = vunpack.c.l.b16 %v302
      %v380 = vunpack.c.l.b16 %v303
      %v381 = vunpack.c.l.b16 %v304
      %v382 = vunpack.c.l.b16 %v305
      %v383 = vunpack.c.l.b16 %v306
      %v384 = vunpack.c.l.b16 %v307
      %v385 = vunpack.c.l.b16 %v308
      %v386 = vunpack.c.l.b16 %v309
      %v387 = vunpack.c.l.b16 %v310
      %v388 = vunpack.c.l.b16 %v311
      %v389 = vunpack.c.l.b16 %v312
      %v390 = vunpack.c.l.b16 %v313
      %v391 = vunpack.c.l.b16 %v314
      %v392 = vunpack.c.l.b16 %v315
      %v393 = vpack.c.b16 %v358, %v357
      %v394 = vpack.c.b16 %v360, %v359
      %v395 = vpack.c.b16 %v362, %v361
      %v396 = vpack.c.b16 %v364, %v363
      %v397 = vpack.c.b16 %v366, %v365
      %v398 = vpack.c.b16 %v368, %v367
      %v399 = vpack.c.b16 %v370, %v369
      %v400 = vpack.c.b16 %v372, %v371
      %v401 = vpack.c.b16 %v374, %v373
      %v402 = vpack.c.b16 %v376, %v375
      %v403 = vpack.c.b16 %v378, %v377
      %v404 = vpack.c.b16 %v380, %v379
      %v405 = vpack.c.b16 %v382, %v381
      %v406 = vpack.c.b16 %v384, %v383
      %v407 = vpack.c.b16 %v386, %v385
      %v408 = vpack.c.b16 %v388, %v387
      %v409 = vpack.c.b16 %v390, %v389
      %v410 = vpack.c.b16 %v392, %v391
      %v416 = vunpack.c.l.b16 %v316
      %v417 = vunpack.c.l.b16 %v317
      %v418 = vunpack.c.l.b16 %v318
      %v419 = vunpack.c.l.b16 %v319
      %v420 = vunpack.c.l.b16 %v320
      %v421 = vpack.c.b16 %v417, %v416
      %v422 = vpack.c.b16 %v419, %v418
      %v423 = vpack.c.b16 %v420, %v420
      %vm426 = vcmask 293888
      %v428 = vsel %vm426, %v393, 0
      %v431 = vsel %vm426, %v394, 0
      %v434 = vsel %vm426, %v395, 0
      %v437 = vsel %vm426, %v396, 0
      %v440 = vsel %vm426, %v397, 0
      %v443 = vsel %vm426, %v398, 0
      %v446 = vsel %vm426, %v399, 0
      %v449 = vsel %vm426, %v400, 0
      %v452 = vsel %vm426, %v401, 0
      %v455 = vsel %vm426, %v402, 0
      %v458 = vsel %vm426, %v403, 0
      %v461 = vsel %vm426, %v404, 0
      %v464 = vsel %vm426, %v405, 0
      %v467 = vsel %vm426, %v406, 0
      %v470 = vsel %vm426, %v407, 0
      %v473 = vsel %vm426, %v408, 0
      %v476 = vsel %vm426, %v409, 0
      %v479 = vsel %vm426, %v410, 0
      %vm481 = vcmask 1041408
      %v483 = vsel %vm481, %v423, 0
      %485 = vmatprep.subr.bf16.mxu0 0
      %486 = vmatpush1.bf16.msra.mxu0 0
      %487 = vmatprep.subr.bf16.mxu0 0
      %488 = vmatpush1.bf16.msra.mxu0 0
      %489 = vmatprep.subr.bf16.mxu0 0
      %490 = vmatpush1.bf16.msra.mxu0 0
      %491 = vmatprep.subr.bf16.mxu0 0
      %492 = vmatpush1.bf16.msra.mxu0 0
      %493 = vmatprep.subr.bf16.mxu0 0
      %494 = vmatpush1.bf16.msra.mxu0 0
      %495 = vmatprep.subr.bf16.mxu0 0
      %496 = vmatpush1.bf16.msra.mxu0 %v483
      %497 = vmatprep.subr.bf16.mxu0 0
      %498 = vmatpush1.bf16.msra.mxu0 %v422
      %499 = vmatprep.subr.bf16.mxu0 0
      %500 = vmatpush1.bf16.msra.mxu0 %v421
      %501 = vmatprep.subr.bf16.mxu0 0
      %502 = vmatpush2.bf16.msra.mxu0 0
      %503 = vmatprep.subr.bf16.mxu0 0
      %504 = vmatpush2.bf16.msra.mxu0 0
      %505 = vmatprep.subr.bf16.mxu0 0
      %506 = vmatpush2.bf16.msra.mxu0 0
      %507 = vmatprep.subr.bf16.mxu0 0
      %508 = vmatpush2.bf16.msra.mxu0 0
      %509 = vmatprep.subr.bf16.mxu0 0
      %510 = vmatpush2.bf16.msra.mxu0 0
      %511 = vmatprep.subr.bf16.mxu0 0
      %512 = vmatpush2.bf16.msra.mxu0 0
      %513 = vmatprep.subr.bf16.mxu0 0
      %514 = vmatpush2.bf16.msra.mxu0 0
      %515 = vmatprep.subr.bf16.mxu0 0
      %516 = vmatpush2.bf16.msra.mxu0 0
      %517 = vmatprep.mubr.bf16.mxu0 0
      %518 = vmatmul.mubr.bf16.gmra.mxu0 %v428
      %v519 = vpop.f32.mrf.mxu0
      %v520 = vadd.f32 0.0, %v519
      %v521 = vpop.f32.mrf.mxu0
      %v522 = vpop.f32.mrf.mxu0
      %v523 = vadd.f32 0.0, %v522
      %v524 = vpop.f32.mrf.mxu0
      %525 = vmatprep.mubr.bf16.mxu0 0
      %526 = vmatmul.mubr.bf16.gmra.mxu0 %v431
      %v527 = vpop.f32.mrf.mxu0
      %v528 = vadd.f32 0.0, %v527
      %v529 = vpop.f32.mrf.mxu0
      %v530 = vpop.f32.mrf.mxu0
      %v531 = vadd.f32 0.0, %v530
      %v532 = vpop.f32.mrf.mxu0
      %533 = vmatprep.mubr.bf16.mxu0 0
      %534 = vmatmul.mubr.bf16.gmra.mxu0 %v434
      %v535 = vpop.f32.mrf.mxu0
      %v536 = vadd.f32 0.0, %v535
      %v537 = vpop.f32.mrf.mxu0
      %v538 = vpop.f32.mrf.mxu0
      %v539 = vadd.f32 0.0, %v538
      %v540 = vpop.f32.mrf.mxu0
      %541 = vmatprep.mubr.bf16.mxu0 0
      %542 = vmatmul.mubr.bf16.gmra.mxu0 %v437
      %v543 = vpop.f32.mrf.mxu0
      %v544 = vadd.f32 0.0, %v543
      %v545 = vpop.f32.mrf.mxu0
      %v546 = vpop.f32.mrf.mxu0
      %v547 = vadd.f32 0.0, %v546
      %v548 = vpop.f32.mrf.mxu0
      %549 = vmatprep.mubr.bf16.mxu0 0
      %550 = vmatmul.mubr.bf16.gmra.mxu0 %v440
      %v551 = vpop.f32.mrf.mxu0
      %v552 = vadd.f32 0.0, %v551
      %v553 = vpop.f32.mrf.mxu0
      %v554 = vpop.f32.mrf.mxu0
      %v555 = vadd.f32 0.0, %v554
      %v556 = vpop.f32.mrf.mxu0
      %557 = vmatprep.mubr.bf16.mxu0 0
      %558 = vmatmul.mubr.bf16.gmra.mxu0 %v443
      %v559 = vpop.f32.mrf.mxu0
      %v560 = vadd.f32 0.0, %v559
      %v561 = vpop.f32.mrf.mxu0
      %v562 = vpop.f32.mrf.mxu0
      %v563 = vadd.f32 0.0, %v562
      %v564 = vpop.f32.mrf.mxu0
      %565 = vmatprep.mubr.bf16.mxu0 0
      %566 = vmatmul.mubr.bf16.gmra.mxu0 %v446
      %v567 = vpop.f32.mrf.mxu0
      %v568 = vadd.f32 0.0, %v567
      %v569 = vpop.f32.mrf.mxu0
      %v570 = vpop.f32.mrf.mxu0
      %v571 = vadd.f32 0.0, %v570
      %v572 = vpop.f32.mrf.mxu0
      %573 = vmatprep.mubr.bf16.mxu0 0
      %574 = vmatmul.mubr.bf16.gmra.mxu0 %v449
      %v575 = vpop.f32.mrf.mxu0
      %v576 = vadd.f32 0.0, %v575
      %v577 = vpop.f32.mrf.mxu0
      %v578 = vpop.f32.mrf.mxu0
      %v579 = vadd.f32 0.0, %v578
      %v580 = vpop.f32.mrf.mxu0
      %581 = vmatprep.mubr.bf16.mxu0 0
      %582 = vmatmul.mubr.bf16.gmra.mxu0 %v452
      %v583 = vpop.f32.mrf.mxu0
      %v584 = vadd.f32 0.0, %v583
      %v585 = vpop.f32.mrf.mxu0
      %v586 = vpop.f32.mrf.mxu0
      %v587 = vadd.f32 0.0, %v586
      %v588 = vpop.f32.mrf.mxu0
      %589 = vmatprep.mubr.bf16.mxu0 0
      %590 = vmatmul.mubr.bf16.gmra.mxu0 %v455
      %v591 = vpop.f32.mrf.mxu0
      %v592 = vadd.f32 0.0, %v591
      %v593 = vpop.f32.mrf.mxu0
      %v594 = vpop.f32.mrf.mxu0
      %v595 = vadd.f32 0.0, %v594
      %v596 = vpop.f32.mrf.mxu0
      %597 = vmatprep.mubr.bf16.mxu0 0
      %598 = vmatmul.mubr.bf16.gmra.mxu0 %v458
      %v599 = vpop.f32.mrf.mxu0
      %v600 = vadd.f32 0.0, %v599
      %v601 = vpop.f32.mrf.mxu0
      %v602 = vpop.f32.mrf.mxu0
      %v603 = vadd.f32 0.0, %v602
      %v604 = vpop.f32.mrf.mxu0
      %605 = vmatprep.mubr.bf16.mxu0 0
      %606 = vmatmul.mubr.bf16.gmra.mxu0 %v461
      %v607 = vpop.f32.mrf.mxu0
      %v608 = vadd.f32 0.0, %v607
      %v609 = vpop.f32.mrf.mxu0
      %v610 = vpop.f32.mrf.mxu0
      %v611 = vadd.f32 0.0, %v610
      %v612 = vpop.f32.mrf.mxu0
      %613 = vmatprep.mubr.bf16.mxu0 0
      %614 = vmatmul.mubr.bf16.gmra.mxu0 %v464
      %v615 = vpop.f32.mrf.mxu0
      %v616 = vadd.f32 0.0, %v615
      %v617 = vpop.f32.mrf.mxu0
      %v618 = vpop.f32.mrf.mxu0
      %v619 = vadd.f32 0.0, %v618
      %v620 = vpop.f32.mrf.mxu0
      %621 = vmatprep.mubr.bf16.mxu0 0
      %622 = vmatmul.mubr.bf16.gmra.mxu0 %v467
      %v623 = vpop.f32.mrf.mxu0
      %v624 = vadd.f32 0.0, %v623
      %v625 = vpop.f32.mrf.mxu0
      %v626 = vpop.f32.mrf.mxu0
      %v627 = vadd.f32 0.0, %v626
      %v628 = vpop.f32.mrf.mxu0
      %629 = vmatprep.mubr.bf16.mxu0 0
      %630 = vmatmul.mubr.bf16.gmra.mxu0 %v470
      %v631 = vpop.f32.mrf.mxu0
      %v632 = vadd.f32 0.0, %v631
      %v633 = vpop.f32.mrf.mxu0
      %v634 = vpop.f32.mrf.mxu0
      %v635 = vadd.f32 0.0, %v634
      %v636 = vpop.f32.mrf.mxu0
      %637 = vmatprep.mubr.bf16.mxu0 0
      %638 = vmatmul.mubr.bf16.gmra.mxu0 %v473
      %v639 = vpop.f32.mrf.mxu0
      %v640 = vadd.f32 0.0, %v639
      %v641 = vpop.f32.mrf.mxu0
      %v642 = vpop.f32.mrf.mxu0
      %v643 = vadd.f32 0.0, %v642
      %v644 = vpop.f32.mrf.mxu0
      %645 = vmatprep.mubr.bf16.mxu0 0
      %646 = vmatmul.mubr.bf16.gmra.mxu0 %v476
      %v647 = vpop.f32.mrf.mxu0
      %v648 = vadd.f32 0.0, %v647
      %v649 = vpop.f32.mrf.mxu0
      %v650 = vpop.f32.mrf.mxu0
      %v651 = vadd.f32 0.0, %v650
      %v652 = vpop.f32.mrf.mxu0
      %653 = vmatprep.mubr.bf16.mxu0 0
      %654 = vmatmul.mubr.bf16.gmra.mxu0 %v479
      %v655 = vpop.f32.mrf.mxu0
      %v656 = vadd.f32 0.0, %v655
      %v657 = vpop.f32.mrf.mxu0
      %v658 = vpop.f32.mrf.mxu0
      %v659 = vadd.f32 0.0, %v658
      %v660 = vpop.f32.mrf.mxu0
      %661 = vdwg.mxu0
      %v662 = vld [vmem:[%s2] sm:$0x1]
      %v664 = vlaneseq
      %v665 = vshrl.u32 %v664, 7
      %v666 = vsub.s32 0, %v665
      %v667 = vrot.slane %v662, %v666
      %v669 = vmul.f32 %v520, %v667
      %v670 = vmul.f32 %v523, %v667
      %v671 = vmul.f32 %v528, %v667
      %v672 = vmul.f32 %v531, %v667
      %v673 = vmul.f32 %v536, %v667
      %v674 = vmul.f32 %v539, %v667
      %v675 = vmul.f32 %v544, %v667
      %v676 = vmul.f32 %v547, %v667
      %v677 = vmul.f32 %v552, %v667
      %v678 = vmul.f32 %v555, %v667
      %v679 = vmul.f32 %v560, %v667
      %v680 = vmul.f32 %v563, %v667
      %v681 = vmul.f32 %v568, %v667
      %v682 = vmul.f32 %v571, %v667
      %v683 = vmul.f32 %v576, %v667
      %v684 = vmul.f32 %v579, %v667
      %v685 = vmul.f32 %v584, %v667
      %v686 = vmul.f32 %v587, %v667
      %v687 = vmul.f32 %v592, %v667
      %v688 = vmul.f32 %v595, %v667
      %v689 = vmul.f32 %v600, %v667
      %v690 = vmul.f32 %v603, %v667
      %v691 = vmul.f32 %v608, %v667
      %v692 = vmul.f32 %v611, %v667
      %v693 = vmul.f32 %v616, %v667
      %v694 = vmul.f32 %v619, %v667
      %v695 = vmul.f32 %v624, %v667
      %v696 = vmul.f32 %v627, %v667
      %v697 = vmul.f32 %v632, %v667
      %v698 = vmul.f32 %v635, %v667
      %v699 = vmul.f32 %v640, %v667
      %v700 = vmul.f32 %v643, %v667
      %v701 = vmul.f32 %v648, %v667
      %v702 = vmul.f32 %v651, %v667
      %v703 = vmul.f32 %v656, %v667
      %v704 = vmul.f32 %v659, %v667
      %v705 = vld [vmem:[%s3] sm:$0x1]
      %v707 = vlaneseq
      %v708 = vshrl.u32 %v707, 7
      %v709 = vsub.s32 0, %v708
      %v710 = vrot.slane %v705, %v709
      %v712 = vadd.f32 %v669, %v710
      %v713 = vadd.f32 %v670, %v710
      %v714 = vadd.f32 %v671, %v710
      %v715 = vadd.f32 %v672, %v710
      %v716 = vadd.f32 %v673, %v710
      %v717 = vadd.f32 %v674, %v710
      %v718 = vadd.f32 %v675, %v710
      %v719 = vadd.f32 %v676, %v710
      %v720 = vadd.f32 %v677, %v710
      %v721 = vadd.f32 %v678, %v710
      %v722 = vadd.f32 %v679, %v710
      %v723 = vadd.f32 %v680, %v710
      %v724 = vadd.f32 %v681, %v710
      %v725 = vadd.f32 %v682, %v710
      %v726 = vadd.f32 %v683, %v710
      %v727 = vadd.f32 %v684, %v710
      %v728 = vadd.f32 %v685, %v710
      %v729 = vadd.f32 %v686, %v710
      %v730 = vadd.f32 %v687, %v710
      %v731 = vadd.f32 %v688, %v710
      %v732 = vadd.f32 %v689, %v710
      %v733 = vadd.f32 %v690, %v710
      %v734 = vadd.f32 %v691, %v710
      %v735 = vadd.f32 %v692, %v710
      %v736 = vadd.f32 %v693, %v710
      %v737 = vadd.f32 %v694, %v710
      %v738 = vadd.f32 %v695, %v710
      %v739 = vadd.f32 %v696, %v710
      %v740 = vadd.f32 %v697, %v710
      %v741 = vadd.f32 %v698, %v710
      %v742 = vadd.f32 %v699, %v710
      %v743 = vadd.f32 %v700, %v710
      %v744 = vadd.f32 %v701, %v710
      %v745 = vadd.f32 %v702, %v710
      %v746 = vadd.f32 %v703, %v710
      %v747 = vadd.f32 %v704, %v710
      %v748 = vmax.f32 %v712, 0.0
      %v749 = vmax.f32 %v713, 0.0
      %v750 = vmax.f32 %v714, 0.0
      %v751 = vmax.f32 %v715, 0.0
      %v752 = vmax.f32 %v716, 0.0
      %v753 = vmax.f32 %v717, 0.0
      %v754 = vmax.f32 %v718, 0.0
      %v755 = vmax.f32 %v719, 0.0
      %v756 = vmax.f32 %v720, 0.0
      %v757 = vmax.f32 %v721, 0.0
      %v758 = vmax.f32 %v722, 0.0
      %v759 = vmax.f32 %v723, 0.0
      %v760 = vmax.f32 %v724, 0.0
      %v761 = vmax.f32 %v725, 0.0
      %v762 = vmax.f32 %v726, 0.0
      %v763 = vmax.f32 %v727, 0.0
      %v764 = vmax.f32 %v728, 0.0
      %v765 = vmax.f32 %v729, 0.0
      %v766 = vmax.f32 %v730, 0.0
      %v767 = vmax.f32 %v731, 0.0
      %v768 = vmax.f32 %v732, 0.0
      %v769 = vmax.f32 %v733, 0.0
      %v770 = vmax.f32 %v734, 0.0
      %v771 = vmax.f32 %v735, 0.0
      %v772 = vmax.f32 %v736, 0.0
      %v773 = vmax.f32 %v737, 0.0
      %v774 = vmax.f32 %v738, 0.0
      %v775 = vmax.f32 %v739, 0.0
      %v776 = vmax.f32 %v740, 0.0
      %v777 = vmax.f32 %v741, 0.0
      %v778 = vmax.f32 %v742, 0.0
      %v779 = vmax.f32 %v743, 0.0
      %v780 = vmax.f32 %v744, 0.0
      %v781 = vmax.f32 %v745, 0.0
      %v782 = vmax.f32 %v746, 0.0
      %v783 = vmax.f32 %v747, 0.0
      %v784 = vlaneseq
      %v785 = vshrl.u32 %v784, 7
      %v786 = vadd.s32 %v785, 8
      %v787 = vadd.s32 %v785, 16
      %v788 = vadd.s32 %v785, 24
      %v789 = vadd.s32 %v785, 32
      %v790 = vadd.s32 %v785, 40
      %v791 = vadd.s32 %v785, 48
      %v792 = vadd.s32 %v785, 56
      %v793 = vadd.s32 %v785, 64
      %v794 = vadd.s32 %v785, 72
      %v795 = vadd.s32 %v785, 80
      %v796 = vadd.s32 %v785, 88
      %v797 = vadd.s32 %v785, 96
      %v798 = vadd.s32 %v785, 104
      %v799 = vadd.s32 %v785, 112
      %v800 = vadd.s32 %v785, 120
      %v801 = vadd.s32 %v785, 128
      %v802 = vadd.s32 %v785, 136
      %v803 = vadd.s32 %v785, 144
      %v804 = vadd.s32 %v785, 152
      %v805 = vadd.s32 %v785, 160
      %v806 = vadd.s32 %v785, 168
      %v807 = vadd.s32 %v785, 176
      %v808 = vadd.s32 %v785, 184
      %v809 = vadd.s32 %v785, 192
      %v810 = vadd.s32 %v785, 200
      %v811 = vadd.s32 %v785, 208
      %v812 = vadd.s32 %v785, 216
      %v813 = vadd.s32 %v785, 224
      %v814 = vadd.s32 %v785, 232
      %v815 = vadd.s32 %v785, 240
      %v816 = vadd.s32 %v785, 248
      %v817 = vadd.s32 %v785, 256
      %v818 = vadd.s32 %v785, 264
      %v819 = vadd.s32 %v785, 272
      %v820 = vadd.s32 %v785, 280
      %vm821 = vcmp.lt.s32.totalorder %v785, 0
      %v822 = vsub.s32 0, %v785
      %v823 = vsel %vm821, %v822, %v785
      %v824 = vmul.u32.u64.compose %v823, 3817748708
      %v825 = vextract.low.u32 %v824
      %v826 = vextract.high.u32 %v824
      %v827 = vshrl.u32 %v826, 4
      %v828 = vmul.u32 %v827, 18
      %v829 = vsub.s32 %v823, %v828
      %v830 = vsub.s32 0, %v829
      %v831 = vsel %vm821, %v830, %v829
      %vm832 = vcmp.lt.s32.totalorder %v786, 0
      %v833 = vsub.s32 0, %v786
      %v834 = vsel %vm832, %v833, %v786
      %v835 = vmul.u32.u64.compose %v834, 3817748708
      %v836 = vextract.low.u32 %v835
      %v837 = vextract.high.u32 %v835
      %v838 = vshrl.u32 %v837, 4
      %v839 = vmul.u32 %v838, 18
      %v840 = vsub.s32 %v834, %v839
      %v841 = vsub.s32 0, %v840
      %v842 = vsel %vm832, %v841, %v840
      %vm843 = vcmp.lt.s32.totalorder %v787, 0
      %v844 = vsub.s32 0, %v787
      %v845 = vsel %vm843, %v844, %v787
      %v846 = vmul.u32.u64.compose %v845, 3817748708
      %v847 = vextract.low.u32 %v846
      %v848 = vextract.high.u32 %v846
      %v849 = vshrl.u32 %v848, 4
      %v850 = vmul.u32 %v849, 18
      %v851 = vsub.s32 %v845, %v850
      %v852 = vsub.s32 0, %v851
      %v853 = vsel %vm843, %v852, %v851
      %vm854 = vcmp.lt.s32.totalorder %v788, 0
      %v855 = vsub.s32 0, %v788
      %v856 = vsel %vm854, %v855, %v788
      %v857 = vmul.u32.u64.compose %v856, 3817748708
      %v858 = vextract.low.u32 %v857
      %v859 = vextract.high.u32 %v857
      %v860 = vshrl.u32 %v859, 4
      %v861 = vmul.u32 %v860, 18
      %v862 = vsub.s32 %v856, %v861
      %v863 = vsub.s32 0, %v862
      %v864 = vsel %vm854, %v863, %v862
      %vm865 = vcmp.lt.s32.totalorder %v789, 0
      %v866 = vsub.s32 0, %v789
      %v867 = vsel %vm865, %v866, %v789
      %v868 = vmul.u32.u64.compose %v867, 3817748708
      %v869 = vextract.low.u32 %v868
      %v870 = vextract.high.u32 %v868
      %v871 = vshrl.u32 %v870, 4
      %v872 = vmul.u32 %v871, 18
      %v873 = vsub.s32 %v867, %v872
      %v874 = vsub.s32 0, %v873
      %v875 = vsel %vm865, %v874, %v873
      %vm876 = vcmp.lt.s32.totalorder %v790, 0
      %v877 = vsub.s32 0, %v790
      %v878 = vsel %vm876, %v877, %v790
      %v879 = vmul.u32.u64.compose %v878, 3817748708
      %v880 = vextract.low.u32 %v879
      %v881 = vextract.high.u32 %v879
      %v882 = vshrl.u32 %v881, 4
      %v883 = vmul.u32 %v882, 18
      %v884 = vsub.s32 %v878, %v883
      %v885 = vsub.s32 0, %v884
      %v886 = vsel %vm876, %v885, %v884
      %vm887 = vcmp.lt.s32.totalorder %v791, 0
      %v888 = vsub.s32 0, %v791
      %v889 = vsel %vm887, %v888, %v791
      %v890 = vmul.u32.u64.compose %v889, 3817748708
      %v891 = vextract.low.u32 %v890
      %v892 = vextract.high.u32 %v890
      %v893 = vshrl.u32 %v892, 4
      %v894 = vmul.u32 %v893, 18
      %v895 = vsub.s32 %v889, %v894
      %v896 = vsub.s32 0, %v895
      %v897 = vsel %vm887, %v896, %v895
      %vm898 = vcmp.lt.s32.totalorder %v792, 0
      %v899 = vsub.s32 0, %v792
      %v900 = vsel %vm898, %v899, %v792
      %v901 = vmul.u32.u64.compose %v900, 3817748708
      %v902 = vextract.low.u32 %v901
      %v903 = vextract.high.u32 %v901
      %v904 = vshrl.u32 %v903, 4
      %v905 = vmul.u32 %v904, 18
      %v906 = vsub.s32 %v900, %v905
      %v907 = vsub.s32 0, %v906
      %v908 = vsel %vm898, %v907, %v906
      %vm909 = vcmp.lt.s32.totalorder %v793, 0
      %v910 = vsub.s32 0, %v793
      %v911 = vsel %vm909, %v910, %v793
      %v912 = vmul.u32.u64.compose %v911, 3817748708
      %v913 = vextract.low.u32 %v912
      %v914 = vextract.high.u32 %v912
      %v915 = vshrl.u32 %v914, 4
      %v916 = vmul.u32 %v915, 18
      %v917 = vsub.s32 %v911, %v916
      %v918 = vsub.s32 0, %v917
      %v919 = vsel %vm909, %v918, %v917
      %vm920 = vcmp.lt.s32.totalorder %v794, 0
      %v921 = vsub.s32 0, %v794
      %v922 = vsel %vm920, %v921, %v794
      %v923 = vmul.u32.u64.compose %v922, 3817748708
      %v924 = vextract.low.u32 %v923
      %v925 = vextract.high.u32 %v923
      %v926 = vshrl.u32 %v925, 4
      %v927 = vmul.u32 %v926, 18
      %v928 = vsub.s32 %v922, %v927
      %v929 = vsub.s32 0, %v928
      %v930 = vsel %vm920, %v929, %v928
      %vm931 = vcmp.lt.s32.totalorder %v795, 0
      %v932 = vsub.s32 0, %v795
      %v933 = vsel %vm931, %v932, %v795
      %v934 = vmul.u32.u64.compose %v933, 3817748708
      %v935 = vextract.low.u32 %v934
      %v936 = vextract.high.u32 %v934
      %v937 = vshrl.u32 %v936, 4
      %v938 = vmul.u32 %v937, 18
      %v939 = vsub.s32 %v933, %v938
      %v940 = vsub.s32 0, %v939
      %v941 = vsel %vm931, %v940, %v939
      %vm942 = vcmp.lt.s32.totalorder %v796, 0
      %v943 = vsub.s32 0, %v796
      %v944 = vsel %vm942, %v943, %v796
      %v945 = vmul.u32.u64.compose %v944, 3817748708
      %v946 = vextract.low.u32 %v945
      %v947 = vextract.high.u32 %v945
      %v948 = vshrl.u32 %v947, 4
      %v949 = vmul.u32 %v948, 18
      %v950 = vsub.s32 %v944, %v949
      %v951 = vsub.s32 0, %v950
      %v952 = vsel %vm942, %v951, %v950
      %vm953 = vcmp.lt.s32.totalorder %v797, 0
      %v954 = vsub.s32 0, %v797
      %v955 = vsel %vm953, %v954, %v797
      %v956 = vmul.u32.u64.compose %v955, 3817748708
      %v957 = vextract.low.u32 %v956
      %v958 = vextract.high.u32 %v956
      %v959 = vshrl.u32 %v958, 4
      %v960 = vmul.u32 %v959, 18
      %v961 = vsub.s32 %v955, %v960
      %v962 = vsub.s32 0, %v961
      %v963 = vsel %vm953, %v962, %v961
      %vm964 = vcmp.lt.s32.totalorder %v798, 0
      %v965 = vsub.s32 0, %v798
      %v966 = vsel %vm964, %v965, %v798
      %v967 = vmul.u32.u64.compose %v966, 3817748708
      %v968 = vextract.low.u32 %v967
      %v969 = vextract.high.u32 %v967
      %v970 = vshrl.u32 %v969, 4
      %v971 = vmul.u32 %v970, 18
      %v972 = vsub.s32 %v966, %v971
      %v973 = vsub.s32 0, %v972
      %v974 = vsel %vm964, %v973, %v972
      %vm975 = vcmp.lt.s32.totalorder %v799, 0
      %v976 = vsub.s32 0, %v799
      %v977 = vsel %vm975, %v976, %v799
      %v978 = vmul.u32.u64.compose %v977, 3817748708
      %v979 = vextract.low.u32 %v978
      %v980 = vextract.high.u32 %v978
      %v981 = vshrl.u32 %v980, 4
      %v982 = vmul.u32 %v981, 18
      %v983 = vsub.s32 %v977, %v982
      %v984 = vsub.s32 0, %v983
      %v985 = vsel %vm975, %v984, %v983
      %vm986 = vcmp.lt.s32.totalorder %v800, 0
      %v987 = vsub.s32 0, %v800
      %v988 = vsel %vm986, %v987, %v800
      %v989 = vmul.u32.u64.compose %v988, 3817748708
      %v990 = vextract.low.u32 %v989
      %v991 = vextract.high.u32 %v989
      %v992 = vshrl.u32 %v991, 4
      %v993 = vmul.u32 %v992, 18
      %v994 = vsub.s32 %v988, %v993
      %v995 = vsub.s32 0, %v994
      %v996 = vsel %vm986, %v995, %v994
      %vm997 = vcmp.lt.s32.totalorder %v801, 0
      %v998 = vsub.s32 0, %v801
      %v999 = vsel %vm997, %v998, %v801
      %v1000 = vmul.u32.u64.compose %v999, 3817748708
      %v1001 = vextract.low.u32 %v1000
      %v1002 = vextract.high.u32 %v1000
      %v1003 = vshrl.u32 %v1002, 4
      %v1004 = vmul.u32 %v1003, 18
      %v1005 = vsub.s32 %v999, %v1004
      %v1006 = vsub.s32 0, %v1005
      %v1007 = vsel %vm997, %v1006, %v1005
      %vm1008 = vcmp.lt.s32.totalorder %v802, 0
      %v1009 = vsub.s32 0, %v802
      %v1010 = vsel %vm1008, %v1009, %v802
      %v1011 = vmul.u32.u64.compose %v1010, 3817748708
      %v1012 = vextract.low.u32 %v1011
      %v1013 = vextract.high.u32 %v1011
      %v1014 = vshrl.u32 %v1013, 4
      %v1015 = vmul.u32 %v1014, 18
      %v1016 = vsub.s32 %v1010, %v1015
      %v1017 = vsub.s32 0, %v1016
      %v1018 = vsel %vm1008, %v1017, %v1016
      %vm1019 = vcmp.lt.s32.totalorder %v803, 0
      %v1020 = vsub.s32 0, %v803
      %v1021 = vsel %vm1019, %v1020, %v803
      %v1022 = vmul.u32.u64.compose %v1021, 3817748708
      %v1023 = vextract.low.u32 %v1022
      %v1024 = vextract.high.u32 %v1022
      %v1025 = vshrl.u32 %v1024, 4
      %v1026 = vmul.u32 %v1025, 18
      %v1027 = vsub.s32 %v1021, %v1026
      %v1028 = vsub.s32 0, %v1027
      %v1029 = vsel %vm1019, %v1028, %v1027
      %vm1030 = vcmp.lt.s32.totalorder %v804, 0
      %v1031 = vsub.s32 0, %v804
      %v1032 = vsel %vm1030, %v1031, %v804
      %v1033 = vmul.u32.u64.compose %v1032, 3817748708
      %v1034 = vextract.low.u32 %v1033
      %v1035 = vextract.high.u32 %v1033
      %v1036 = vshrl.u32 %v1035, 4
      %v1037 = vmul.u32 %v1036, 18
      %v1038 = vsub.s32 %v1032, %v1037
      %v1039 = vsub.s32 0, %v1038
      %v1040 = vsel %vm1030, %v1039, %v1038
      %vm1041 = vcmp.lt.s32.totalorder %v805, 0
      %v1042 = vsub.s32 0, %v805
      %v1043 = vsel %vm1041, %v1042, %v805
      %v1044 = vmul.u32.u64.compose %v1043, 3817748708
      %v1045 = vextract.low.u32 %v1044
      %v1046 = vextract.high.u32 %v1044
      %v1047 = vshrl.u32 %v1046, 4
      %v1048 = vmul.u32 %v1047, 18
      %v1049 = vsub.s32 %v1043, %v1048
      %v1050 = vsub.s32 0, %v1049
      %v1051 = vsel %vm1041, %v1050, %v1049
      %vm1052 = vcmp.lt.s32.totalorder %v806, 0
      %v1053 = vsub.s32 0, %v806
      %v1054 = vsel %vm1052, %v1053, %v806
      %v1055 = vmul.u32.u64.compose %v1054, 3817748708
      %v1056 = vextract.low.u32 %v1055
      %v1057 = vextract.high.u32 %v1055
      %v1058 = vshrl.u32 %v1057, 4
      %v1059 = vmul.u32 %v1058, 18
      %v1060 = vsub.s32 %v1054, %v1059
      %v1061 = vsub.s32 0, %v1060
      %v1062 = vsel %vm1052, %v1061, %v1060
      %vm1063 = vcmp.lt.s32.totalorder %v807, 0
      %v1064 = vsub.s32 0, %v807
      %v1065 = vsel %vm1063, %v1064, %v807
      %v1066 = vmul.u32.u64.compose %v1065, 3817748708
      %v1067 = vextract.low.u32 %v1066
      %v1068 = vextract.high.u32 %v1066
      %v1069 = vshrl.u32 %v1068, 4
      %v1070 = vmul.u32 %v1069, 18
      %v1071 = vsub.s32 %v1065, %v1070
      %v1072 = vsub.s32 0, %v1071
      %v1073 = vsel %vm1063, %v1072, %v1071
      %vm1074 = vcmp.lt.s32.totalorder %v808, 0
      %v1075 = vsub.s32 0, %v808
      %v1076 = vsel %vm1074, %v1075, %v808
      %v1077 = vmul.u32.u64.compose %v1076, 3817748708
      %v1078 = vextract.low.u32 %v1077
      %v1079 = vextract.high.u32 %v1077
      %v1080 = vshrl.u32 %v1079, 4
      %v1081 = vmul.u32 %v1080, 18
      %v1082 = vsub.s32 %v1076, %v1081
      %v1083 = vsub.s32 0, %v1082
      %v1084 = vsel %vm1074, %v1083, %v1082
      %vm1085 = vcmp.lt.s32.totalorder %v809, 0
      %v1086 = vsub.s32 0, %v809
      %v1087 = vsel %vm1085, %v1086, %v809
      %v1088 = vmul.u32.u64.compose %v1087, 3817748708
      %v1089 = vextract.low.u32 %v1088
      %v1090 = vextract.high.u32 %v1088
      %v1091 = vshrl.u32 %v1090, 4
      %v1092 = vmul.u32 %v1091, 18
      %v1093 = vsub.s32 %v1087, %v1092
      %v1094 = vsub.s32 0, %v1093
      %v1095 = vsel %vm1085, %v1094, %v1093
      %vm1096 = vcmp.lt.s32.totalorder %v810, 0
      %v1097 = vsub.s32 0, %v810
      %v1098 = vsel %vm1096, %v1097, %v810
      %v1099 = vmul.u32.u64.compose %v1098, 3817748708
      %v1100 = vextract.low.u32 %v1099
      %v1101 = vextract.high.u32 %v1099
      %v1102 = vshrl.u32 %v1101, 4
      %v1103 = vmul.u32 %v1102, 18
      %v1104 = vsub.s32 %v1098, %v1103
      %v1105 = vsub.s32 0, %v1104
      %v1106 = vsel %vm1096, %v1105, %v1104
      %vm1107 = vcmp.lt.s32.totalorder %v811, 0
      %v1108 = vsub.s32 0, %v811
      %v1109 = vsel %vm1107, %v1108, %v811
      %v1110 = vmul.u32.u64.compose %v1109, 3817748708
      %v1111 = vextract.low.u32 %v1110
      %v1112 = vextract.high.u32 %v1110
      %v1113 = vshrl.u32 %v1112, 4
      %v1114 = vmul.u32 %v1113, 18
      %v1115 = vsub.s32 %v1109, %v1114
      %v1116 = vsub.s32 0, %v1115
      %v1117 = vsel %vm1107, %v1116, %v1115
      %vm1118 = vcmp.lt.s32.totalorder %v812, 0
      %v1119 = vsub.s32 0, %v812
      %v1120 = vsel %vm1118, %v1119, %v812
      %v1121 = vmul.u32.u64.compose %v1120, 3817748708
      %v1122 = vextract.low.u32 %v1121
      %v1123 = vextract.high.u32 %v1121
      %v1124 = vshrl.u32 %v1123, 4
      %v1125 = vmul.u32 %v1124, 18
      %v1126 = vsub.s32 %v1120, %v1125
      %v1127 = vsub.s32 0, %v1126
      %v1128 = vsel %vm1118, %v1127, %v1126
      %vm1129 = vcmp.lt.s32.totalorder %v813, 0
      %v1130 = vsub.s32 0, %v813
      %v1131 = vsel %vm1129, %v1130, %v813
      %v1132 = vmul.u32.u64.compose %v1131, 3817748708
      %v1133 = vextract.low.u32 %v1132
      %v1134 = vextract.high.u32 %v1132
      %v1135 = vshrl.u32 %v1134, 4
      %v1136 = vmul.u32 %v1135, 18
      %v1137 = vsub.s32 %v1131, %v1136
      %v1138 = vsub.s32 0, %v1137
      %v1139 = vsel %vm1129, %v1138, %v1137
      %vm1140 = vcmp.lt.s32.totalorder %v814, 0
      %v1141 = vsub.s32 0, %v814
      %v1142 = vsel %vm1140, %v1141, %v814
      %v1143 = vmul.u32.u64.compose %v1142, 3817748708
      %v1144 = vextract.low.u32 %v1143
      %v1145 = vextract.high.u32 %v1143
      %v1146 = vshrl.u32 %v1145, 4
      %v1147 = vmul.u32 %v1146, 18
      %v1148 = vsub.s32 %v1142, %v1147
      %v1149 = vsub.s32 0, %v1148
      %v1150 = vsel %vm1140, %v1149, %v1148
      %vm1151 = vcmp.lt.s32.totalorder %v815, 0
      %v1152 = vsub.s32 0, %v815
      %v1153 = vsel %vm1151, %v1152, %v815
      %v1154 = vmul.u32.u64.compose %v1153, 3817748708
      %v1155 = vextract.low.u32 %v1154
      %v1156 = vextract.high.u32 %v1154
      %v1157 = vshrl.u32 %v1156, 4
      %v1158 = vmul.u32 %v1157, 18
      %v1159 = vsub.s32 %v1153, %v1158
      %v1160 = vsub.s32 0, %v1159
      %v1161 = vsel %vm1151, %v1160, %v1159
      %vm1162 = vcmp.lt.s32.totalorder %v816, 0
      %v1163 = vsub.s32 0, %v816
      %v1164 = vsel %vm1162, %v1163, %v816
      %v1165 = vmul.u32.u64.compose %v1164, 3817748708
      %v1166 = vextract.low.u32 %v1165
      %v1167 = vextract.high.u32 %v1165
      %v1168 = vshrl.u32 %v1167, 4
      %v1169 = vmul.u32 %v1168, 18
      %v1170 = vsub.s32 %v1164, %v1169
      %v1171 = vsub.s32 0, %v1170
      %v1172 = vsel %vm1162, %v1171, %v1170
      %vm1173 = vcmp.lt.s32.totalorder %v817, 0
      %v1174 = vsub.s32 0, %v817
      %v1175 = vsel %vm1173, %v1174, %v817
      %v1176 = vmul.u32.u64.compose %v1175, 3817748708
      %v1177 = vextract.low.u32 %v1176
      %v1178 = vextract.high.u32 %v1176
      %v1179 = vshrl.u32 %v1178, 4
      %v1180 = vmul.u32 %v1179, 18
      %v1181 = vsub.s32 %v1175, %v1180
      %v1182 = vsub.s32 0, %v1181
      %v1183 = vsel %vm1173, %v1182, %v1181
      %vm1184 = vcmp.lt.s32.totalorder %v818, 0
      %v1185 = vsub.s32 0, %v818
      %v1186 = vsel %vm1184, %v1185, %v818
      %v1187 = vmul.u32.u64.compose %v1186, 3817748708
      %v1188 = vextract.low.u32 %v1187
      %v1189 = vextract.high.u32 %v1187
      %v1190 = vshrl.u32 %v1189, 4
      %v1191 = vmul.u32 %v1190, 18
      %v1192 = vsub.s32 %v1186, %v1191
      %v1193 = vsub.s32 0, %v1192
      %v1194 = vsel %vm1184, %v1193, %v1192
      %vm1195 = vcmp.lt.s32.totalorder %v819, 0
      %v1196 = vsub.s32 0, %v819
      %v1197 = vsel %vm1195, %v1196, %v819
      %v1198 = vmul.u32.u64.compose %v1197, 3817748708
      %v1199 = vextract.low.u32 %v1198
      %v1200 = vextract.high.u32 %v1198
      %v1201 = vshrl.u32 %v1200, 4
      %v1202 = vmul.u32 %v1201, 18
      %v1203 = vsub.s32 %v1197, %v1202
      %v1204 = vsub.s32 0, %v1203
      %v1205 = vsel %vm1195, %v1204, %v1203
      %vm1206 = vcmp.lt.s32.totalorder %v820, 0
      %v1207 = vsub.s32 0, %v820
      %v1208 = vsel %vm1206, %v1207, %v820
      %v1209 = vmul.u32.u64.compose %v1208, 3817748708
      %v1210 = vextract.low.u32 %v1209
      %v1211 = vextract.high.u32 %v1209
      %v1212 = vshrl.u32 %v1211, 4
      %v1213 = vmul.u32 %v1212, 18
      %v1214 = vsub.s32 %v1208, %v1213
      %v1215 = vsub.s32 0, %v1214
      %v1216 = vsel %vm1206, %v1215, %v1214
      %vm1217 = vcmp.ne.s32.totalorder %v831, 0
      %vm1218 = vcmp.ne.s32.totalorder %v842, 0
      %vm1219 = vcmp.ne.s32.totalorder %v853, 0
      %vm1220 = vcmp.ne.s32.totalorder %v864, 0
      %vm1221 = vcmp.ne.s32.totalorder %v875, 0
      %vm1222 = vcmp.ne.s32.totalorder %v886, 0
      %vm1223 = vcmp.ne.s32.totalorder %v897, 0
      %vm1224 = vcmp.ne.s32.totalorder %v908, 0
      %vm1225 = vcmp.ne.s32.totalorder %v919, 0
      %vm1226 = vcmp.ne.s32.totalorder %v930, 0
      %vm1227 = vcmp.ne.s32.totalorder %v941, 0
      %vm1228 = vcmp.ne.s32.totalorder %v952, 0
      %vm1229 = vcmp.ne.s32.totalorder %v963, 0
      %vm1230 = vcmp.ne.s32.totalorder %v974, 0
      %vm1231 = vcmp.ne.s32.totalorder %v985, 0
      %vm1232 = vcmp.ne.s32.totalorder %v996, 0
      %vm1233 = vcmp.ne.s32.totalorder %v1007, 0
      %vm1234 = vcmp.ne.s32.totalorder %v1018, 0
      %vm1235 = vcmp.ne.s32.totalorder %v1029, 0
      %vm1236 = vcmp.ne.s32.totalorder %v1040, 0
      %vm1237 = vcmp.ne.s32.totalorder %v1051, 0
      %vm1238 = vcmp.ne.s32.totalorder %v1062, 0
      %vm1239 = vcmp.ne.s32.totalorder %v1073, 0
      %vm1240 = vcmp.ne.s32.totalorder %v1084, 0
      %vm1241 = vcmp.ne.s32.totalorder %v1095, 0
      %vm1242 = vcmp.ne.s32.totalorder %v1106, 0
      %vm1243 = vcmp.ne.s32.totalorder %v1117, 0
      %vm1244 = vcmp.ne.s32.totalorder %v1128, 0
      %vm1245 = vcmp.ne.s32.totalorder %v1139, 0
      %vm1246 = vcmp.ne.s32.totalorder %v1150, 0
      %vm1247 = vcmp.ne.s32.totalorder %v1161, 0
      %vm1248 = vcmp.ne.s32.totalorder %v1172, 0
      %vm1249 = vcmp.ne.s32.totalorder %v1183, 0
      %vm1250 = vcmp.ne.s32.totalorder %v1194, 0
      %vm1251 = vcmp.ne.s32.totalorder %v1205, 0
      %vm1252 = vcmp.ne.s32.totalorder %v1216, 0
      %vm1253 = vcmp.lt.s32.totalorder %v831, 0
      %vm1254 = vcmp.lt.s32.totalorder %v842, 0
      %vm1255 = vcmp.lt.s32.totalorder %v853, 0
      %vm1256 = vcmp.lt.s32.totalorder %v864, 0
      %vm1257 = vcmp.lt.s32.totalorder %v875, 0
      %vm1258 = vcmp.lt.s32.totalorder %v886, 0
      %vm1259 = vcmp.lt.s32.totalorder %v897, 0
      %vm1260 = vcmp.lt.s32.totalorder %v908, 0
      %vm1261 = vcmp.lt.s32.totalorder %v919, 0
      %vm1262 = vcmp.lt.s32.totalorder %v930, 0
      %vm1263 = vcmp.lt.s32.totalorder %v941, 0
      %vm1264 = vcmp.lt.s32.totalorder %v952, 0
      %vm1265 = vcmp.lt.s32.totalorder %v963, 0
      %vm1266 = vcmp.lt.s32.totalorder %v974, 0
      %vm1267 = vcmp.lt.s32.totalorder %v985, 0
      %vm1268 = vcmp.lt.s32.totalorder %v996, 0
      %vm1269 = vcmp.lt.s32.totalorder %v1007, 0
      %vm1270 = vcmp.lt.s32.totalorder %v1018, 0
      %vm1271 = vcmp.lt.s32.totalorder %v1029, 0
      %vm1272 = vcmp.lt.s32.totalorder %v1040, 0
      %vm1273 = vcmp.lt.s32.totalorder %v1051, 0
      %vm1274 = vcmp.lt.s32.totalorder %v1062, 0
      %vm1275 = vcmp.lt.s32.totalorder %v1073, 0
      %vm1276 = vcmp.lt.s32.totalorder %v1084, 0
      %vm1277 = vcmp.lt.s32.totalorder %v1095, 0
      %vm1278 = vcmp.lt.s32.totalorder %v1106, 0
      %vm1279 = vcmp.lt.s32.totalorder %v1117, 0
      %vm1280 = vcmp.lt.s32.totalorder %v1128, 0
      %vm1281 = vcmp.lt.s32.totalorder %v1139, 0
      %vm1282 = vcmp.lt.s32.totalorder %v1150, 0
      %vm1283 = vcmp.lt.s32.totalorder %v1161, 0
      %vm1284 = vcmp.lt.s32.totalorder %v1172, 0
      %vm1285 = vcmp.lt.s32.totalorder %v1183, 0
      %vm1286 = vcmp.lt.s32.totalorder %v1194, 0
      %vm1287 = vcmp.lt.s32.totalorder %v1205, 0
      %vm1288 = vcmp.lt.s32.totalorder %v1216, 0
      %vm1289 = vmand %vm1253, %vm1217
      %vm1290 = vmand %vm1254, %vm1218
      %vm1291 = vmand %vm1255, %vm1219
      %vm1292 = vmand %vm1256, %vm1220
      %vm1293 = vmand %vm1257, %vm1221
      %vm1294 = vmand %vm1258, %vm1222
      %vm1295 = vmand %vm1259, %vm1223
      %vm1296 = vmand %vm1260, %vm1224
      %vm1297 = vmand %vm1261, %vm1225
      %vm1298 = vmand %vm1262, %vm1226
      %vm1299 = vmand %vm1263, %vm1227
      %vm1300 = vmand %vm1264, %vm1228
      %vm1301 = vmand %vm1265, %vm1229
      %vm1302 = vmand %vm1266, %vm1230
      %vm1303 = vmand %vm1267, %vm1231
      %vm1304 = vmand %vm1268, %vm1232
      %vm1305 = vmand %vm1269, %vm1233
      %vm1306 = vmand %vm1270, %vm1234
      %vm1307 = vmand %vm1271, %vm1235
      %vm1308 = vmand %vm1272, %vm1236
      %vm1309 = vmand %vm1273, %vm1237
      %vm1310 = vmand %vm1274, %vm1238
      %vm1311 = vmand %vm1275, %vm1239
      %vm1312 = vmand %vm1276, %vm1240
      %vm1313 = vmand %vm1277, %vm1241
      %vm1314 = vmand %vm1278, %vm1242
      %vm1315 = vmand %vm1279, %vm1243
      %vm1316 = vmand %vm1280, %vm1244
      %vm1317 = vmand %vm1281, %vm1245
      %vm1318 = vmand %vm1282, %vm1246
      %vm1319 = vmand %vm1283, %vm1247
      %vm1320 = vmand %vm1284, %vm1248
      %vm1321 = vmand %vm1285, %vm1249
      %vm1322 = vmand %vm1286, %vm1250
      %vm1323 = vmand %vm1287, %vm1251
      %vm1324 = vmand %vm1288, %vm1252
      %v1325 = vadd.s32 %v831, 18
      %v1326 = vadd.s32 %v842, 18
      %v1327 = vadd.s32 %v853, 18
      %v1328 = vadd.s32 %v864, 18
      %v1329 = vadd.s32 %v875, 18
      %v1330 = vadd.s32 %v886, 18
      %v1331 = vadd.s32 %v897, 18
      %v1332 = vadd.s32 %v908, 18
      %v1333 = vadd.s32 %v919, 18
      %v1334 = vadd.s32 %v930, 18
      %v1335 = vadd.s32 %v941, 18
      %v1336 = vadd.s32 %v952, 18
      %v1337 = vadd.s32 %v963, 18
      %v1338 = vadd.s32 %v974, 18
      %v1339 = vadd.s32 %v985, 18
      %v1340 = vadd.s32 %v996, 18
      %v1341 = vadd.s32 %v1007, 18
      %v1342 = vadd.s32 %v1018, 18
      %v1343 = vadd.s32 %v1029, 18
      %v1344 = vadd.s32 %v1040, 18
      %v1345 = vadd.s32 %v1051, 18
      %v1346 = vadd.s32 %v1062, 18
      %v1347 = vadd.s32 %v1073, 18
      %v1348 = vadd.s32 %v1084, 18
      %v1349 = vadd.s32 %v1095, 18
      %v1350 = vadd.s32 %v1106, 18
      %v1351 = vadd.s32 %v1117, 18
      %v1352 = vadd.s32 %v1128, 18
      %v1353 = vadd.s32 %v1139, 18
      %v1354 = vadd.s32 %v1150, 18
      %v1355 = vadd.s32 %v1161, 18
      %v1356 = vadd.s32 %v1172, 18
      %v1357 = vadd.s32 %v1183, 18
      %v1358 = vadd.s32 %v1194, 18
      %v1359 = vadd.s32 %v1205, 18
      %v1360 = vadd.s32 %v1216, 18
      %v1361 = vsel %vm1289, %v1325, %v831
      %v1362 = vsel %vm1290, %v1326, %v842
      %v1363 = vsel %vm1291, %v1327, %v853
      %v1364 = vsel %vm1292, %v1328, %v864
      %v1365 = vsel %vm1293, %v1329, %v875
      %v1366 = vsel %vm1294, %v1330, %v886
      %v1367 = vsel %vm1295, %v1331, %v897
      %v1368 = vsel %vm1296, %v1332, %v908
      %v1369 = vsel %vm1297, %v1333, %v919
      %v1370 = vsel %vm1298, %v1334, %v930
      %v1371 = vsel %vm1299, %v1335, %v941
      %v1372 = vsel %vm1300, %v1336, %v952
      %v1373 = vsel %vm1301, %v1337, %v963
      %v1374 = vsel %vm1302, %v1338, %v974
      %v1375 = vsel %vm1303, %v1339, %v985
      %v1376 = vsel %vm1304, %v1340, %v996
      %v1377 = vsel %vm1305, %v1341, %v1007
      %v1378 = vsel %vm1306, %v1342, %v1018
      %v1379 = vsel %vm1307, %v1343, %v1029
      %v1380 = vsel %vm1308, %v1344, %v1040
      %v1381 = vsel %vm1309, %v1345, %v1051
      %v1382 = vsel %vm1310, %v1346, %v1062
      %v1383 = vsel %vm1311, %v1347, %v1073
      %v1384 = vsel %vm1312, %v1348, %v1084
      %v1385 = vsel %vm1313, %v1349, %v1095
      %v1386 = vsel %vm1314, %v1350, %v1106
      %v1387 = vsel %vm1315, %v1351, %v1117
      %v1388 = vsel %vm1316, %v1352, %v1128
      %v1389 = vsel %vm1317, %v1353, %v1139
      %v1390 = vsel %vm1318, %v1354, %v1150
      %v1391 = vsel %vm1319, %v1355, %v1161
      %v1392 = vsel %vm1320, %v1356, %v1172
      %v1393 = vsel %vm1321, %v1357, %v1183
      %v1394 = vsel %vm1322, %v1358, %v1194
      %v1395 = vsel %vm1323, %v1359, %v1205
      %v1396 = vsel %vm1324, %v1360, %v1216
      %vm1397 = vcmp.lt.s32.totalorder %v1361, 16
      %vm1398 = vcmp.lt.s32.totalorder %v1362, 16
      %vm1399 = vcmp.lt.s32.totalorder %v1363, 16
      %vm1400 = vcmp.lt.s32.totalorder %v1364, 16
      %vm1401 = vcmp.lt.s32.totalorder %v1365, 16
      %vm1402 = vcmp.lt.s32.totalorder %v1366, 16
      %vm1403 = vcmp.lt.s32.totalorder %v1367, 16
      %vm1404 = vcmp.lt.s32.totalorder %v1368, 16
      %vm1405 = vcmp.lt.s32.totalorder %v1369, 16
      %vm1406 = vcmp.lt.s32.totalorder %v1370, 16
      %vm1407 = vcmp.lt.s32.totalorder %v1371, 16
      %vm1408 = vcmp.lt.s32.totalorder %v1372, 16
      %vm1409 = vcmp.lt.s32.totalorder %v1373, 16
      %vm1410 = vcmp.lt.s32.totalorder %v1374, 16
      %vm1411 = vcmp.lt.s32.totalorder %v1375, 16
      %vm1412 = vcmp.lt.s32.totalorder %v1376, 16
      %vm1413 = vcmp.lt.s32.totalorder %v1377, 16
      %vm1414 = vcmp.lt.s32.totalorder %v1378, 16
      %vm1415 = vcmp.lt.s32.totalorder %v1379, 16
      %vm1416 = vcmp.lt.s32.totalorder %v1380, 16
      %vm1417 = vcmp.lt.s32.totalorder %v1381, 16
      %vm1418 = vcmp.lt.s32.totalorder %v1382, 16
      %vm1419 = vcmp.lt.s32.totalorder %v1383, 16
      %vm1420 = vcmp.lt.s32.totalorder %v1384, 16
      %vm1421 = vcmp.lt.s32.totalorder %v1385, 16
      %vm1422 = vcmp.lt.s32.totalorder %v1386, 16
      %vm1423 = vcmp.lt.s32.totalorder %v1387, 16
      %vm1424 = vcmp.lt.s32.totalorder %v1388, 16
      %vm1425 = vcmp.lt.s32.totalorder %v1389, 16
      %vm1426 = vcmp.lt.s32.totalorder %v1390, 16
      %vm1427 = vcmp.lt.s32.totalorder %v1391, 16
      %vm1428 = vcmp.lt.s32.totalorder %v1392, 16
      %vm1429 = vcmp.lt.s32.totalorder %v1393, 16
      %vm1430 = vcmp.lt.s32.totalorder %v1394, 16
      %vm1431 = vcmp.lt.s32.totalorder %v1395, 16
      %vm1432 = vcmp.lt.s32.totalorder %v1396, 16
      %v1433 = vsel %vm1397, 1, 0
      %v1434 = vsel %vm1398, 1, 0
      %v1435 = vsel %vm1399, 1, 0
      %v1436 = vsel %vm1400, 1, 0
      %v1437 = vsel %vm1401, 1, 0
      %v1438 = vsel %vm1402, 1, 0
      %v1439 = vsel %vm1403, 1, 0
      %v1440 = vsel %vm1404, 1, 0
      %v1441 = vsel %vm1405, 1, 0
      %v1442 = vsel %vm1406, 1, 0
      %v1443 = vsel %vm1407, 1, 0
      %v1444 = vsel %vm1408, 1, 0
      %v1445 = vsel %vm1409, 1, 0
      %v1446 = vsel %vm1410, 1, 0
      %v1447 = vsel %vm1411, 1, 0
      %v1448 = vsel %vm1412, 1, 0
      %v1449 = vsel %vm1413, 1, 0
      %v1450 = vsel %vm1414, 1, 0
      %v1451 = vsel %vm1415, 1, 0
      %v1452 = vsel %vm1416, 1, 0
      %v1453 = vsel %vm1417, 1, 0
      %v1454 = vsel %vm1418, 1, 0
      %v1455 = vsel %vm1419, 1, 0
      %v1456 = vsel %vm1420, 1, 0
      %v1457 = vsel %vm1421, 1, 0
      %v1458 = vsel %vm1422, 1, 0
      %v1459 = vsel %vm1423, 1, 0
      %v1460 = vsel %vm1424, 1, 0
      %v1461 = vsel %vm1425, 1, 0
      %v1462 = vsel %vm1426, 1, 0
      %v1463 = vsel %vm1427, 1, 0
      %v1464 = vsel %vm1428, 1, 0
      %v1465 = vsel %vm1429, 1, 0
      %v1466 = vsel %vm1430, 1, 0
      %v1467 = vsel %vm1431, 1, 0
      %v1468 = vsel %vm1432, 1, 0
      %vm1469 = vcmp.eq.s32.totalorder %v1433, 1
      %vm1470 = vcmp.eq.s32.totalorder %v1434, 1
      %vm1471 = vcmp.eq.s32.totalorder %v1435, 1
      %vm1472 = vcmp.eq.s32.totalorder %v1436, 1
      %vm1473 = vcmp.eq.s32.totalorder %v1437, 1
      %vm1474 = vcmp.eq.s32.totalorder %v1438, 1
      %vm1475 = vcmp.eq.s32.totalorder %v1439, 1
      %vm1476 = vcmp.eq.s32.totalorder %v1440, 1
      %vm1477 = vcmp.eq.s32.totalorder %v1441, 1
      %vm1478 = vcmp.eq.s32.totalorder %v1442, 1
      %vm1479 = vcmp.eq.s32.totalorder %v1443, 1
      %vm1480 = vcmp.eq.s32.totalorder %v1444, 1
      %vm1481 = vcmp.eq.s32.totalorder %v1445, 1
      %vm1482 = vcmp.eq.s32.totalorder %v1446, 1
      %vm1483 = vcmp.eq.s32.totalorder %v1447, 1
      %vm1484 = vcmp.eq.s32.totalorder %v1448, 1
      %vm1485 = vcmp.eq.s32.totalorder %v1449, 1
      %vm1486 = vcmp.eq.s32.totalorder %v1450, 1
      %vm1487 = vcmp.eq.s32.totalorder %v1451, 1
      %vm1488 = vcmp.eq.s32.totalorder %v1452, 1
      %vm1489 = vcmp.eq.s32.totalorder %v1453, 1
      %vm1490 = vcmp.eq.s32.totalorder %v1454, 1
      %vm1491 = vcmp.eq.s32.totalorder %v1455, 1
      %vm1492 = vcmp.eq.s32.totalorder %v1456, 1
      %vm1493 = vcmp.eq.s32.totalorder %v1457, 1
      %vm1494 = vcmp.eq.s32.totalorder %v1458, 1
      %vm1495 = vcmp.eq.s32.totalorder %v1459, 1
      %vm1496 = vcmp.eq.s32.totalorder %v1460, 1
      %vm1497 = vcmp.eq.s32.totalorder %v1461, 1
      %vm1498 = vcmp.eq.s32.totalorder %v1462, 1
      %vm1499 = vcmp.eq.s32.totalorder %v1463, 1
      %vm1500 = vcmp.eq.s32.totalorder %v1464, 1
      %vm1501 = vcmp.eq.s32.totalorder %v1465, 1
      %vm1502 = vcmp.eq.s32.totalorder %v1466, 1
      %vm1503 = vcmp.eq.s32.totalorder %v1467, 1
      %vm1504 = vcmp.eq.s32.totalorder %v1468, 1
      %v1505 = vsel %vm1469, %v748, 0.0
      %v1506 = vsel %vm1470, %v749, 0.0
      %v1507 = vsel %vm1471, %v750, 0.0
      %v1508 = vsel %vm1472, %v751, 0.0
      %v1509 = vsel %vm1473, %v752, 0.0
      %v1510 = vsel %vm1474, %v753, 0.0
      %v1511 = vsel %vm1475, %v754, 0.0
      %v1512 = vsel %vm1476, %v755, 0.0
      %v1513 = vsel %vm1477, %v756, 0.0
      %v1514 = vsel %vm1478, %v757, 0.0
      %v1515 = vsel %vm1479, %v758, 0.0
      %v1516 = vsel %vm1480, %v759, 0.0
      %v1517 = vsel %vm1481, %v760, 0.0
      %v1518 = vsel %vm1482, %v761, 0.0
      %v1519 = vsel %vm1483, %v762, 0.0
      %v1520 = vsel %vm1484, %v763, 0.0
      %v1521 = vsel %vm1485, %v764, 0.0
      %v1522 = vsel %vm1486, %v765, 0.0
      %v1523 = vsel %vm1487, %v766, 0.0
      %v1524 = vsel %vm1488, %v767, 0.0
      %v1525 = vsel %vm1489, %v768, 0.0
      %v1526 = vsel %vm1490, %v769, 0.0
      %v1527 = vsel %vm1491, %v770, 0.0
      %v1528 = vsel %vm1492, %v771, 0.0
      %v1529 = vsel %vm1493, %v772, 0.0
      %v1530 = vsel %vm1494, %v773, 0.0
      %v1531 = vsel %vm1495, %v774, 0.0
      %v1532 = vsel %vm1496, %v775, 0.0
      %v1533 = vsel %vm1497, %v776, 0.0
      %v1534 = vsel %vm1498, %v777, 0.0
      %v1535 = vsel %vm1499, %v778, 0.0
      %v1536 = vsel %vm1500, %v779, 0.0
      %v1537 = vsel %vm1501, %v780, 0.0
      %v1538 = vsel %vm1502, %v781, 0.0
      %v1539 = vsel %vm1503, %v782, 0.0
      %v1540 = vsel %vm1504, %v783, 0.0
      %v1541 = vpack.c.bf16 %v1506, %v1505
      %v1542 = vpack.c.bf16 %v1508, %v1507
      %v1543 = vpack.c.bf16 %v1510, %v1509
      %v1544 = vpack.c.bf16 %v1512, %v1511
      %v1545 = vpack.c.bf16 %v1514, %v1513
      %v1546 = vpack.c.bf16 %v1516, %v1515
      %v1547 = vpack.c.bf16 %v1518, %v1517
      %v1548 = vpack.c.bf16 %v1520, %v1519
      %v1549 = vpack.c.bf16 %v1522, %v1521
      %v1550 = vpack.c.bf16 %v1524, %v1523
      %v1551 = vpack.c.bf16 %v1526, %v1525
      %v1552 = vpack.c.bf16 %v1528, %v1527
      %v1553 = vpack.c.bf16 %v1530, %v1529
      %v1554 = vpack.c.bf16 %v1532, %v1531
      %v1555 = vpack.c.bf16 %v1534, %v1533
      %v1556 = vpack.c.bf16 %v1536, %v1535
      %v1557 = vpack.c.bf16 %v1538, %v1537
      %v1558 = vpack.c.bf16 %v1540, %v1539
      %v1559 = vunpack.c.l.bf16 %v1541
      %v1560 = vunpack.c.h.bf16 %v1541
      %v1561 = vunpack.c.l.bf16 %v1542
      %v1562 = vunpack.c.h.bf16 %v1542
      %v1563 = vunpack.c.l.bf16 %v1543
      %v1564 = vunpack.c.h.bf16 %v1543
      %v1565 = vunpack.c.l.bf16 %v1544
      %v1566 = vunpack.c.h.bf16 %v1544
      %v1567 = vunpack.c.l.bf16 %v1545
      %v1568 = vunpack.c.h.bf16 %v1545
      %v1569 = vunpack.c.l.bf16 %v1546
      %v1570 = vunpack.c.h.bf16 %v1546
      %v1571 = vunpack.c.l.bf16 %v1547
      %v1572 = vunpack.c.h.bf16 %v1547
      %v1573 = vunpack.c.l.bf16 %v1548
      %v1574 = vunpack.c.h.bf16 %v1548
      %v1575 = vunpack.c.l.bf16 %v1549
      %v1576 = vunpack.c.h.bf16 %v1549
      %v1577 = vunpack.c.l.bf16 %v1550
      %v1578 = vunpack.c.h.bf16 %v1550
      %v1579 = vunpack.c.l.bf16 %v1551
      %v1580 = vunpack.c.h.bf16 %v1551
      %v1581 = vunpack.c.l.bf16 %v1552
      %v1582 = vunpack.c.h.bf16 %v1552
      %v1583 = vunpack.c.l.bf16 %v1553
      %v1584 = vunpack.c.h.bf16 %v1553
      %v1585 = vunpack.c.l.bf16 %v1554
      %v1586 = vunpack.c.h.bf16 %v1554
      %v1587 = vunpack.c.l.bf16 %v1555
      %v1588 = vunpack.c.h.bf16 %v1555
      %v1589 = vunpack.c.l.bf16 %v1556
      %v1590 = vunpack.c.h.bf16 %v1556
      %v1591 = vunpack.c.l.bf16 %v1557
      %v1592 = vunpack.c.h.bf16 %v1557
      %v1593 = vunpack.c.l.bf16 %v1558
      %v1594 = vunpack.c.h.bf16 %v1558
      %1595 = vst [vmem:[#allocation2] sm:$0xff] 0.0
      %1596 = vst [vmem:[#allocation2 + $0x8] sm:$0xff] 0.0
      %1597 = vst [vmem:[#allocation2 + $0x10] sm:$0xff] 0.0
      %1598 = vst [vmem:[#allocation2 + $0x18] sm:$0xff] 0.0
      %1599 = vst [vmem:[#allocation2 + $0x140] sm:$0xff] 0.0
      %1600 = vst [vmem:[#allocation2 + $0x148] sm:$0xff] 0.0
      %1601 = vst [vmem:[#allocation2 + $0x150] sm:$0xff] 0.0
      %1602 = vst [vmem:[#allocation2 + $0x158] sm:$0xff] 0.0
      %1603 = vst [vmem:[#allocation2 + $0x20] sm:$0xff] %v1559
      %1604 = vst [vmem:[#allocation2 + $0x28] sm:$0xff] %v1560
      %1605 = vst [vmem:[#allocation2 + $0x30] sm:$0xff] %v1561
      %1606 = vst [vmem:[#allocation2 + $0x38] sm:$0xff] %v1562
      %1607 = vst [vmem:[#allocation2 + $0x40] sm:$0xff] %v1563
      %1608 = vst [vmem:[#allocation2 + $0x48] sm:$0xff] %v1564
      %1609 = vst [vmem:[#allocation2 + $0x50] sm:$0xff] %v1565
      %1610 = vst [vmem:[#allocation2 + $0x58] sm:$0xff] %v1566
      %1611 = vst [vmem:[#allocation2 + $0x60] sm:$0xff] %v1567
      %1612 = vst [vmem:[#allocation2 + $0x68] sm:$0xff] %v1568
      %1613 = vst [vmem:[#allocation2 + $0x70] sm:$0xff] %v1569
      %1614 = vst [vmem:[#allocation2 + $0x78] sm:$0xff] %v1570
      %1615 = vst [vmem:[#allocation2 + $0x80] sm:$0xff] %v1571
      %1616 = vst [vmem:[#allocation2 + $0x88] sm:$0xff] %v1572
      %1617 = vst [vmem:[#allocation2 + $0x90] sm:$0xff] %v1573
      %1618 = vst [vmem:[#allocation2 + $0x98] sm:$0xff] %v1574
      %1619 = vst [vmem:[#allocation2 + $0xa0] sm:$0xff] %v1575
      %1620 = vst [vmem:[#allocation2 + $0xa8] sm:$0xff] %v1576
      %1621 = vst [vmem:[#allocation2 + $0xb0] sm:$0xff] %v1577
      %1622 = vst [vmem:[#allocation2 + $0xb8] sm:$0xff] %v1578
      %1623 = vst [vmem:[#allocation2 + $0xc0] sm:$0xff] %v1579
      %1624 = vst [vmem:[#allocation2 + $0xc8] sm:$0xff] %v1580
      %1625 = vst [vmem:[#allocation2 + $0xd0] sm:$0xff] %v1581
      %1626 = vst [vmem:[#allocation2 + $0xd8] sm:$0xff] %v1582
      %1627 = vst [vmem:[#allocation2 + $0xe0] sm:$0xff] %v1583
      %1628 = vst [vmem:[#allocation2 + $0xe8] sm:$0xff] %v1584
      %1629 = vst [vmem:[#allocation2 + $0xf0] sm:$0xff] %v1585
      %1630 = vst [vmem:[#allocation2 + $0xf8] sm:$0xff] %v1586
      %1631 = vst [vmem:[#allocation2 + $0x100] sm:$0xff] %v1587
      %1632 = vst [vmem:[#allocation2 + $0x108] sm:$0xff] %v1588
      %1633 = vst [vmem:[#allocation2 + $0x110] sm:$0xff] %v1589
      %1634 = vst [vmem:[#allocation2 + $0x118] sm:$0xff] %v1590
      %1635 = vst [vmem:[#allocation2 + $0x120] sm:$0xff] %v1591
      %1636 = vst [vmem:[#allocation2 + $0x128] sm:$0xff] %v1592
      %1637 = vst [vmem:[#allocation2 + $0x130] sm:$0xff] %v1593
      %1638 = vst [vmem:[#allocation2 + $0x138] sm:$0xff] %v1594
      %v1639 = vld [vmem:[#allocation2 + $0xd] sm:$0xff]
      %v1640 = vld [vmem:[#allocation2 + $0x15] sm:$0xff]
      %v1641 = vld [vmem:[#allocation2 + $0x1d] sm:$0xff]
      %v1642 = vld [vmem:[#allocation2 + $0x25] sm:$0xff]
      %v1643 = vld [vmem:[#allocation2 + $0x2d] sm:$0xff]
      %v1644 = vld [vmem:[#allocation2 + $0x35] sm:$0xff]
      %v1645 = vld [vmem:[#allocation2 + $0x3d] sm:$0xff]
      %v1646 = vld [vmem:[#allocation2 + $0x45] sm:$0xff]
      %v1647 = vld [vmem:[#allocation2 + $0x4d] sm:$0xff]
      %v1648 = vld [vmem:[#allocation2 + $0x55] sm:$0xff]
      %v1649 = vld [vmem:[#allocation2 + $0x5d] sm:$0xff]
      %v1650 = vld [vmem:[#allocation2 + $0x65] sm:$0xff]
      %v1651 = vld [vmem:[#allocation2 + $0x6d] sm:$0xff]
      %v1652 = vld [vmem:[#allocation2 + $0x75] sm:$0xff]
      %v1653 = vld [vmem:[#allocation2 + $0x7d] sm:$0xff]
      %v1654 = vld [vmem:[#allocation2 + $0x85] sm:$0xff]
      %v1655 = vld [vmem:[#allocation2 + $0x8d] sm:$0xff]
      %v1656 = vld [vmem:[#allocation2 + $0x95] sm:$0xff]
      %v1657 = vld [vmem:[#allocation2 + $0x9d] sm:$0xff]
      %v1658 = vld [vmem:[#allocation2 + $0xa5] sm:$0xff]
      %v1659 = vld [vmem:[#allocation2 + $0xad] sm:$0xff]
      %v1660 = vld [vmem:[#allocation2 + $0xb5] sm:$0xff]
      %v1661 = vld [vmem:[#allocation2 + $0xbd] sm:$0xff]
      %v1662 = vld [vmem:[#allocation2 + $0xc5] sm:$0xff]
      %v1663 = vld [vmem:[#allocation2 + $0xcd] sm:$0xff]
      %v1664 = vld [vmem:[#allocation2 + $0xd5] sm:$0xff]
      %v1665 = vld [vmem:[#allocation2 + $0xdd] sm:$0xff]
      %v1666 = vld [vmem:[#allocation2 + $0xe5] sm:$0xff]
      %v1667 = vld [vmem:[#allocation2 + $0xed] sm:$0xff]
      %v1668 = vld [vmem:[#allocation2 + $0xf5] sm:$0xff]
      %v1669 = vld [vmem:[#allocation2 + $0xfd] sm:$0xff]
      %v1670 = vld [vmem:[#allocation2 + $0x105] sm:$0xff]
      %v1671 = vld [vmem:[#allocation2 + $0x10d] sm:$0xff]
      %v1672 = vld [vmem:[#allocation2 + $0x115] sm:$0xff]
      %v1673 = vld [vmem:[#allocation2 + $0x11d] sm:$0xff]
      %v1674 = vld [vmem:[#allocation2 + $0x125] sm:$0xff]
      %v1675 = vpack.c.bf16 %v1640, %v1639
      %v1676 = vpack.c.bf16 %v1642, %v1641
      %v1677 = vpack.c.bf16 %v1644, %v1643
      %v1678 = vpack.c.bf16 %v1646, %v1645
      %v1679 = vpack.c.bf16 %v1648, %v1647
      %v1680 = vpack.c.bf16 %v1650, %v1649
      %v1681 = vpack.c.bf16 %v1652, %v1651
      %v1682 = vpack.c.bf16 %v1654, %v1653
      %v1683 = vpack.c.bf16 %v1656, %v1655
      %v1684 = vpack.c.bf16 %v1658, %v1657
      %v1685 = vpack.c.bf16 %v1660, %v1659
      %v1686 = vpack.c.bf16 %v1662, %v1661
      %v1687 = vpack.c.bf16 %v1664, %v1663
      %v1688 = vpack.c.bf16 %v1666, %v1665
      %v1689 = vpack.c.bf16 %v1668, %v1667
      %v1690 = vpack.c.bf16 %v1670, %v1669
      %v1691 = vpack.c.bf16 %v1672, %v1671
      %v1692 = vpack.c.bf16 %v1674, %v1673
      %v1693 = vld [vmem:[%s4] sm:$0xf]
      %v1694 = vld [vmem:[%s4 + $0x4] sm:$0xf]
      %v1695 = vld [vmem:[%s4 + $0x8] sm:$0xf]
      %v1696 = vld [vmem:[%s4 + $0xc] sm:$0xf]
      %v1697 = vld [vmem:[%s4 + $0x10] sm:$0xf]
      %v1698 = vld [vmem:[%s4 + $0x14] sm:$0xf]
      %v1699 = vld [vmem:[%s4 + $0x18] sm:$0xf]
      %v1700 = vld [vmem:[%s4 + $0x1c] sm:$0xf]
      %v1701 = vld [vmem:[%s4 + $0x20] sm:$0xf]
      %v1702 = vld [vmem:[%s4 + $0x24] sm:$0xf]
      %v1703 = vld [vmem:[%s4 + $0x28] sm:$0xf]
      %v1704 = vld [vmem:[%s4 + $0x2c] sm:$0xf]
      %v1705 = vld [vmem:[%s4 + $0x30] sm:$0xf]
      %v1706 = vld [vmem:[%s4 + $0x34] sm:$0xf]
      %v1707 = vld [vmem:[%s4 + $0x38] sm:$0xf]
      %v1708 = vld [vmem:[%s4 + $0x3c] sm:$0xf]
      %v1709 = vld [vmem:[#allocation2 + $0xe] sm:$0xff]
      %v1710 = vld [vmem:[#allocation2 + $0x16] sm:$0xff]
      %v1711 = vld [vmem:[#allocation2 + $0x1e] sm:$0xff]
      %v1712 = vld [vmem:[#allocation2 + $0x26] sm:$0xff]
      %v1713 = vld [vmem:[#allocation2 + $0x2e] sm:$0xff]
      %v1714 = vld [vmem:[#allocation2 + $0x36] sm:$0xff]
      %v1715 = vld [vmem:[#allocation2 + $0x3e] sm:$0xff]
      %v1716 = vld [vmem:[#allocation2 + $0x46] sm:$0xff]
      %v1717 = vld [vmem:[#allocation2 + $0x4e] sm:$0xff]
      %v1718 = vld [vmem:[#allocation2 + $0x56] sm:$0xff]
      %v1719 = vld [vmem:[#allocation2 + $0x5e] sm:$0xff]
      %v1720 = vld [vmem:[#allocation2 + $0x66] sm:$0xff]
      %v1721 = vld [vmem:[#allocation2 + $0x6e] sm:$0xff]
      %v1722 = vld [vmem:[#allocation2 + $0x76] sm:$0xff]
      %v1723 = vld [vmem:[#allocation2 + $0x7e] sm:$0xff]
      %v1724 = vld [vmem:[#allocation2 + $0x86] sm:$0xff]
      %v1725 = vld [vmem:[#allocation2 + $0x8e] sm:$0xff]
      %v1726 = vld [vmem:[#allocation2 + $0x96] sm:$0xff]
      %v1727 = vld [vmem:[#allocation2 + $0x9e] sm:$0xff]
      %v1728 = vld [vmem:[#allocation2 + $0xa6] sm:$0xff]
      %v1729 = vld [vmem:[#allocation2 + $0xae] sm:$0xff]
      %v1730 = vld [vmem:[#allocation2 + $0xb6] sm:$0xff]
      %v1731 = vld [vmem:[#allocation2 + $0xbe] sm:$0xff]
      %v1732 = vld [vmem:[#allocation2 + $0xc6] sm:$0xff]
      %v1733 = vld [vmem:[#allocation2 + $0xce] sm:$0xff]
      %v1734 = vld [vmem:[#allocation2 + $0xd6] sm:$0xff]
      %v1735 = vld [vmem:[#allocation2 + $0xde] sm:$0xff]
      %v1736 = vld [vmem:[#allocation2 + $0xe6] sm:$0xff]
      %v1737 = vld [vmem:[#allocation2 + $0xee] sm:$0xff]
      %v1738 = vld [vmem:[#allocation2 + $0xf6] sm:$0xff]
      %v1739 = vld [vmem:[#allocation2 + $0xfe] sm:$0xff]
      %v1740 = vld [vmem:[#allocation2 + $0x106] sm:$0xff]
      %v1741 = vld [vmem:[#allocation2 + $0x10e] sm:$0xff]
      %v1742 = vld [vmem:[#allocation2 + $0x116] sm:$0xff]
      %v1743 = vld [vmem:[#allocation2 + $0x11e] sm:$0xff]
      %v1744 = vld [vmem:[#allocation2 + $0x126] sm:$0xff]
      %v1745 = vpack.c.bf16 %v1710, %v1709
      %v1746 = vpack.c.bf16 %v1712, %v1711
      %v1747 = vpack.c.bf16 %v1714, %v1713
      %v1748 = vpack.c.bf16 %v1716, %v1715
      %v1749 = vpack.c.bf16 %v1718, %v1717
      %v1750 = vpack.c.bf16 %v1720, %v1719
      %v1751 = vpack.c.bf16 %v1722, %v1721
      %v1752 = vpack.c.bf16 %v1724, %v1723
      %v1753 = vpack.c.bf16 %v1726, %v1725
      %v1754 = vpack.c.bf16 %v1728, %v1727
      %v1755 = vpack.c.bf16 %v1730, %v1729
      %v1756 = vpack.c.bf16 %v1732, %v1731
      %v1757 = vpack.c.bf16 %v1734, %v1733
      %v1758 = vpack.c.bf16 %v1736, %v1735
      %v1759 = vpack.c.bf16 %v1738, %v1737
      %v1760 = vpack.c.bf16 %v1740, %v1739
      %v1761 = vpack.c.bf16 %v1742, %v1741
      %v1762 = vpack.c.bf16 %v1744, %v1743
      %s1763 = scalar_lea.vmem %s4, 64
      %v1764 = vld [vmem:[%s1763] sm:$0xf]
      %v1765 = vld [vmem:[%s1763 + $0x4] sm:$0xf]
      %v1766 = vld [vmem:[%s1763 + $0x8] sm:$0xf]
      %v1767 = vld [vmem:[%s1763 + $0xc] sm:$0xf]
      %v1768 = vld [vmem:[%s1763 + $0x10] sm:$0xf]
      %v1769 = vld [vmem:[%s1763 + $0x14] sm:$0xf]
      %v1770 = vld [vmem:[%s1763 + $0x18] sm:$0xf]
      %v1771 = vld [vmem:[%s1763 + $0x1c] sm:$0xf]
      %v1772 = vld [vmem:[%s1763 + $0x20] sm:$0xf]
      %v1773 = vld [vmem:[%s1763 + $0x24] sm:$0xf]
      %v1774 = vld [vmem:[%s1763 + $0x28] sm:$0xf]
      %v1775 = vld [vmem:[%s1763 + $0x2c] sm:$0xf]
      %v1776 = vld [vmem:[%s1763 + $0x30] sm:$0xf]
      %v1777 = vld [vmem:[%s1763 + $0x34] sm:$0xf]
      %v1778 = vld [vmem:[%s1763 + $0x38] sm:$0xf]
      %v1779 = vld [vmem:[%s1763 + $0x3c] sm:$0xf]
      %v1796 = vunpack.c.l.b16 %v1764
      %v1797 = vunpack.c.l.b16 %v1765
      %v1798 = vunpack.c.l.b16 %v1766
      %v1799 = vunpack.c.l.b16 %v1767
      %v1800 = vunpack.c.l.b16 %v1768
      %v1801 = vunpack.c.l.b16 %v1769
      %v1802 = vunpack.c.l.b16 %v1770
      %v1803 = vunpack.c.l.b16 %v1771
      %v1804 = vunpack.c.l.b16 %v1772
      %v1805 = vunpack.c.l.b16 %v1773
      %v1806 = vunpack.c.l.b16 %v1774
      %v1807 = vunpack.c.l.b16 %v1775
      %v1808 = vunpack.c.l.b16 %v1776
      %v1809 = vunpack.c.l.b16 %v1777
      %v1810 = vunpack.c.l.b16 %v1778
      %v1811 = vunpack.c.l.b16 %v1779
      %v1812 = vpack.c.b16 %v1797, %v1796
      %v1813 = vpack.c.b16 %v1799, %v1798
      %v1814 = vpack.c.b16 %v1801, %v1800
      %v1815 = vpack.c.b16 %v1803, %v1802
      %v1816 = vpack.c.b16 %v1805, %v1804
      %v1817 = vpack.c.b16 %v1807, %v1806
      %v1818 = vpack.c.b16 %v1809, %v1808
      %v1819 = vpack.c.b16 %v1811, %v1810
      %1828 = vmatprep.subr.bf16.mxu0 0
      %1829 = vmatpush1.bf16.msra.mxu0 %v1819
      %1830 = vmatprep.subr.bf16.mxu0 0
      %1831 = vmatpush1.bf16.msra.mxu0 %v1818
      %1832 = vmatprep.subr.bf16.mxu0 0
      %1833 = vmatpush1.bf16.msra.mxu0 %v1817
      %1834 = vmatprep.subr.bf16.mxu0 0
      %1835 = vmatpush1.bf16.msra.mxu0 %v1816
      %1836 = vmatprep.subr.bf16.mxu0 0
      %1837 = vmatpush1.bf16.msra.mxu0 %v1815
      %1838 = vmatprep.subr.bf16.mxu0 0
      %1839 = vmatpush1.bf16.msra.mxu0 %v1814
      %1840 = vmatprep.subr.bf16.mxu0 0
      %1841 = vmatpush1.bf16.msra.mxu0 %v1813
      %1842 = vmatprep.subr.bf16.mxu0 0
      %1843 = vmatpush1.bf16.msra.mxu0 %v1812
      %1844 = vmatprep.subr.bf16.mxu0 0
      %1845 = vmatpush2.bf16.msra.mxu0 0
      %1846 = vmatprep.subr.bf16.mxu0 0
      %1847 = vmatpush2.bf16.msra.mxu0 0
      %1848 = vmatprep.subr.bf16.mxu0 0
      %1849 = vmatpush2.bf16.msra.mxu0 0
      %1850 = vmatprep.subr.bf16.mxu0 0
      %1851 = vmatpush2.bf16.msra.mxu0 0
      %1852 = vmatprep.subr.bf16.mxu0 0
      %1853 = vmatpush2.bf16.msra.mxu0 0
      %1854 = vmatprep.subr.bf16.mxu0 0
      %1855 = vmatpush2.bf16.msra.mxu0 0
      %1856 = vmatprep.subr.bf16.mxu0 0
      %1857 = vmatpush2.bf16.msra.mxu0 0
      %1858 = vmatprep.subr.bf16.mxu0 0
      %1859 = vmatpush2.bf16.msra.mxu0 0
      %1860 = vmatprep.mubr.bf16.mxu0 0
      %1861 = vmatmul.mubr.bf16.gmra.mxu0 %v1745
      %v1862 = vpop.f32.mrf.mxu0
      %v1863 = vadd.f32 0.0, %v1862
      %v1864 = vpop.f32.mrf.mxu0
      %v1865 = vpop.f32.mrf.mxu0
      %v1866 = vadd.f32 0.0, %v1865
      %v1867 = vpop.f32.mrf.mxu0
      %1868 = vmatprep.mubr.bf16.mxu0 0
      %1869 = vmatmul.mubr.bf16.gmra.mxu0 %v1746
      %v1870 = vpop.f32.mrf.mxu0
      %v1871 = vadd.f32 0.0, %v1870
      %v1872 = vpop.f32.mrf.mxu0
      %v1873 = vpop.f32.mrf.mxu0
      %v1874 = vadd.f32 0.0, %v1873
      %v1875 = vpop.f32.mrf.mxu0
      %1876 = vmatprep.mubr.bf16.mxu0 0
      %1877 = vmatmul.mubr.bf16.gmra.mxu0 %v1747
      %v1878 = vpop.f32.mrf.mxu0
      %v1879 = vadd.f32 0.0, %v1878
      %v1880 = vpop.f32.mrf.mxu0
      %v1881 = vpop.f32.mrf.mxu0
      %v1882 = vadd.f32 0.0, %v1881
      %v1883 = vpop.f32.mrf.mxu0
      %1884 = vmatprep.mubr.bf16.mxu0 0
      %1885 = vmatmul.mubr.bf16.gmra.mxu0 %v1748
      %v1886 = vpop.f32.mrf.mxu0
      %v1887 = vadd.f32 0.0, %v1886
      %v1888 = vpop.f32.mrf.mxu0
      %v1889 = vpop.f32.mrf.mxu0
      %v1890 = vadd.f32 0.0, %v1889
      %v1891 = vpop.f32.mrf.mxu0
      %1892 = vmatprep.mubr.bf16.mxu0 0
      %1893 = vmatmul.mubr.bf16.gmra.mxu0 %v1749
      %v1894 = vpop.f32.mrf.mxu0
      %v1895 = vadd.f32 0.0, %v1894
      %v1896 = vpop.f32.mrf.mxu0
      %v1897 = vpop.f32.mrf.mxu0
      %v1898 = vadd.f32 0.0, %v1897
      %v1899 = vpop.f32.mrf.mxu0
      %1900 = vmatprep.mubr.bf16.mxu0 0
      %1901 = vmatmul.mubr.bf16.gmra.mxu0 %v1750
      %v1902 = vpop.f32.mrf.mxu0
      %v1903 = vadd.f32 0.0, %v1902
      %v1904 = vpop.f32.mrf.mxu0
      %v1905 = vpop.f32.mrf.mxu0
      %v1906 = vadd.f32 0.0, %v1905
      %v1907 = vpop.f32.mrf.mxu0
      %1908 = vmatprep.mubr.bf16.mxu0 0
      %1909 = vmatmul.mubr.bf16.gmra.mxu0 %v1751
      %v1910 = vpop.f32.mrf.mxu0
      %v1911 = vadd.f32 0.0, %v1910
      %v1912 = vpop.f32.mrf.mxu0
      %v1913 = vpop.f32.mrf.mxu0
      %v1914 = vadd.f32 0.0, %v1913
      %v1915 = vpop.f32.mrf.mxu0
      %1916 = vmatprep.mubr.bf16.mxu0 0
      %1917 = vmatmul.mubr.bf16.gmra.mxu0 %v1752
      %v1918 = vpop.f32.mrf.mxu0
      %v1919 = vadd.f32 0.0, %v1918
      %v1920 = vpop.f32.mrf.mxu0
      %v1921 = vpop.f32.mrf.mxu0
      %v1922 = vadd.f32 0.0, %v1921
      %v1923 = vpop.f32.mrf.mxu0
      %1924 = vmatprep.mubr.bf16.mxu0 0
      %1925 = vmatmul.mubr.bf16.gmra.mxu0 %v1753
      %v1926 = vpop.f32.mrf.mxu0
      %v1927 = vadd.f32 0.0, %v1926
      %v1928 = vpop.f32.mrf.mxu0
      %v1929 = vpop.f32.mrf.mxu0
      %v1930 = vadd.f32 0.0, %v1929
      %v1931 = vpop.f32.mrf.mxu0
      %1932 = vmatprep.mubr.bf16.mxu0 0
      %1933 = vmatmul.mubr.bf16.gmra.mxu0 %v1754
      %v1934 = vpop.f32.mrf.mxu0
      %v1935 = vadd.f32 0.0, %v1934
      %v1936 = vpop.f32.mrf.mxu0
      %v1937 = vpop.f32.mrf.mxu0
      %v1938 = vadd.f32 0.0, %v1937
      %v1939 = vpop.f32.mrf.mxu0
      %1940 = vmatprep.mubr.bf16.mxu0 0
      %1941 = vmatmul.mubr.bf16.gmra.mxu0 %v1755
      %v1942 = vpop.f32.mrf.mxu0
      %v1943 = vadd.f32 0.0, %v1942
      %v1944 = vpop.f32.mrf.mxu0
      %v1945 = vpop.f32.mrf.mxu0
      %v1946 = vadd.f32 0.0, %v1945
      %v1947 = vpop.f32.mrf.mxu0
      %1948 = vmatprep.mubr.bf16.mxu0 0
      %1949 = vmatmul.mubr.bf16.gmra.mxu0 %v1756
      %v1950 = vpop.f32.mrf.mxu0
      %v1951 = vadd.f32 0.0, %v1950
      %v1952 = vpop.f32.mrf.mxu0
      %v1953 = vpop.f32.mrf.mxu0
      %v1954 = vadd.f32 0.0, %v1953
      %v1955 = vpop.f32.mrf.mxu0
      %1956 = vmatprep.mubr.bf16.mxu0 0
      %1957 = vmatmul.mubr.bf16.gmra.mxu0 %v1757
      %v1958 = vpop.f32.mrf.mxu0
      %v1959 = vadd.f32 0.0, %v1958
      %v1960 = vpop.f32.mrf.mxu0
      %v1961 = vpop.f32.mrf.mxu0
      %v1962 = vadd.f32 0.0, %v1961
      %v1963 = vpop.f32.mrf.mxu0
      %1964 = vmatprep.mubr.bf16.mxu0 0
      %1965 = vmatmul.mubr.bf16.gmra.mxu0 %v1758
      %v1966 = vpop.f32.mrf.mxu0
      %v1967 = vadd.f32 0.0, %v1966
      %v1968 = vpop.f32.mrf.mxu0
      %v1969 = vpop.f32.mrf.mxu0
      %v1970 = vadd.f32 0.0, %v1969
      %v1971 = vpop.f32.mrf.mxu0
      %1972 = vmatprep.mubr.bf16.mxu0 0
      %1973 = vmatmul.mubr.bf16.gmra.mxu0 %v1759
      %v1974 = vpop.f32.mrf.mxu0
      %v1975 = vadd.f32 0.0, %v1974
      %v1976 = vpop.f32.mrf.mxu0
      %v1977 = vpop.f32.mrf.mxu0
      %v1978 = vadd.f32 0.0, %v1977
      %v1979 = vpop.f32.mrf.mxu0
      %1980 = vmatprep.mubr.bf16.mxu0 0
      %1981 = vmatmul.mubr.bf16.gmra.mxu0 %v1760
      %v1982 = vpop.f32.mrf.mxu0
      %v1983 = vadd.f32 0.0, %v1982
      %v1984 = vpop.f32.mrf.mxu0
      %v1985 = vpop.f32.mrf.mxu0
      %v1986 = vadd.f32 0.0, %v1985
      %v1987 = vpop.f32.mrf.mxu0
      %1988 = vmatprep.mubr.bf16.mxu0 0
      %1989 = vmatmul.mubr.bf16.gmra.mxu0 %v1761
      %v1990 = vpop.f32.mrf.mxu0
      %v1991 = vadd.f32 0.0, %v1990
      %v1992 = vpop.f32.mrf.mxu0
      %v1993 = vpop.f32.mrf.mxu0
      %v1994 = vadd.f32 0.0, %v1993
      %v1995 = vpop.f32.mrf.mxu0
      %1996 = vmatprep.mubr.bf16.mxu0 0
      %1997 = vmatmul.mubr.bf16.gmra.mxu0 %v1762
      %v1998 = vpop.f32.mrf.mxu0
      %v1999 = vadd.f32 0.0, %v1998
      %v2000 = vpop.f32.mrf.mxu0
      %v2001 = vpop.f32.mrf.mxu0
      %v2002 = vadd.f32 0.0, %v2001
      %v2003 = vpop.f32.mrf.mxu0
      %2004 = vdwg.mxu0
      %v2021 = vunpack.c.l.b16 %v1693
      %v2022 = vunpack.c.l.b16 %v1694
      %v2023 = vunpack.c.l.b16 %v1695
      %v2024 = vunpack.c.l.b16 %v1696
      %v2025 = vunpack.c.l.b16 %v1697
      %v2026 = vunpack.c.l.b16 %v1698
      %v2027 = vunpack.c.l.b16 %v1699
      %v2028 = vunpack.c.l.b16 %v1700
      %v2029 = vunpack.c.l.b16 %v1701
      %v2030 = vunpack.c.l.b16 %v1702
      %v2031 = vunpack.c.l.b16 %v1703
      %v2032 = vunpack.c.l.b16 %v1704
      %v2033 = vunpack.c.l.b16 %v1705
      %v2034 = vunpack.c.l.b16 %v1706
      %v2035 = vunpack.c.l.b16 %v1707
      %v2036 = vunpack.c.l.b16 %v1708
      %v2037 = vpack.c.b16 %v2022, %v2021
      %v2038 = vpack.c.b16 %v2024, %v2023
      %v2039 = vpack.c.b16 %v2026, %v2025
      %v2040 = vpack.c.b16 %v2028, %v2027
      %v2041 = vpack.c.b16 %v2030, %v2029
      %v2042 = vpack.c.b16 %v2032, %v2031
      %v2043 = vpack.c.b16 %v2034, %v2033
      %v2044 = vpack.c.b16 %v2036, %v2035
      %2053 = vmatprep.subr.bf16.mxu0 0
      %2054 = vmatpush1.bf16.msra.mxu0 %v2044
      %2055 = vmatprep.subr.bf16.mxu0 0
      %2056 = vmatpush1.bf16.msra.mxu0 %v2043
      %2057 = vmatprep.subr.bf16.mxu0 0
      %2058 = vmatpush1.bf16.msra.mxu0 %v2042
      %2059 = vmatprep.subr.bf16.mxu0 0
      %2060 = vmatpush1.bf16.msra.mxu0 %v2041
      %2061 = vmatprep.subr.bf16.mxu0 0
      %2062 = vmatpush1.bf16.msra.mxu0 %v2040
      %2063 = vmatprep.subr.bf16.mxu0 0
      %2064 = vmatpush1.bf16.msra.mxu0 %v2039
      %2065 = vmatprep.subr.bf16.mxu0 0
      %2066 = vmatpush1.bf16.msra.mxu0 %v2038
      %2067 = vmatprep.subr.bf16.mxu0 0
      %2068 = vmatpush1.bf16.msra.mxu0 %v2037
      %2069 = vmatprep.subr.bf16.mxu0 0
      %2070 = vmatpush2.bf16.msra.mxu0 0
      %2071 = vmatprep.subr.bf16.mxu0 0
      %2072 = vmatpush2.bf16.msra.mxu0 0
      %2073 = vmatprep.subr.bf16.mxu0 0
      %2074 = vmatpush2.bf16.msra.mxu0 0
      %2075 = vmatprep.subr.bf16.mxu0 0
      %2076 = vmatpush2.bf16.msra.mxu0 0
      %2077 = vmatprep.subr.bf16.mxu0 0
      %2078 = vmatpush2.bf16.msra.mxu0 0
      %2079 = vmatprep.subr.bf16.mxu0 0
      %2080 = vmatpush2.bf16.msra.mxu0 0
      %2081 = vmatprep.subr.bf16.mxu0 0
      %2082 = vmatpush2.bf16.msra.mxu0 0
      %2083 = vmatprep.subr.bf16.mxu0 0
      %2084 = vmatpush2.bf16.msra.mxu0 0
      %2085 = vmatprep.mubr.bf16.mxu0 0
      %2086 = vmatmul.mubr.bf16.gmra.mxu0 %v1675
      %v2087 = vpop.f32.mrf.mxu0
      %v2088 = vadd.f32 %v1863, %v2087
      %v2089 = vpop.f32.mrf.mxu0
      %v2090 = vpop.f32.mrf.mxu0
      %v2091 = vadd.f32 %v1866, %v2090
      %v2092 = vpop.f32.mrf.mxu0
      %2093 = vmatprep.mubr.bf16.mxu0 0
      %2094 = vmatmul.mubr.bf16.gmra.mxu0 %v1676
      %v2095 = vpop.f32.mrf.mxu0
      %v2096 = vadd.f32 %v1871, %v2095
      %v2097 = vpop.f32.mrf.mxu0
      %v2098 = vpop.f32.mrf.mxu0
      %v2099 = vadd.f32 %v1874, %v2098
      %v2100 = vpop.f32.mrf.mxu0
      %2101 = vmatprep.mubr.bf16.mxu0 0
      %2102 = vmatmul.mubr.bf16.gmra.mxu0 %v1677
      %v2103 = vpop.f32.mrf.mxu0
      %v2104 = vadd.f32 %v1879, %v2103
      %v2105 = vpop.f32.mrf.mxu0
      %v2106 = vpop.f32.mrf.mxu0
      %v2107 = vadd.f32 %v1882, %v2106
      %v2108 = vpop.f32.mrf.mxu0
      %2109 = vmatprep.mubr.bf16.mxu0 0
      %2110 = vmatmul.mubr.bf16.gmra.mxu0 %v1678
      %v2111 = vpop.f32.mrf.mxu0
      %v2112 = vadd.f32 %v1887, %v2111
      %v2113 = vpop.f32.mrf.mxu0
      %v2114 = vpop.f32.mrf.mxu0
      %v2115 = vadd.f32 %v1890, %v2114
      %v2116 = vpop.f32.mrf.mxu0
      %2117 = vmatprep.mubr.bf16.mxu0 0
      %2118 = vmatmul.mubr.bf16.gmra.mxu0 %v1679
      %v2119 = vpop.f32.mrf.mxu0
      %v2120 = vadd.f32 %v1895, %v2119
      %v2121 = vpop.f32.mrf.mxu0
      %v2122 = vpop.f32.mrf.mxu0
      %v2123 = vadd.f32 %v1898, %v2122
      %v2124 = vpop.f32.mrf.mxu0
      %2125 = vmatprep.mubr.bf16.mxu0 0
      %2126 = vmatmul.mubr.bf16.gmra.mxu0 %v1680
      %v2127 = vpop.f32.mrf.mxu0
      %v2128 = vadd.f32 %v1903, %v2127
      %v2129 = vpop.f32.mrf.mxu0
      %v2130 = vpop.f32.mrf.mxu0
      %v2131 = vadd.f32 %v1906, %v2130
      %v2132 = vpop.f32.mrf.mxu0
      %2133 = vmatprep.mubr.bf16.mxu0 0
      %2134 = vmatmul.mubr.bf16.gmra.mxu0 %v1681
      %v2135 = vpop.f32.mrf.mxu0
      %v2136 = vadd.f32 %v1911, %v2135
      %v2137 = vpop.f32.mrf.mxu0
      %v2138 = vpop.f32.mrf.mxu0
      %v2139 = vadd.f32 %v1914, %v2138
      %v2140 = vpop.f32.mrf.mxu0
      %2141 = vmatprep.mubr.bf16.mxu0 0
      %2142 = vmatmul.mubr.bf16.gmra.mxu0 %v1682
      %v2143 = vpop.f32.mrf.mxu0
      %v2144 = vadd.f32 %v1919, %v2143
      %v2145 = vpop.f32.mrf.mxu0
      %v2146 = vpop.f32.mrf.mxu0
      %v2147 = vadd.f32 %v1922, %v2146
      %v2148 = vpop.f32.mrf.mxu0
      %2149 = vmatprep.mubr.bf16.mxu0 0
      %2150 = vmatmul.mubr.bf16.gmra.mxu0 %v1683
      %v2151 = vpop.f32.mrf.mxu0
      %v2152 = vadd.f32 %v1927, %v2151
      %v2153 = vpop.f32.mrf.mxu0
      %v2154 = vpop.f32.mrf.mxu0
      %v2155 = vadd.f32 %v1930, %v2154
      %v2156 = vpop.f32.mrf.mxu0
      %2157 = vmatprep.mubr.bf16.mxu0 0
      %2158 = vmatmul.mubr.bf16.gmra.mxu0 %v1684
      %v2159 = vpop.f32.mrf.mxu0
      %v2160 = vadd.f32 %v1935, %v2159
      %v2161 = vpop.f32.mrf.mxu0
      %v2162 = vpop.f32.mrf.mxu0
      %v2163 = vadd.f32 %v1938, %v2162
      %v2164 = vpop.f32.mrf.mxu0
      %2165 = vmatprep.mubr.bf16.mxu0 0
      %2166 = vmatmul.mubr.bf16.gmra.mxu0 %v1685
      %v2167 = vpop.f32.mrf.mxu0
      %v2168 = vadd.f32 %v1943, %v2167
      %v2169 = vpop.f32.mrf.mxu0
      %v2170 = vpop.f32.mrf.mxu0
      %v2171 = vadd.f32 %v1946, %v2170
      %v2172 = vpop.f32.mrf.mxu0
      %2173 = vmatprep.mubr.bf16.mxu0 0
      %2174 = vmatmul.mubr.bf16.gmra.mxu0 %v1686
      %v2175 = vpop.f32.mrf.mxu0
      %v2176 = vadd.f32 %v1951, %v2175
      %v2177 = vpop.f32.mrf.mxu0
      %v2178 = vpop.f32.mrf.mxu0
      %v2179 = vadd.f32 %v1954, %v2178
      %v2180 = vpop.f32.mrf.mxu0
      %2181 = vmatprep.mubr.bf16.mxu0 0
      %2182 = vmatmul.mubr.bf16.gmra.mxu0 %v1687
      %v2183 = vpop.f32.mrf.mxu0
      %v2184 = vadd.f32 %v1959, %v2183
      %v2185 = vpop.f32.mrf.mxu0
      %v2186 = vpop.f32.mrf.mxu0
      %v2187 = vadd.f32 %v1962, %v2186
      %v2188 = vpop.f32.mrf.mxu0
      %2189 = vmatprep.mubr.bf16.mxu0 0
      %2190 = vmatmul.mubr.bf16.gmra.mxu0 %v1688
      %v2191 = vpop.f32.mrf.mxu0
      %v2192 = vadd.f32 %v1967, %v2191
      %v2193 = vpop.f32.mrf.mxu0
      %v2194 = vpop.f32.mrf.mxu0
      %v2195 = vadd.f32 %v1970, %v2194
      %v2196 = vpop.f32.mrf.mxu0
      %2197 = vmatprep.mubr.bf16.mxu0 0
      %2198 = vmatmul.mubr.bf16.gmra.mxu0 %v1689
      %v2199 = vpop.f32.mrf.mxu0
      %v2200 = vadd.f32 %v1975, %v2199
      %v2201 = vpop.f32.mrf.mxu0
      %v2202 = vpop.f32.mrf.mxu0
      %v2203 = vadd.f32 %v1978, %v2202
      %v2204 = vpop.f32.mrf.mxu0
      %2205 = vmatprep.mubr.bf16.mxu0 0
      %2206 = vmatmul.mubr.bf16.gmra.mxu0 %v1690
      %v2207 = vpop.f32.mrf.mxu0
      %v2208 = vadd.f32 %v1983, %v2207
      %v2209 = vpop.f32.mrf.mxu0
      %v2210 = vpop.f32.mrf.mxu0
      %v2211 = vadd.f32 %v1986, %v2210
      %v2212 = vpop.f32.mrf.mxu0
      %2213 = vmatprep.mubr.bf16.mxu0 0
      %2214 = vmatmul.mubr.bf16.gmra.mxu0 %v1691
      %v2215 = vpop.f32.mrf.mxu0
      %v2216 = vadd.f32 %v1991, %v2215
      %v2217 = vpop.f32.mrf.mxu0
      %v2218 = vpop.f32.mrf.mxu0
      %v2219 = vadd.f32 %v1994, %v2218
      %v2220 = vpop.f32.mrf.mxu0
      %2221 = vmatprep.mubr.bf16.mxu0 0
      %2222 = vmatmul.mubr.bf16.gmra.mxu0 %v1692
      %v2223 = vpop.f32.mrf.mxu0
      %v2224 = vadd.f32 %v1999, %v2223
      %v2225 = vpop.f32.mrf.mxu0
      %v2226 = vpop.f32.mrf.mxu0
      %v2227 = vadd.f32 %v2002, %v2226
      %v2228 = vpop.f32.mrf.mxu0
      %2229 = vdwg.mxu0
      %v2230 = vld [vmem:[#allocation2 + $0xf] sm:$0xff]
      %v2231 = vld [vmem:[#allocation2 + $0x17] sm:$0xff]
      %v2232 = vld [vmem:[#allocation2 + $0x1f] sm:$0xff]
      %v2233 = vld [vmem:[#allocation2 + $0x27] sm:$0xff]
      %v2234 = vld [vmem:[#allocation2 + $0x2f] sm:$0xff]
      %v2235 = vld [vmem:[#allocation2 + $0x37] sm:$0xff]
      %v2236 = vld [vmem:[#allocation2 + $0x3f] sm:$0xff]
      %v2237 = vld [vmem:[#allocation2 + $0x47] sm:$0xff]
      %v2238 = vld [vmem:[#allocation2 + $0x4f] sm:$0xff]
      %v2239 = vld [vmem:[#allocation2 + $0x57] sm:$0xff]
      %v2240 = vld [vmem:[#allocation2 + $0x5f] sm:$0xff]
      %v2241 = vld [vmem:[#allocation2 + $0x67] sm:$0xff]
      %v2242 = vld [vmem:[#allocation2 + $0x6f] sm:$0xff]
      %v2243 = vld [vmem:[#allocation2 + $0x77] sm:$0xff]
      %v2244 = vld [vmem:[#allocation2 + $0x7f] sm:$0xff]
      %v2245 = vld [vmem:[#allocation2 + $0x87] sm:$0xff]
      %v2246 = vld [vmem:[#allocation2 + $0x8f] sm:$0xff]
      %v2247 = vld [vmem:[#allocation2 + $0x97] sm:$0xff]
      %v2248 = vld [vmem:[#allocation2 + $0x9f] sm:$0xff]
      %v2249 = vld [vmem:[#allocation2 + $0xa7] sm:$0xff]
      %v2250 = vld [vmem:[#allocation2 + $0xaf] sm:$0xff]
      %v2251 = vld [vmem:[#allocation2 + $0xb7] sm:$0xff]
      %v2252 = vld [vmem:[#allocation2 + $0xbf] sm:$0xff]
      %v2253 = vld [vmem:[#allocation2 + $0xc7] sm:$0xff]
      %v2254 = vld [vmem:[#allocation2 + $0xcf] sm:$0xff]
      %v2255 = vld [vmem:[#allocation2 + $0xd7] sm:$0xff]
      %v2256 = vld [vmem:[#allocation2 + $0xdf] sm:$0xff]
      %v2257 = vld [vmem:[#allocation2 + $0xe7] sm:$0xff]
      %v2258 = vld [vmem:[#allocation2 + $0xef] sm:$0xff]
      %v2259 = vld [vmem:[#allocation2 + $0xf7] sm:$0xff]
      %v2260 = vld [vmem:[#allocation2 + $0xff] sm:$0xff]
      %v2261 = vld [vmem:[#allocation2 + $0x107] sm:$0xff]
      %v2262 = vld [vmem:[#allocation2 + $0x10f] sm:$0xff]
      %v2263 = vld [vmem:[#allocation2 + $0x117] sm:$0xff]
      %v2264 = vld [vmem:[#allocation2 + $0x11f] sm:$0xff]
      %v2265 = vld [vmem:[#allocation2 + $0x127] sm:$0xff]
      %v2266 = vpack.c.bf16 %v2231, %v2230
      %v2267 = vpack.c.bf16 %v2233, %v2232
      %v2268 = vpack.c.bf16 %v2235, %v2234
      %v2269 = vpack.c.bf16 %v2237, %v2236
      %v2270 = vpack.c.bf16 %v2239, %v2238
      %v2271 = vpack.c.bf16 %v2241, %v2240
      %v2272 = vpack.c.bf16 %v2243, %v2242
      %v2273 = vpack.c.bf16 %v2245, %v2244
      %v2274 = vpack.c.bf16 %v2247, %v2246
      %v2275 = vpack.c.bf16 %v2249, %v2248
      %v2276 = vpack.c.bf16 %v2251, %v2250
      %v2277 = vpack.c.bf16 %v2253, %v2252
      %v2278 = vpack.c.bf16 %v2255, %v2254
      %v2279 = vpack.c.bf16 %v2257, %v2256
      %v2280 = vpack.c.bf16 %v2259, %v2258
      %v2281 = vpack.c.bf16 %v2261, %v2260
      %v2282 = vpack.c.bf16 %v2263, %v2262
      %v2283 = vpack.c.bf16 %v2265, %v2264
      %s2284 = scalar_lea.vmem %s4, 128
      %v2285 = vld [vmem:[%s2284] sm:$0xf]
      %v2286 = vld [vmem:[%s2284 + $0x4] sm:$0xf]
      %v2287 = vld [vmem:[%s2284 + $0x8] sm:$0xf]
      %v2288 = vld [vmem:[%s2284 + $0xc] sm:$0xf]
      %v2289 = vld [vmem:[%s2284 + $0x10] sm:$0xf]
      %v2290 = vld [vmem:[%s2284 + $0x14] sm:$0xf]
      %v2291 = vld [vmem:[%s2284 + $0x18] sm:$0xf]
      %v2292 = vld [vmem:[%s2284 + $0x1c] sm:$0xf]
      %v2293 = vld [vmem:[%s2284 + $0x20] sm:$0xf]
      %v2294 = vld [vmem:[%s2284 + $0x24] sm:$0xf]
      %v2295 = vld [vmem:[%s2284 + $0x28] sm:$0xf]
      %v2296 = vld [vmem:[%s2284 + $0x2c] sm:$0xf]
      %v2297 = vld [vmem:[%s2284 + $0x30] sm:$0xf]
      %v2298 = vld [vmem:[%s2284 + $0x34] sm:$0xf]
      %v2299 = vld [vmem:[%s2284 + $0x38] sm:$0xf]
      %v2300 = vld [vmem:[%s2284 + $0x3c] sm:$0xf]
      %v2317 = vunpack.c.l.b16 %v2285
      %v2318 = vunpack.c.l.b16 %v2286
      %v2319 = vunpack.c.l.b16 %v2287
      %v2320 = vunpack.c.l.b16 %v2288
      %v2321 = vunpack.c.l.b16 %v2289
      %v2322 = vunpack.c.l.b16 %v2290
      %v2323 = vunpack.c.l.b16 %v2291
      %v2324 = vunpack.c.l.b16 %v2292
      %v2325 = vunpack.c.l.b16 %v2293
      %v2326 = vunpack.c.l.b16 %v2294
      %v2327 = vunpack.c.l.b16 %v2295
      %v2328 = vunpack.c.l.b16 %v2296
      %v2329 = vunpack.c.l.b16 %v2297
      %v2330 = vunpack.c.l.b16 %v2298
      %v2331 = vunpack.c.l.b16 %v2299
      %v2332 = vunpack.c.l.b16 %v2300
      %v2333 = vpack.c.b16 %v2318, %v2317
      %v2334 = vpack.c.b16 %v2320, %v2319
      %v2335 = vpack.c.b16 %v2322, %v2321
      %v2336 = vpack.c.b16 %v2324, %v2323
      %v2337 = vpack.c.b16 %v2326, %v2325
      %v2338 = vpack.c.b16 %v2328, %v2327
      %v2339 = vpack.c.b16 %v2330, %v2329
      %v2340 = vpack.c.b16 %v2332, %v2331
      %2349 = vmatprep.subr.bf16.mxu0 0
      %2350 = vmatpush1.bf16.msra.mxu0 %v2340
      %2351 = vmatprep.subr.bf16.mxu0 0
      %2352 = vmatpush1.bf16.msra.mxu0 %v2339
      %2353 = vmatprep.subr.bf16.mxu0 0
      %2354 = vmatpush1.bf16.msra.mxu0 %v2338
      %2355 = vmatprep.subr.bf16.mxu0 0
      %2356 = vmatpush1.bf16.msra.mxu0 %v2337
      %2357 = vmatprep.subr.bf16.mxu0 0
      %2358 = vmatpush1.bf16.msra.mxu0 %v2336
      %2359 = vmatprep.subr.bf16.mxu0 0
      %2360 = vmatpush1.bf16.msra.mxu0 %v2335
      %2361 = vmatprep.subr.bf16.mxu0 0
      %2362 = vmatpush1.bf16.msra.mxu0 %v2334
      %2363 = vmatprep.subr.bf16.mxu0 0
      %2364 = vmatpush1.bf16.msra.mxu0 %v2333
      %2365 = vmatprep.subr.bf16.mxu0 0
      %2366 = vmatpush2.bf16.msra.mxu0 0
      %2367 = vmatprep.subr.bf16.mxu0 0
      %2368 = vmatpush2.bf16.msra.mxu0 0
      %2369 = vmatprep.subr.bf16.mxu0 0
      %2370 = vmatpush2.bf16.msra.mxu0 0
      %2371 = vmatprep.subr.bf16.mxu0 0
      %2372 = vmatpush2.bf16.msra.mxu0 0
      %2373 = vmatprep.subr.bf16.mxu0 0
      %2374 = vmatpush2.bf16.msra.mxu0 0
      %2375 = vmatprep.subr.bf16.mxu0 0
      %2376 = vmatpush2.bf16.msra.mxu0 0
      %2377 = vmatprep.subr.bf16.mxu0 0
      %2378 = vmatpush2.bf16.msra.mxu0 0
      %2379 = vmatprep.subr.bf16.mxu0 0
      %2380 = vmatpush2.bf16.msra.mxu0 0
      %2381 = vmatprep.mubr.bf16.mxu0 0
      %2382 = vmatmul.mubr.bf16.gmra.mxu0 %v2266
      %v2383 = vpop.f32.mrf.mxu0
      %v2384 = vadd.f32 0.0, %v2383
      %v2385 = vpop.f32.mrf.mxu0
      %v2386 = vpop.f32.mrf.mxu0
      %v2387 = vadd.f32 0.0, %v2386
      %v2388 = vpop.f32.mrf.mxu0
      %2389 = vmatprep.mubr.bf16.mxu0 0
      %2390 = vmatmul.mubr.bf16.gmra.mxu0 %v2267
      %v2391 = vpop.f32.mrf.mxu0
      %v2392 = vadd.f32 0.0, %v2391
      %v2393 = vpop.f32.mrf.mxu0
      %v2394 = vpop.f32.mrf.mxu0
      %v2395 = vadd.f32 0.0, %v2394
      %v2396 = vpop.f32.mrf.mxu0
      %2397 = vmatprep.mubr.bf16.mxu0 0
      %2398 = vmatmul.mubr.bf16.gmra.mxu0 %v2268
      %v2399 = vpop.f32.mrf.mxu0
      %v2400 = vadd.f32 0.0, %v2399
      %v2401 = vpop.f32.mrf.mxu0
      %v2402 = vpop.f32.mrf.mxu0
      %v2403 = vadd.f32 0.0, %v2402
      %v2404 = vpop.f32.mrf.mxu0
      %2405 = vmatprep.mubr.bf16.mxu0 0
      %2406 = vmatmul.mubr.bf16.gmra.mxu0 %v2269
      %v2407 = vpop.f32.mrf.mxu0
      %v2408 = vadd.f32 0.0, %v2407
      %v2409 = vpop.f32.mrf.mxu0
      %v2410 = vpop.f32.mrf.mxu0
      %v2411 = vadd.f32 0.0, %v2410
      %v2412 = vpop.f32.mrf.mxu0
      %2413 = vmatprep.mubr.bf16.mxu0 0
      %2414 = vmatmul.mubr.bf16.gmra.mxu0 %v2270
      %v2415 = vpop.f32.mrf.mxu0
      %v2416 = vadd.f32 0.0, %v2415
      %v2417 = vpop.f32.mrf.mxu0
      %v2418 = vpop.f32.mrf.mxu0
      %v2419 = vadd.f32 0.0, %v2418
      %v2420 = vpop.f32.mrf.mxu0
      %2421 = vmatprep.mubr.bf16.mxu0 0
      %2422 = vmatmul.mubr.bf16.gmra.mxu0 %v2271
      %v2423 = vpop.f32.mrf.mxu0
      %v2424 = vadd.f32 0.0, %v2423
      %v2425 = vpop.f32.mrf.mxu0
      %v2426 = vpop.f32.mrf.mxu0
      %v2427 = vadd.f32 0.0, %v2426
      %v2428 = vpop.f32.mrf.mxu0
      %2429 = vmatprep.mubr.bf16.mxu0 0
      %2430 = vmatmul.mubr.bf16.gmra.mxu0 %v2272
      %v2431 = vpop.f32.mrf.mxu0
      %v2432 = vadd.f32 0.0, %v2431
      %v2433 = vpop.f32.mrf.mxu0
      %v2434 = vpop.f32.mrf.mxu0
      %v2435 = vadd.f32 0.0, %v2434
      %v2436 = vpop.f32.mrf.mxu0
      %2437 = vmatprep.mubr.bf16.mxu0 0
      %2438 = vmatmul.mubr.bf16.gmra.mxu0 %v2273
      %v2439 = vpop.f32.mrf.mxu0
      %v2440 = vadd.f32 0.0, %v2439
      %v2441 = vpop.f32.mrf.mxu0
      %v2442 = vpop.f32.mrf.mxu0
      %v2443 = vadd.f32 0.0, %v2442
      %v2444 = vpop.f32.mrf.mxu0
      %2445 = vmatprep.mubr.bf16.mxu0 0
      %2446 = vmatmul.mubr.bf16.gmra.mxu0 %v2274
      %v2447 = vpop.f32.mrf.mxu0
      %v2448 = vadd.f32 0.0, %v2447
      %v2449 = vpop.f32.mrf.mxu0
      %v2450 = vpop.f32.mrf.mxu0
      %v2451 = vadd.f32 0.0, %v2450
      %v2452 = vpop.f32.mrf.mxu0
      %2453 = vmatprep.mubr.bf16.mxu0 0
      %2454 = vmatmul.mubr.bf16.gmra.mxu0 %v2275
      %v2455 = vpop.f32.mrf.mxu0
      %v2456 = vadd.f32 0.0, %v2455
      %v2457 = vpop.f32.mrf.mxu0
      %v2458 = vpop.f32.mrf.mxu0
      %v2459 = vadd.f32 0.0, %v2458
      %v2460 = vpop.f32.mrf.mxu0
      %2461 = vmatprep.mubr.bf16.mxu0 0
      %2462 = vmatmul.mubr.bf16.gmra.mxu0 %v2276
      %v2463 = vpop.f32.mrf.mxu0
      %v2464 = vadd.f32 0.0, %v2463
      %v2465 = vpop.f32.mrf.mxu0
      %v2466 = vpop.f32.mrf.mxu0
      %v2467 = vadd.f32 0.0, %v2466
      %v2468 = vpop.f32.mrf.mxu0
      %2469 = vmatprep.mubr.bf16.mxu0 0
      %2470 = vmatmul.mubr.bf16.gmra.mxu0 %v2277
      %v2471 = vpop.f32.mrf.mxu0
      %v2472 = vadd.f32 0.0, %v2471
      %v2473 = vpop.f32.mrf.mxu0
      %v2474 = vpop.f32.mrf.mxu0
      %v2475 = vadd.f32 0.0, %v2474
      %v2476 = vpop.f32.mrf.mxu0
      %2477 = vmatprep.mubr.bf16.mxu0 0
      %2478 = vmatmul.mubr.bf16.gmra.mxu0 %v2278
      %v2479 = vpop.f32.mrf.mxu0
      %v2480 = vadd.f32 0.0, %v2479
      %v2481 = vpop.f32.mrf.mxu0
      %v2482 = vpop.f32.mrf.mxu0
      %v2483 = vadd.f32 0.0, %v2482
      %v2484 = vpop.f32.mrf.mxu0
      %2485 = vmatprep.mubr.bf16.mxu0 0
      %2486 = vmatmul.mubr.bf16.gmra.mxu0 %v2279
      %v2487 = vpop.f32.mrf.mxu0
      %v2488 = vadd.f32 0.0, %v2487
      %v2489 = vpop.f32.mrf.mxu0
      %v2490 = vpop.f32.mrf.mxu0
      %v2491 = vadd.f32 0.0, %v2490
      %v2492 = vpop.f32.mrf.mxu0
      %2493 = vmatprep.mubr.bf16.mxu0 0
      %2494 = vmatmul.mubr.bf16.gmra.mxu0 %v2280
      %v2495 = vpop.f32.mrf.mxu0
      %v2496 = vadd.f32 0.0, %v2495
      %v2497 = vpop.f32.mrf.mxu0
      %v2498 = vpop.f32.mrf.mxu0
      %v2499 = vadd.f32 0.0, %v2498
      %v2500 = vpop.f32.mrf.mxu0
      %2501 = vmatprep.mubr.bf16.mxu0 0
      %2502 = vmatmul.mubr.bf16.gmra.mxu0 %v2281
      %v2503 = vpop.f32.mrf.mxu0
      %v2504 = vadd.f32 0.0, %v2503
      %v2505 = vpop.f32.mrf.mxu0
      %v2506 = vpop.f32.mrf.mxu0
      %v2507 = vadd.f32 0.0, %v2506
      %v2508 = vpop.f32.mrf.mxu0
      %2509 = vmatprep.mubr.bf16.mxu0 0
      %2510 = vmatmul.mubr.bf16.gmra.mxu0 %v2282
      %v2511 = vpop.f32.mrf.mxu0
      %v2512 = vadd.f32 0.0, %v2511
      %v2513 = vpop.f32.mrf.mxu0
      %v2514 = vpop.f32.mrf.mxu0
      %v2515 = vadd.f32 0.0, %v2514
      %v2516 = vpop.f32.mrf.mxu0
      %2517 = vmatprep.mubr.bf16.mxu0 0
      %2518 = vmatmul.mubr.bf16.gmra.mxu0 %v2283
      %v2519 = vpop.f32.mrf.mxu0
      %v2520 = vadd.f32 0.0, %v2519
      %v2521 = vpop.f32.mrf.mxu0
      %v2522 = vpop.f32.mrf.mxu0
      %v2523 = vadd.f32 0.0, %v2522
      %v2524 = vpop.f32.mrf.mxu0
      %2525 = vdwg.mxu0
      %v2526 = vadd.f32 %v2088, %v2384
      %v2527 = vadd.f32 %v2091, %v2387
      %v2528 = vadd.f32 %v2096, %v2392
      %v2529 = vadd.f32 %v2099, %v2395
      %v2530 = vadd.f32 %v2104, %v2400
      %v2531 = vadd.f32 %v2107, %v2403
      %v2532 = vadd.f32 %v2112, %v2408
      %v2533 = vadd.f32 %v2115, %v2411
      %v2534 = vadd.f32 %v2120, %v2416
      %v2535 = vadd.f32 %v2123, %v2419
      %v2536 = vadd.f32 %v2128, %v2424
      %v2537 = vadd.f32 %v2131, %v2427
      %v2538 = vadd.f32 %v2136, %v2432
      %v2539 = vadd.f32 %v2139, %v2435
      %v2540 = vadd.f32 %v2144, %v2440
      %v2541 = vadd.f32 %v2147, %v2443
      %v2542 = vadd.f32 %v2152, %v2448
      %v2543 = vadd.f32 %v2155, %v2451
      %v2544 = vadd.f32 %v2160, %v2456
      %v2545 = vadd.f32 %v2163, %v2459
      %v2546 = vadd.f32 %v2168, %v2464
      %v2547 = vadd.f32 %v2171, %v2467
      %v2548 = vadd.f32 %v2176, %v2472
      %v2549 = vadd.f32 %v2179, %v2475
      %v2550 = vadd.f32 %v2184, %v2480
      %v2551 = vadd.f32 %v2187, %v2483
      %v2552 = vadd.f32 %v2192, %v2488
      %v2553 = vadd.f32 %v2195, %v2491
      %v2554 = vadd.f32 %v2200, %v2496
      %v2555 = vadd.f32 %v2203, %v2499
      %v2556 = vadd.f32 %v2208, %v2504
      %v2557 = vadd.f32 %v2211, %v2507
      %v2558 = vadd.f32 %v2216, %v2512
      %v2559 = vadd.f32 %v2219, %v2515
      %v2560 = vadd.f32 %v2224, %v2520
      %v2561 = vadd.f32 %v2227, %v2523
      %v2562 = vld [vmem:[#allocation2 + $0x1f] sm:$0xff]
      %v2563 = vld [vmem:[#allocation2 + $0x27] sm:$0xff]
      %v2564 = vld [vmem:[#allocation2 + $0x2f] sm:$0xff]
      %v2565 = vld [vmem:[#allocation2 + $0x37] sm:$0xff]
      %v2566 = vld [vmem:[#allocation2 + $0x3f] sm:$0xff]
      %v2567 = vld [vmem:[#allocation2 + $0x47] sm:$0xff]
      %v2568 = vld [vmem:[#allocation2 + $0x4f] sm:$0xff]
      %v2569 = vld [vmem:[#allocation2 + $0x57] sm:$0xff]
      %v2570 = vld [vmem:[#allocation2 + $0x5f] sm:$0xff]
      %v2571 = vld [vmem:[#allocation2 + $0x67] sm:$0xff]
      %v2572 = vld [vmem:[#allocation2 + $0x6f] sm:$0xff]
      %v2573 = vld [vmem:[#allocation2 + $0x77] sm:$0xff]
      %v2574 = vld [vmem:[#allocation2 + $0x7f] sm:$0xff]
      %v2575 = vld [vmem:[#allocation2 + $0x87] sm:$0xff]
      %v2576 = vld [vmem:[#allocation2 + $0x8f] sm:$0xff]
      %v2577 = vld [vmem:[#allocation2 + $0x97] sm:$0xff]
      %v2578 = vld [vmem:[#allocation2 + $0x9f] sm:$0xff]
      %v2579 = vld [vmem:[#allocation2 + $0xa7] sm:$0xff]
      %v2580 = vld [vmem:[#allocation2 + $0xaf] sm:$0xff]
      %v2581 = vld [vmem:[#allocation2 + $0xb7] sm:$0xff]
      %v2582 = vld [vmem:[#allocation2 + $0xbf] sm:$0xff]
      %v2583 = vld [vmem:[#allocation2 + $0xc7] sm:$0xff]
      %v2584 = vld [vmem:[#allocation2 + $0xcf] sm:$0xff]
      %v2585 = vld [vmem:[#allocation2 + $0xd7] sm:$0xff]
      %v2586 = vld [vmem:[#allocation2 + $0xdf] sm:$0xff]
      %v2587 = vld [vmem:[#allocation2 + $0xe7] sm:$0xff]
      %v2588 = vld [vmem:[#allocation2 + $0xef] sm:$0xff]
      %v2589 = vld [vmem:[#allocation2 + $0xf7] sm:$0xff]
      %v2590 = vld [vmem:[#allocation2 + $0xff] sm:$0xff]
      %v2591 = vld [vmem:[#allocation2 + $0x107] sm:$0xff]
      %v2592 = vld [vmem:[#allocation2 + $0x10f] sm:$0xff]
      %v2593 = vld [vmem:[#allocation2 + $0x117] sm:$0xff]
      %v2594 = vld [vmem:[#allocation2 + $0x11f] sm:$0xff]
      %v2595 = vld [vmem:[#allocation2 + $0x127] sm:$0xff]
      %v2596 = vld [vmem:[#allocation2 + $0x12f] sm:$0xff]
      %v2597 = vld [vmem:[#allocation2 + $0x137] sm:$0xff]
      %v2598 = vpack.c.bf16 %v2563, %v2562
      %v2599 = vpack.c.bf16 %v2565, %v2564
      %v2600 = vpack.c.bf16 %v2567, %v2566
      %v2601 = vpack.c.bf16 %v2569, %v2568
      %v2602 = vpack.c.bf16 %v2571, %v2570
      %v2603 = vpack.c.bf16 %v2573, %v2572
      %v2604 = vpack.c.bf16 %v2575, %v2574
      %v2605 = vpack.c.bf16 %v2577, %v2576
      %v2606 = vpack.c.bf16 %v2579, %v2578
      %v2607 = vpack.c.bf16 %v2581, %v2580
      %v2608 = vpack.c.bf16 %v2583, %v2582
      %v2609 = vpack.c.bf16 %v2585, %v2584
      %v2610 = vpack.c.bf16 %v2587, %v2586
      %v2611 = vpack.c.bf16 %v2589, %v2588
      %v2612 = vpack.c.bf16 %v2591, %v2590
      %v2613 = vpack.c.bf16 %v2593, %v2592
      %v2614 = vpack.c.bf16 %v2595, %v2594
      %v2615 = vpack.c.bf16 %v2597, %v2596
      %s2616 = scalar_lea.vmem %s4, 192
      %v2617 = vld [vmem:[%s2616] sm:$0xf]
      %v2618 = vld [vmem:[%s2616 + $0x4] sm:$0xf]
      %v2619 = vld [vmem:[%s2616 + $0x8] sm:$0xf]
      %v2620 = vld [vmem:[%s2616 + $0xc] sm:$0xf]
      %v2621 = vld [vmem:[%s2616 + $0x10] sm:$0xf]
      %v2622 = vld [vmem:[%s2616 + $0x14] sm:$0xf]
      %v2623 = vld [vmem:[%s2616 + $0x18] sm:$0xf]
      %v2624 = vld [vmem:[%s2616 + $0x1c] sm:$0xf]
      %v2625 = vld [vmem:[%s2616 + $0x20] sm:$0xf]
      %v2626 = vld [vmem:[%s2616 + $0x24] sm:$0xf]
      %v2627 = vld [vmem:[%s2616 + $0x28] sm:$0xf]
      %v2628 = vld [vmem:[%s2616 + $0x2c] sm:$0xf]
      %v2629 = vld [vmem:[%s2616 + $0x30] sm:$0xf]
      %v2630 = vld [vmem:[%s2616 + $0x34] sm:$0xf]
      %v2631 = vld [vmem:[%s2616 + $0x38] sm:$0xf]
      %v2632 = vld [vmem:[%s2616 + $0x3c] sm:$0xf]
      %v2649 = vunpack.c.l.b16 %v2617
      %v2650 = vunpack.c.l.b16 %v2618
      %v2651 = vunpack.c.l.b16 %v2619
      %v2652 = vunpack.c.l.b16 %v2620
      %v2653 = vunpack.c.l.b16 %v2621
      %v2654 = vunpack.c.l.b16 %v2622
      %v2655 = vunpack.c.l.b16 %v2623
      %v2656 = vunpack.c.l.b16 %v2624
      %v2657 = vunpack.c.l.b16 %v2625
      %v2658 = vunpack.c.l.b16 %v2626
      %v2659 = vunpack.c.l.b16 %v2627
      %v2660 = vunpack.c.l.b16 %v2628
      %v2661 = vunpack.c.l.b16 %v2629
      %v2662 = vunpack.c.l.b16 %v2630
      %v2663 = vunpack.c.l.b16 %v2631
      %v2664 = vunpack.c.l.b16 %v2632
      %v2665 = vpack.c.b16 %v2650, %v2649
      %v2666 = vpack.c.b16 %v2652, %v2651
      %v2667 = vpack.c.b16 %v2654, %v2653
      %v2668 = vpack.c.b16 %v2656, %v2655
      %v2669 = vpack.c.b16 %v2658, %v2657
      %v2670 = vpack.c.b16 %v2660, %v2659
      %v2671 = vpack.c.b16 %v2662, %v2661
      %v2672 = vpack.c.b16 %v2664, %v2663
      %2681 = vmatprep.subr.bf16.mxu0 0
      %2682 = vmatpush1.bf16.msra.mxu0 %v2672
      %2683 = vmatprep.subr.bf16.mxu0 0
      %2684 = vmatpush1.bf16.msra.mxu0 %v2671
      %2685 = vmatprep.subr.bf16.mxu0 0
      %2686 = vmatpush1.bf16.msra.mxu0 %v2670
      %2687 = vmatprep.subr.bf16.mxu0 0
      %2688 = vmatpush1.bf16.msra.mxu0 %v2669
      %2689 = vmatprep.subr.bf16.mxu0 0
      %2690 = vmatpush1.bf16.msra.mxu0 %v2668
      %2691 = vmatprep.subr.bf16.mxu0 0
      %2692 = vmatpush1.bf16.msra.mxu0 %v2667
      %2693 = vmatprep.subr.bf16.mxu0 0
      %2694 = vmatpush1.bf16.msra.mxu0 %v2666
      %2695 = vmatprep.subr.bf16.mxu0 0
      %2696 = vmatpush1.bf16.msra.mxu0 %v2665
      %2697 = vmatprep.subr.bf16.mxu0 0
      %2698 = vmatpush2.bf16.msra.mxu0 0
      %2699 = vmatprep.subr.bf16.mxu0 0
      %2700 = vmatpush2.bf16.msra.mxu0 0
      %2701 = vmatprep.subr.bf16.mxu0 0
      %2702 = vmatpush2.bf16.msra.mxu0 0
      %2703 = vmatprep.subr.bf16.mxu0 0
      %2704 = vmatpush2.bf16.msra.mxu0 0
      %2705 = vmatprep.subr.bf16.mxu0 0
      %2706 = vmatpush2.bf16.msra.mxu0 0
      %2707 = vmatprep.subr.bf16.mxu0 0
      %2708 = vmatpush2.bf16.msra.mxu0 0
      %2709 = vmatprep.subr.bf16.mxu0 0
      %2710 = vmatpush2.bf16.msra.mxu0 0
      %2711 = vmatprep.subr.bf16.mxu0 0
      %2712 = vmatpush2.bf16.msra.mxu0 0
      %2713 = vmatprep.mubr.bf16.mxu0 0
      %2714 = vmatmul.mubr.bf16.gmra.mxu0 %v2598
      %v2715 = vpop.f32.mrf.mxu0
      %v2716 = vadd.f32 0.0, %v2715
      %v2717 = vpop.f32.mrf.mxu0
      %v2718 = vpop.f32.mrf.mxu0
      %v2719 = vadd.f32 0.0, %v2718
      %v2720 = vpop.f32.mrf.mxu0
      %2721 = vmatprep.mubr.bf16.mxu0 0
      %2722 = vmatmul.mubr.bf16.gmra.mxu0 %v2599
      %v2723 = vpop.f32.mrf.mxu0
      %v2724 = vadd.f32 0.0, %v2723
      %v2725 = vpop.f32.mrf.mxu0
      %v2726 = vpop.f32.mrf.mxu0
      %v2727 = vadd.f32 0.0, %v2726
      %v2728 = vpop.f32.mrf.mxu0
      %2729 = vmatprep.mubr.bf16.mxu0 0
      %2730 = vmatmul.mubr.bf16.gmra.mxu0 %v2600
      %v2731 = vpop.f32.mrf.mxu0
      %v2732 = vadd.f32 0.0, %v2731
      %v2733 = vpop.f32.mrf.mxu0
      %v2734 = vpop.f32.mrf.mxu0
      %v2735 = vadd.f32 0.0, %v2734
      %v2736 = vpop.f32.mrf.mxu0
      %2737 = vmatprep.mubr.bf16.mxu0 0
      %2738 = vmatmul.mubr.bf16.gmra.mxu0 %v2601
      %v2739 = vpop.f32.mrf.mxu0
      %v2740 = vadd.f32 0.0, %v2739
      %v2741 = vpop.f32.mrf.mxu0
      %v2742 = vpop.f32.mrf.mxu0
      %v2743 = vadd.f32 0.0, %v2742
      %v2744 = vpop.f32.mrf.mxu0
      %2745 = vmatprep.mubr.bf16.mxu0 0
      %2746 = vmatmul.mubr.bf16.gmra.mxu0 %v2602
      %v2747 = vpop.f32.mrf.mxu0
      %v2748 = vadd.f32 0.0, %v2747
      %v2749 = vpop.f32.mrf.mxu0
      %v2750 = vpop.f32.mrf.mxu0
      %v2751 = vadd.f32 0.0, %v2750
      %v2752 = vpop.f32.mrf.mxu0
      %2753 = vmatprep.mubr.bf16.mxu0 0
      %2754 = vmatmul.mubr.bf16.gmra.mxu0 %v2603
      %v2755 = vpop.f32.mrf.mxu0
      %v2756 = vadd.f32 0.0, %v2755
      %v2757 = vpop.f32.mrf.mxu0
      %v2758 = vpop.f32.mrf.mxu0
      %v2759 = vadd.f32 0.0, %v2758
      %v2760 = vpop.f32.mrf.mxu0
      %2761 = vmatprep.mubr.bf16.mxu0 0
      %2762 = vmatmul.mubr.bf16.gmra.mxu0 %v2604
      %v2763 = vpop.f32.mrf.mxu0
      %v2764 = vadd.f32 0.0, %v2763
      %v2765 = vpop.f32.mrf.mxu0
      %v2766 = vpop.f32.mrf.mxu0
      %v2767 = vadd.f32 0.0, %v2766
      %v2768 = vpop.f32.mrf.mxu0
      %2769 = vmatprep.mubr.bf16.mxu0 0
      %2770 = vmatmul.mubr.bf16.gmra.mxu0 %v2605
      %v2771 = vpop.f32.mrf.mxu0
      %v2772 = vadd.f32 0.0, %v2771
      %v2773 = vpop.f32.mrf.mxu0
      %v2774 = vpop.f32.mrf.mxu0
      %v2775 = vadd.f32 0.0, %v2774
      %v2776 = vpop.f32.mrf.mxu0
      %2777 = vmatprep.mubr.bf16.mxu0 0
      %2778 = vmatmul.mubr.bf16.gmra.mxu0 %v2606
      %v2779 = vpop.f32.mrf.mxu0
      %v2780 = vadd.f32 0.0, %v2779
      %v2781 = vpop.f32.mrf.mxu0
      %v2782 = vpop.f32.mrf.mxu0
      %v2783 = vadd.f32 0.0, %v2782
      %v2784 = vpop.f32.mrf.mxu0
      %2785 = vmatprep.mubr.bf16.mxu0 0
      %2786 = vmatmul.mubr.bf16.gmra.mxu0 %v2607
      %v2787 = vpop.f32.mrf.mxu0
      %v2788 = vadd.f32 0.0, %v2787
      %v2789 = vpop.f32.mrf.mxu0
      %v2790 = vpop.f32.mrf.mxu0
      %v2791 = vadd.f32 0.0, %v2790
      %v2792 = vpop.f32.mrf.mxu0
      %2793 = vmatprep.mubr.bf16.mxu0 0
      %2794 = vmatmul.mubr.bf16.gmra.mxu0 %v2608
      %v2795 = vpop.f32.mrf.mxu0
      %v2796 = vadd.f32 0.0, %v2795
      %v2797 = vpop.f32.mrf.mxu0
      %v2798 = vpop.f32.mrf.mxu0
      %v2799 = vadd.f32 0.0, %v2798
      %v2800 = vpop.f32.mrf.mxu0
      %2801 = vmatprep.mubr.bf16.mxu0 0
      %2802 = vmatmul.mubr.bf16.gmra.mxu0 %v2609
      %v2803 = vpop.f32.mrf.mxu0
      %v2804 = vadd.f32 0.0, %v2803
      %v2805 = vpop.f32.mrf.mxu0
      %v2806 = vpop.f32.mrf.mxu0
      %v2807 = vadd.f32 0.0, %v2806
      %v2808 = vpop.f32.mrf.mxu0
      %2809 = vmatprep.mubr.bf16.mxu0 0
      %2810 = vmatmul.mubr.bf16.gmra.mxu0 %v2610
      %v2811 = vpop.f32.mrf.mxu0
      %v2812 = vadd.f32 0.0, %v2811
      %v2813 = vpop.f32.mrf.mxu0
      %v2814 = vpop.f32.mrf.mxu0
      %v2815 = vadd.f32 0.0, %v2814
      %v2816 = vpop.f32.mrf.mxu0
      %2817 = vmatprep.mubr.bf16.mxu0 0
      %2818 = vmatmul.mubr.bf16.gmra.mxu0 %v2611
      %v2819 = vpop.f32.mrf.mxu0
      %v2820 = vadd.f32 0.0, %v2819
      %v2821 = vpop.f32.mrf.mxu0
      %v2822 = vpop.f32.mrf.mxu0
      %v2823 = vadd.f32 0.0, %v2822
      %v2824 = vpop.f32.mrf.mxu0
      %2825 = vmatprep.mubr.bf16.mxu0 0
      %2826 = vmatmul.mubr.bf16.gmra.mxu0 %v2612
      %v2827 = vpop.f32.mrf.mxu0
      %v2828 = vadd.f32 0.0, %v2827
      %v2829 = vpop.f32.mrf.mxu0
      %v2830 = vpop.f32.mrf.mxu0
      %v2831 = vadd.f32 0.0, %v2830
      %v2832 = vpop.f32.mrf.mxu0
      %2833 = vmatprep.mubr.bf16.mxu0 0
      %2834 = vmatmul.mubr.bf16.gmra.mxu0 %v2613
      %v2835 = vpop.f32.mrf.mxu0
      %v2836 = vadd.f32 0.0, %v2835
      %v2837 = vpop.f32.mrf.mxu0
      %v2838 = vpop.f32.mrf.mxu0
      %v2839 = vadd.f32 0.0, %v2838
      %v2840 = vpop.f32.mrf.mxu0
      %2841 = vmatprep.mubr.bf16.mxu0 0
      %2842 = vmatmul.mubr.bf16.gmra.mxu0 %v2614
      %v2843 = vpop.f32.mrf.mxu0
      %v2844 = vadd.f32 0.0, %v2843
      %v2845 = vpop.f32.mrf.mxu0
      %v2846 = vpop.f32.mrf.mxu0
      %v2847 = vadd.f32 0.0, %v2846
      %v2848 = vpop.f32.mrf.mxu0
      %2849 = vmatprep.mubr.bf16.mxu0 0
      %2850 = vmatmul.mubr.bf16.gmra.mxu0 %v2615
      %v2851 = vpop.f32.mrf.mxu0
      %v2852 = vadd.f32 0.0, %v2851
      %v2853 = vpop.f32.mrf.mxu0
      %v2854 = vpop.f32.mrf.mxu0
      %v2855 = vadd.f32 0.0, %v2854
      %v2856 = vpop.f32.mrf.mxu0
      %2857 = vdwg.mxu0
      %v2858 = vadd.f32 %v2526, %v2716
      %v2859 = vadd.f32 %v2527, %v2719
      %v2860 = vadd.f32 %v2528, %v2724
      %v2861 = vadd.f32 %v2529, %v2727
      %v2862 = vadd.f32 %v2530, %v2732
      %v2863 = vadd.f32 %v2531, %v2735
      %v2864 = vadd.f32 %v2532, %v2740
      %v2865 = vadd.f32 %v2533, %v2743
      %v2866 = vadd.f32 %v2534, %v2748
      %v2867 = vadd.f32 %v2535, %v2751
      %v2868 = vadd.f32 %v2536, %v2756
      %v2869 = vadd.f32 %v2537, %v2759
      %v2870 = vadd.f32 %v2538, %v2764
      %v2871 = vadd.f32 %v2539, %v2767
      %v2872 = vadd.f32 %v2540, %v2772
      %v2873 = vadd.f32 %v2541, %v2775
      %v2874 = vadd.f32 %v2542, %v2780
      %v2875 = vadd.f32 %v2543, %v2783
      %v2876 = vadd.f32 %v2544, %v2788
      %v2877 = vadd.f32 %v2545, %v2791
      %v2878 = vadd.f32 %v2546, %v2796
      %v2879 = vadd.f32 %v2547, %v2799
      %v2880 = vadd.f32 %v2548, %v2804
      %v2881 = vadd.f32 %v2549, %v2807
      %v2882 = vadd.f32 %v2550, %v2812
      %v2883 = vadd.f32 %v2551, %v2815
      %v2884 = vadd.f32 %v2552, %v2820
      %v2885 = vadd.f32 %v2553, %v2823
      %v2886 = vadd.f32 %v2554, %v2828
      %v2887 = vadd.f32 %v2555, %v2831
      %v2888 = vadd.f32 %v2556, %v2836
      %v2889 = vadd.f32 %v2557, %v2839
      %v2890 = vadd.f32 %v2558, %v2844
      %v2891 = vadd.f32 %v2559, %v2847
      %v2892 = vadd.f32 %v2560, %v2852
      %v2893 = vadd.f32 %v2561, %v2855
      %v2894 = vld [vmem:[#allocation2 + $0x20] sm:$0xff]
      %v2895 = vld [vmem:[#allocation2 + $0x28] sm:$0xff]
      %v2896 = vld [vmem:[#allocation2 + $0x30] sm:$0xff]
      %v2897 = vld [vmem:[#allocation2 + $0x38] sm:$0xff]
      %v2898 = vld [vmem:[#allocation2 + $0x40] sm:$0xff]
      %v2899 = vld [vmem:[#allocation2 + $0x48] sm:$0xff]
      %v2900 = vld [vmem:[#allocation2 + $0x50] sm:$0xff]
      %v2901 = vld [vmem:[#allocation2 + $0x58] sm:$0xff]
      %v2902 = vld [vmem:[#allocation2 + $0x60] sm:$0xff]
      %v2903 = vld [vmem:[#allocation2 + $0x68] sm:$0xff]
      %v2904 = vld [vmem:[#allocation2 + $0x70] sm:$0xff]
      %v2905 = vld [vmem:[#allocation2 + $0x78] sm:$0xff]
      %v2906 = vld [vmem:[#allocation2 + $0x80] sm:$0xff]
      %v2907 = vld [vmem:[#allocation2 + $0x88] sm:$0xff]
      %v2908 = vld [vmem:[#allocation2 + $0x90] sm:$0xff]
      %v2909 = vld [vmem:[#allocation2 + $0x98] sm:$0xff]
      %v2910 = vld [vmem:[#allocation2 + $0xa0] sm:$0xff]
      %v2911 = vld [vmem:[#allocation2 + $0xa8] sm:$0xff]
      %v2912 = vld [vmem:[#allocation2 + $0xb0] sm:$0xff]
      %v2913 = vld [vmem:[#allocation2 + $0xb8] sm:$0xff]
      %v2914 = vld [vmem:[#allocation2 + $0xc0] sm:$0xff]
      %v2915 = vld [vmem:[#allocation2 + $0xc8] sm:$0xff]
      %v2916 = vld [vmem:[#allocation2 + $0xd0] sm:$0xff]
      %v2917 = vld [vmem:[#allocation2 + $0xd8] sm:$0xff]
      %v2918 = vld [vmem:[#allocation2 + $0xe0] sm:$0xff]
      %v2919 = vld [vmem:[#allocation2 + $0xe8] sm:$0xff]
      %v2920 = vld [vmem:[#allocation2 + $0xf0] sm:$0xff]
      %v2921 = vld [vmem:[#allocation2 + $0xf8] sm:$0xff]
      %v2922 = vld [vmem:[#allocation2 + $0x100] sm:$0xff]
      %v2923 = vld [vmem:[#allocation2 + $0x108] sm:$0xff]
      %v2924 = vld [vmem:[#allocation2 + $0x110] sm:$0xff]
      %v2925 = vld [vmem:[#allocation2 + $0x118] sm:$0xff]
      %v2926 = vld [vmem:[#allocation2 + $0x120] sm:$0xff]
      %v2927 = vld [vmem:[#allocation2 + $0x128] sm:$0xff]
      %v2928 = vld [vmem:[#allocation2 + $0x130] sm:$0xff]
      %v2929 = vld [vmem:[#allocation2 + $0x138] sm:$0xff]
      %v2930 = vpack.c.bf16 %v2895, %v2894
      %v2931 = vpack.c.bf16 %v2897, %v2896
      %v2932 = vpack.c.bf16 %v2899, %v2898
      %v2933 = vpack.c.bf16 %v2901, %v2900
      %v2934 = vpack.c.bf16 %v2903, %v2902
      %v2935 = vpack.c.bf16 %v2905, %v2904
      %v2936 = vpack.c.bf16 %v2907, %v2906
      %v2937 = vpack.c.bf16 %v2909, %v2908
      %v2938 = vpack.c.bf16 %v2911, %v2910
      %v2939 = vpack.c.bf16 %v2913, %v2912
      %v2940 = vpack.c.bf16 %v2915, %v2914
      %v2941 = vpack.c.bf16 %v2917, %v2916
      %v2942 = vpack.c.bf16 %v2919, %v2918
      %v2943 = vpack.c.bf16 %v2921, %v2920
      %v2944 = vpack.c.bf16 %v2923, %v2922
      %v2945 = vpack.c.bf16 %v2925, %v2924
      %v2946 = vpack.c.bf16 %v2927, %v2926
      %v2947 = vpack.c.bf16 %v2929, %v2928
      %s2948 = scalar_lea.vmem %s4, 256
      %v2949 = vld [vmem:[%s2948] sm:$0xf]
      %v2950 = vld [vmem:[%s2948 + $0x4] sm:$0xf]
      %v2951 = vld [vmem:[%s2948 + $0x8] sm:$0xf]
      %v2952 = vld [vmem:[%s2948 + $0xc] sm:$0xf]
      %v2953 = vld [vmem:[%s2948 + $0x10] sm:$0xf]
      %v2954 = vld [vmem:[%s2948 + $0x14] sm:$0xf]
      %v2955 = vld [vmem:[%s2948 + $0x18] sm:$0xf]
      %v2956 = vld [vmem:[%s2948 + $0x1c] sm:$0xf]
      %v2957 = vld [vmem:[%s2948 + $0x20] sm:$0xf]
      %v2958 = vld [vmem:[%s2948 + $0x24] sm:$0xf]
      %v2959 = vld [vmem:[%s2948 + $0x28] sm:$0xf]
      %v2960 = vld [vmem:[%s2948 + $0x2c] sm:$0xf]
      %v2961 = vld [vmem:[%s2948 + $0x30] sm:$0xf]
      %v2962 = vld [vmem:[%s2948 + $0x34] sm:$0xf]
      %v2963 = vld [vmem:[%s2948 + $0x38] sm:$0xf]
      %v2964 = vld [vmem:[%s2948 + $0x3c] sm:$0xf]
      %v2981 = vunpack.c.l.b16 %v2949
      %v2982 = vunpack.c.l.b16 %v2950
      %v2983 = vunpack.c.l.b16 %v2951
      %v2984 = vunpack.c.l.b16 %v2952
      %v2985 = vunpack.c.l.b16 %v2953
      %v2986 = vunpack.c.l.b16 %v2954
      %v2987 = vunpack.c.l.b16 %v2955
      %v2988 = vunpack.c.l.b16 %v2956
      %v2989 = vunpack.c.l.b16 %v2957
      %v2990 = vunpack.c.l.b16 %v2958
      %v2991 = vunpack.c.l.b16 %v2959
      %v2992 = vunpack.c.l.b16 %v2960
      %v2993 = vunpack.c.l.b16 %v2961
      %v2994 = vunpack.c.l.b16 %v2962
      %v2995 = vunpack.c.l.b16 %v2963
      %v2996 = vunpack.c.l.b16 %v2964
      %v2997 = vpack.c.b16 %v2982, %v2981
      %v2998 = vpack.c.b16 %v2984, %v2983
      %v2999 = vpack.c.b16 %v2986, %v2985
      %v3000 = vpack.c.b16 %v2988, %v2987
      %v3001 = vpack.c.b16 %v2990, %v2989
      %v3002 = vpack.c.b16 %v2992, %v2991
      %v3003 = vpack.c.b16 %v2994, %v2993
      %v3004 = vpack.c.b16 %v2996, %v2995
      %3013 = vmatprep.subr.bf16.mxu0 0
      %3014 = vmatpush1.bf16.msra.mxu0 %v3004
      %3015 = vmatprep.subr.bf16.mxu0 0
      %3016 = vmatpush1.bf16.msra.mxu0 %v3003
      %3017 = vmatprep.subr.bf16.mxu0 0
      %3018 = vmatpush1.bf16.msra.mxu0 %v3002
      %3019 = vmatprep.subr.bf16.mxu0 0
      %3020 = vmatpush1.bf16.msra.mxu0 %v3001
      %3021 = vmatprep.subr.bf16.mxu0 0
      %3022 = vmatpush1.bf16.msra.mxu0 %v3000
      %3023 = vmatprep.subr.bf16.mxu0 0
      %3024 = vmatpush1.bf16.msra.mxu0 %v2999
      %3025 = vmatprep.subr.bf16.mxu0 0
      %3026 = vmatpush1.bf16.msra.mxu0 %v2998
      %3027 = vmatprep.subr.bf16.mxu0 0
      %3028 = vmatpush1.bf16.msra.mxu0 %v2997
      %3029 = vmatprep.subr.bf16.mxu0 0
      %3030 = vmatpush2.bf16.msra.mxu0 0
      %3031 = vmatprep.subr.bf16.mxu0 0
      %3032 = vmatpush2.bf16.msra.mxu0 0
      %3033 = vmatprep.subr.bf16.mxu0 0
      %3034 = vmatpush2.bf16.msra.mxu0 0
      %3035 = vmatprep.subr.bf16.mxu0 0
      %3036 = vmatpush2.bf16.msra.mxu0 0
      %3037 = vmatprep.subr.bf16.mxu0 0
      %3038 = vmatpush2.bf16.msra.mxu0 0
      %3039 = vmatprep.subr.bf16.mxu0 0
      %3040 = vmatpush2.bf16.msra.mxu0 0
      %3041 = vmatprep.subr.bf16.mxu0 0
      %3042 = vmatpush2.bf16.msra.mxu0 0
      %3043 = vmatprep.subr.bf16.mxu0 0
      %3044 = vmatpush2.bf16.msra.mxu0 0
      %3045 = vmatprep.mubr.bf16.mxu0 0
      %3046 = vmatmul.mubr.bf16.gmra.mxu0 %v2930
      %v3047 = vpop.f32.mrf.mxu0
      %v3048 = vadd.f32 0.0, %v3047
      %v3049 = vpop.f32.mrf.mxu0
      %v3050 = vpop.f32.mrf.mxu0
      %v3051 = vadd.f32 0.0, %v3050
      %v3052 = vpop.f32.mrf.mxu0
      %3053 = vmatprep.mubr.bf16.mxu0 0
      %3054 = vmatmul.mubr.bf16.gmra.mxu0 %v2931
      %v3055 = vpop.f32.mrf.mxu0
      %v3056 = vadd.f32 0.0, %v3055
      %v3057 = vpop.f32.mrf.mxu0
      %v3058 = vpop.f32.mrf.mxu0
      %v3059 = vadd.f32 0.0, %v3058
      %v3060 = vpop.f32.mrf.mxu0
      %3061 = vmatprep.mubr.bf16.mxu0 0
      %3062 = vmatmul.mubr.bf16.gmra.mxu0 %v2932
      %v3063 = vpop.f32.mrf.mxu0
      %v3064 = vadd.f32 0.0, %v3063
      %v3065 = vpop.f32.mrf.mxu0
      %v3066 = vpop.f32.mrf.mxu0
      %v3067 = vadd.f32 0.0, %v3066
      %v3068 = vpop.f32.mrf.mxu0
      %3069 = vmatprep.mubr.bf16.mxu0 0
      %3070 = vmatmul.mubr.bf16.gmra.mxu0 %v2933
      %v3071 = vpop.f32.mrf.mxu0
      %v3072 = vadd.f32 0.0, %v3071
      %v3073 = vpop.f32.mrf.mxu0
      %v3074 = vpop.f32.mrf.mxu0
      %v3075 = vadd.f32 0.0, %v3074
      %v3076 = vpop.f32.mrf.mxu0
      %3077 = vmatprep.mubr.bf16.mxu0 0
      %3078 = vmatmul.mubr.bf16.gmra.mxu0 %v2934
      %v3079 = vpop.f32.mrf.mxu0
      %v3080 = vadd.f32 0.0, %v3079
      %v3081 = vpop.f32.mrf.mxu0
      %v3082 = vpop.f32.mrf.mxu0
      %v3083 = vadd.f32 0.0, %v3082
      %v3084 = vpop.f32.mrf.mxu0
      %3085 = vmatprep.mubr.bf16.mxu0 0
      %3086 = vmatmul.mubr.bf16.gmra.mxu0 %v2935
      %v3087 = vpop.f32.mrf.mxu0
      %v3088 = vadd.f32 0.0, %v3087
      %v3089 = vpop.f32.mrf.mxu0
      %v3090 = vpop.f32.mrf.mxu0
      %v3091 = vadd.f32 0.0, %v3090
      %v3092 = vpop.f32.mrf.mxu0
      %3093 = vmatprep.mubr.bf16.mxu0 0
      %3094 = vmatmul.mubr.bf16.gmra.mxu0 %v2936
      %v3095 = vpop.f32.mrf.mxu0
      %v3096 = vadd.f32 0.0, %v3095
      %v3097 = vpop.f32.mrf.mxu0
      %v3098 = vpop.f32.mrf.mxu0
      %v3099 = vadd.f32 0.0, %v3098
      %v3100 = vpop.f32.mrf.mxu0
      %3101 = vmatprep.mubr.bf16.mxu0 0
      %3102 = vmatmul.mubr.bf16.gmra.mxu0 %v2937
      %v3103 = vpop.f32.mrf.mxu0
      %v3104 = vadd.f32 0.0, %v3103
      %v3105 = vpop.f32.mrf.mxu0
      %v3106 = vpop.f32.mrf.mxu0
      %v3107 = vadd.f32 0.0, %v3106
      %v3108 = vpop.f32.mrf.mxu0
      %3109 = vmatprep.mubr.bf16.mxu0 0
      %3110 = vmatmul.mubr.bf16.gmra.mxu0 %v2938
      %v3111 = vpop.f32.mrf.mxu0
      %v3112 = vadd.f32 0.0, %v3111
      %v3113 = vpop.f32.mrf.mxu0
      %v3114 = vpop.f32.mrf.mxu0
      %v3115 = vadd.f32 0.0, %v3114
      %v3116 = vpop.f32.mrf.mxu0
      %3117 = vmatprep.mubr.bf16.mxu0 0
      %3118 = vmatmul.mubr.bf16.gmra.mxu0 %v2939
      %v3119 = vpop.f32.mrf.mxu0
      %v3120 = vadd.f32 0.0, %v3119
      %v3121 = vpop.f32.mrf.mxu0
      %v3122 = vpop.f32.mrf.mxu0
      %v3123 = vadd.f32 0.0, %v3122
      %v3124 = vpop.f32.mrf.mxu0
      %3125 = vmatprep.mubr.bf16.mxu0 0
      %3126 = vmatmul.mubr.bf16.gmra.mxu0 %v2940
      %v3127 = vpop.f32.mrf.mxu0
      %v3128 = vadd.f32 0.0, %v3127
      %v3129 = vpop.f32.mrf.mxu0
      %v3130 = vpop.f32.mrf.mxu0
      %v3131 = vadd.f32 0.0, %v3130
      %v3132 = vpop.f32.mrf.mxu0
      %3133 = vmatprep.mubr.bf16.mxu0 0
      %3134 = vmatmul.mubr.bf16.gmra.mxu0 %v2941
      %v3135 = vpop.f32.mrf.mxu0
      %v3136 = vadd.f32 0.0, %v3135
      %v3137 = vpop.f32.mrf.mxu0
      %v3138 = vpop.f32.mrf.mxu0
      %v3139 = vadd.f32 0.0, %v3138
      %v3140 = vpop.f32.mrf.mxu0
      %3141 = vmatprep.mubr.bf16.mxu0 0
      %3142 = vmatmul.mubr.bf16.gmra.mxu0 %v2942
      %v3143 = vpop.f32.mrf.mxu0
      %v3144 = vadd.f32 0.0, %v3143
      %v3145 = vpop.f32.mrf.mxu0
      %v3146 = vpop.f32.mrf.mxu0
      %v3147 = vadd.f32 0.0, %v3146
      %v3148 = vpop.f32.mrf.mxu0
      %3149 = vmatprep.mubr.bf16.mxu0 0
      %3150 = vmatmul.mubr.bf16.gmra.mxu0 %v2943
      %v3151 = vpop.f32.mrf.mxu0
      %v3152 = vadd.f32 0.0, %v3151
      %v3153 = vpop.f32.mrf.mxu0
      %v3154 = vpop.f32.mrf.mxu0
      %v3155 = vadd.f32 0.0, %v3154
      %v3156 = vpop.f32.mrf.mxu0
      %3157 = vmatprep.mubr.bf16.mxu0 0
      %3158 = vmatmul.mubr.bf16.gmra.mxu0 %v2944
      %v3159 = vpop.f32.mrf.mxu0
      %v3160 = vadd.f32 0.0, %v3159
      %v3161 = vpop.f32.mrf.mxu0
      %v3162 = vpop.f32.mrf.mxu0
      %v3163 = vadd.f32 0.0, %v3162
      %v3164 = vpop.f32.mrf.mxu0
      %3165 = vmatprep.mubr.bf16.mxu0 0
      %3166 = vmatmul.mubr.bf16.gmra.mxu0 %v2945
      %v3167 = vpop.f32.mrf.mxu0
      %v3168 = vadd.f32 0.0, %v3167
      %v3169 = vpop.f32.mrf.mxu0
      %v3170 = vpop.f32.mrf.mxu0
      %v3171 = vadd.f32 0.0, %v3170
      %v3172 = vpop.f32.mrf.mxu0
      %3173 = vmatprep.mubr.bf16.mxu0 0
      %3174 = vmatmul.mubr.bf16.gmra.mxu0 %v2946
      %v3175 = vpop.f32.mrf.mxu0
      %v3176 = vadd.f32 0.0, %v3175
      %v3177 = vpop.f32.mrf.mxu0
      %v3178 = vpop.f32.mrf.mxu0
      %v3179 = vadd.f32 0.0, %v3178
      %v3180 = vpop.f32.mrf.mxu0
      %3181 = vmatprep.mubr.bf16.mxu0 0
      %3182 = vmatmul.mubr.bf16.gmra.mxu0 %v2947
      %v3183 = vpop.f32.mrf.mxu0
      %v3184 = vadd.f32 0.0, %v3183
      %v3185 = vpop.f32.mrf.mxu0
      %v3186 = vpop.f32.mrf.mxu0
      %v3187 = vadd.f32 0.0, %v3186
      %v3188 = vpop.f32.mrf.mxu0
      %3189 = vdwg.mxu0
      %v3190 = vadd.f32 %v2858, %v3048
      %v3191 = vadd.f32 %v2859, %v3051
      %v3192 = vadd.f32 %v2860, %v3056
      %v3193 = vadd.f32 %v2861, %v3059
      %v3194 = vadd.f32 %v2862, %v3064
      %v3195 = vadd.f32 %v2863, %v3067
      %v3196 = vadd.f32 %v2864, %v3072
      %v3197 = vadd.f32 %v2865, %v3075
      %v3198 = vadd.f32 %v2866, %v3080
      %v3199 = vadd.f32 %v2867, %v3083
      %v3200 = vadd.f32 %v2868, %v3088
      %v3201 = vadd.f32 %v2869, %v3091
      %v3202 = vadd.f32 %v2870, %v3096
      %v3203 = vadd.f32 %v2871, %v3099
      %v3204 = vadd.f32 %v2872, %v3104
      %v3205 = vadd.f32 %v2873, %v3107
      %v3206 = vadd.f32 %v2874, %v3112
      %v3207 = vadd.f32 %v2875, %v3115
      %v3208 = vadd.f32 %v2876, %v3120
      %v3209 = vadd.f32 %v2877, %v3123
      %v3210 = vadd.f32 %v2878, %v3128
      %v3211 = vadd.f32 %v2879, %v3131
      %v3212 = vadd.f32 %v2880, %v3136
      %v3213 = vadd.f32 %v2881, %v3139
      %v3214 = vadd.f32 %v2882, %v3144
      %v3215 = vadd.f32 %v2883, %v3147
      %v3216 = vadd.f32 %v2884, %v3152
      %v3217 = vadd.f32 %v2885, %v3155
      %v3218 = vadd.f32 %v2886, %v3160
      %v3219 = vadd.f32 %v2887, %v3163
      %v3220 = vadd.f32 %v2888, %v3168
      %v3221 = vadd.f32 %v2889, %v3171
      %v3222 = vadd.f32 %v2890, %v3176
      %v3223 = vadd.f32 %v2891, %v3179
      %v3224 = vadd.f32 %v2892, %v3184
      %v3225 = vadd.f32 %v2893, %v3187
      %v3226 = vld [vmem:[#allocation2 + $0x21] sm:$0xff]
      %v3227 = vld [vmem:[#allocation2 + $0x29] sm:$0xff]
      %v3228 = vld [vmem:[#allocation2 + $0x31] sm:$0xff]
      %v3229 = vld [vmem:[#allocation2 + $0x39] sm:$0xff]
      %v3230 = vld [vmem:[#allocation2 + $0x41] sm:$0xff]
      %v3231 = vld [vmem:[#allocation2 + $0x49] sm:$0xff]
      %v3232 = vld [vmem:[#allocation2 + $0x51] sm:$0xff]
      %v3233 = vld [vmem:[#allocation2 + $0x59] sm:$0xff]
      %v3234 = vld [vmem:[#allocation2 + $0x61] sm:$0xff]
      %v3235 = vld [vmem:[#allocation2 + $0x69] sm:$0xff]
      %v3236 = vld [vmem:[#allocation2 + $0x71] sm:$0xff]
      %v3237 = vld [vmem:[#allocation2 + $0x79] sm:$0xff]
      %v3238 = vld [vmem:[#allocation2 + $0x81] sm:$0xff]
      %v3239 = vld [vmem:[#allocation2 + $0x89] sm:$0xff]
      %v3240 = vld [vmem:[#allocation2 + $0x91] sm:$0xff]
      %v3241 = vld [vmem:[#allocation2 + $0x99] sm:$0xff]
      %v3242 = vld [vmem:[#allocation2 + $0xa1] sm:$0xff]
      %v3243 = vld [vmem:[#allocation2 + $0xa9] sm:$0xff]
      %v3244 = vld [vmem:[#allocation2 + $0xb1] sm:$0xff]
      %v3245 = vld [vmem:[#allocation2 + $0xb9] sm:$0xff]
      %v3246 = vld [vmem:[#allocation2 + $0xc1] sm:$0xff]
      %v3247 = vld [vmem:[#allocation2 + $0xc9] sm:$0xff]
      %v3248 = vld [vmem:[#allocation2 + $0xd1] sm:$0xff]
      %v3249 = vld [vmem:[#allocation2 + $0xd9] sm:$0xff]
      %v3250 = vld [vmem:[#allocation2 + $0xe1] sm:$0xff]
      %v3251 = vld [vmem:[#allocation2 + $0xe9] sm:$0xff]
      %v3252 = vld [vmem:[#allocation2 + $0xf1] sm:$0xff]
      %v3253 = vld [vmem:[#allocation2 + $0xf9] sm:$0xff]
      %v3254 = vld [vmem:[#allocation2 + $0x101] sm:$0xff]
      %v3255 = vld [vmem:[#allocation2 + $0x109] sm:$0xff]
      %v3256 = vld [vmem:[#allocation2 + $0x111] sm:$0xff]
      %v3257 = vld [vmem:[#allocation2 + $0x119] sm:$0xff]
      %v3258 = vld [vmem:[#allocation2 + $0x121] sm:$0xff]
      %v3259 = vld [vmem:[#allocation2 + $0x129] sm:$0xff]
      %v3260 = vld [vmem:[#allocation2 + $0x131] sm:$0xff]
      %v3261 = vld [vmem:[#allocation2 + $0x139] sm:$0xff]
      %v3262 = vpack.c.bf16 %v3227, %v3226
      %v3263 = vpack.c.bf16 %v3229, %v3228
      %v3264 = vpack.c.bf16 %v3231, %v3230
      %v3265 = vpack.c.bf16 %v3233, %v3232
      %v3266 = vpack.c.bf16 %v3235, %v3234
      %v3267 = vpack.c.bf16 %v3237, %v3236
      %v3268 = vpack.c.bf16 %v3239, %v3238
      %v3269 = vpack.c.bf16 %v3241, %v3240
      %v3270 = vpack.c.bf16 %v3243, %v3242
      %v3271 = vpack.c.bf16 %v3245, %v3244
      %v3272 = vpack.c.bf16 %v3247, %v3246
      %v3273 = vpack.c.bf16 %v3249, %v3248
      %v3274 = vpack.c.bf16 %v3251, %v3250
      %v3275 = vpack.c.bf16 %v3253, %v3252
      %v3276 = vpack.c.bf16 %v3255, %v3254
      %v3277 = vpack.c.bf16 %v3257, %v3256
      %v3278 = vpack.c.bf16 %v3259, %v3258
      %v3279 = vpack.c.bf16 %v3261, %v3260
      %s3280 = scalar_lea.vmem %s4, 320
      %v3281 = vld [vmem:[%s3280] sm:$0xf]
      %v3282 = vld [vmem:[%s3280 + $0x4] sm:$0xf]
      %v3283 = vld [vmem:[%s3280 + $0x8] sm:$0xf]
      %v3284 = vld [vmem:[%s3280 + $0xc] sm:$0xf]
      %v3285 = vld [vmem:[%s3280 + $0x10] sm:$0xf]
      %v3286 = vld [vmem:[%s3280 + $0x14] sm:$0xf]
      %v3287 = vld [vmem:[%s3280 + $0x18] sm:$0xf]
      %v3288 = vld [vmem:[%s3280 + $0x1c] sm:$0xf]
      %v3289 = vld [vmem:[%s3280 + $0x20] sm:$0xf]
      %v3290 = vld [vmem:[%s3280 + $0x24] sm:$0xf]
      %v3291 = vld [vmem:[%s3280 + $0x28] sm:$0xf]
      %v3292 = vld [vmem:[%s3280 + $0x2c] sm:$0xf]
      %v3293 = vld [vmem:[%s3280 + $0x30] sm:$0xf]
      %v3294 = vld [vmem:[%s3280 + $0x34] sm:$0xf]
      %v3295 = vld [vmem:[%s3280 + $0x38] sm:$0xf]
      %v3296 = vld [vmem:[%s3280 + $0x3c] sm:$0xf]
      %v3313 = vunpack.c.l.b16 %v3281
      %v3314 = vunpack.c.l.b16 %v3282
      %v3315 = vunpack.c.l.b16 %v3283
      %v3316 = vunpack.c.l.b16 %v3284
      %v3317 = vunpack.c.l.b16 %v3285
      %v3318 = vunpack.c.l.b16 %v3286
      %v3319 = vunpack.c.l.b16 %v3287
      %v3320 = vunpack.c.l.b16 %v3288
      %v3321 = vunpack.c.l.b16 %v3289
      %v3322 = vunpack.c.l.b16 %v3290
      %v3323 = vunpack.c.l.b16 %v3291
      %v3324 = vunpack.c.l.b16 %v3292
      %v3325 = vunpack.c.l.b16 %v3293
      %v3326 = vunpack.c.l.b16 %v3294
      %v3327 = vunpack.c.l.b16 %v3295
      %v3328 = vunpack.c.l.b16 %v3296
      %v3329 = vpack.c.b16 %v3314, %v3313
      %v3330 = vpack.c.b16 %v3316, %v3315
      %v3331 = vpack.c.b16 %v3318, %v3317
      %v3332 = vpack.c.b16 %v3320, %v3319
      %v3333 = vpack.c.b16 %v3322, %v3321
      %v3334 = vpack.c.b16 %v3324, %v3323
      %v3335 = vpack.c.b16 %v3326, %v3325
      %v3336 = vpack.c.b16 %v3328, %v3327
      %3345 = vmatprep.subr.bf16.mxu0 0
      %3346 = vmatpush1.bf16.msra.mxu0 %v3336
      %3347 = vmatprep.subr.bf16.mxu0 0
      %3348 = vmatpush1.bf16.msra.mxu0 %v3335
      %3349 = vmatprep.subr.bf16.mxu0 0
      %3350 = vmatpush1.bf16.msra.mxu0 %v3334
      %3351 = vmatprep.subr.bf16.mxu0 0
      %3352 = vmatpush1.bf16.msra.mxu0 %v3333
      %3353 = vmatprep.subr.bf16.mxu0 0
      %3354 = vmatpush1.bf16.msra.mxu0 %v3332
      %3355 = vmatprep.subr.bf16.mxu0 0
      %3356 = vmatpush1.bf16.msra.mxu0 %v3331
      %3357 = vmatprep.subr.bf16.mxu0 0
      %3358 = vmatpush1.bf16.msra.mxu0 %v3330
      %3359 = vmatprep.subr.bf16.mxu0 0
      %3360 = vmatpush1.bf16.msra.mxu0 %v3329
      %3361 = vmatprep.subr.bf16.mxu0 0
      %3362 = vmatpush2.bf16.msra.mxu0 0
      %3363 = vmatprep.subr.bf16.mxu0 0
      %3364 = vmatpush2.bf16.msra.mxu0 0
      %3365 = vmatprep.subr.bf16.mxu0 0
      %3366 = vmatpush2.bf16.msra.mxu0 0
      %3367 = vmatprep.subr.bf16.mxu0 0
      %3368 = vmatpush2.bf16.msra.mxu0 0
      %3369 = vmatprep.subr.bf16.mxu0 0
      %3370 = vmatpush2.bf16.msra.mxu0 0
      %3371 = vmatprep.subr.bf16.mxu0 0
      %3372 = vmatpush2.bf16.msra.mxu0 0
      %3373 = vmatprep.subr.bf16.mxu0 0
      %3374 = vmatpush2.bf16.msra.mxu0 0
      %3375 = vmatprep.subr.bf16.mxu0 0
      %3376 = vmatpush2.bf16.msra.mxu0 0
      %3377 = vmatprep.mubr.bf16.mxu0 0
      %3378 = vmatmul.mubr.bf16.gmra.mxu0 %v3262
      %v3379 = vpop.f32.mrf.mxu0
      %v3380 = vadd.f32 0.0, %v3379
      %v3381 = vpop.f32.mrf.mxu0
      %v3382 = vpop.f32.mrf.mxu0
      %v3383 = vadd.f32 0.0, %v3382
      %v3384 = vpop.f32.mrf.mxu0
      %3385 = vmatprep.mubr.bf16.mxu0 0
      %3386 = vmatmul.mubr.bf16.gmra.mxu0 %v3263
      %v3387 = vpop.f32.mrf.mxu0
      %v3388 = vadd.f32 0.0, %v3387
      %v3389 = vpop.f32.mrf.mxu0
      %v3390 = vpop.f32.mrf.mxu0
      %v3391 = vadd.f32 0.0, %v3390
      %v3392 = vpop.f32.mrf.mxu0
      %3393 = vmatprep.mubr.bf16.mxu0 0
      %3394 = vmatmul.mubr.bf16.gmra.mxu0 %v3264
      %v3395 = vpop.f32.mrf.mxu0
      %v3396 = vadd.f32 0.0, %v3395
      %v3397 = vpop.f32.mrf.mxu0
      %v3398 = vpop.f32.mrf.mxu0
      %v3399 = vadd.f32 0.0, %v3398
      %v3400 = vpop.f32.mrf.mxu0
      %3401 = vmatprep.mubr.bf16.mxu0 0
      %3402 = vmatmul.mubr.bf16.gmra.mxu0 %v3265
      %v3403 = vpop.f32.mrf.mxu0
      %v3404 = vadd.f32 0.0, %v3403
      %v3405 = vpop.f32.mrf.mxu0
      %v3406 = vpop.f32.mrf.mxu0
      %v3407 = vadd.f32 0.0, %v3406
      %v3408 = vpop.f32.mrf.mxu0
      %3409 = vmatprep.mubr.bf16.mxu0 0
      %3410 = vmatmul.mubr.bf16.gmra.mxu0 %v3266
      %v3411 = vpop.f32.mrf.mxu0
      %v3412 = vadd.f32 0.0, %v3411
      %v3413 = vpop.f32.mrf.mxu0
      %v3414 = vpop.f32.mrf.mxu0
      %v3415 = vadd.f32 0.0, %v3414
      %v3416 = vpop.f32.mrf.mxu0
      %3417 = vmatprep.mubr.bf16.mxu0 0
      %3418 = vmatmul.mubr.bf16.gmra.mxu0 %v3267
      %v3419 = vpop.f32.mrf.mxu0
      %v3420 = vadd.f32 0.0, %v3419
      %v3421 = vpop.f32.mrf.mxu0
      %v3422 = vpop.f32.mrf.mxu0
      %v3423 = vadd.f32 0.0, %v3422
      %v3424 = vpop.f32.mrf.mxu0
      %3425 = vmatprep.mubr.bf16.mxu0 0
      %3426 = vmatmul.mubr.bf16.gmra.mxu0 %v3268
      %v3427 = vpop.f32.mrf.mxu0
      %v3428 = vadd.f32 0.0, %v3427
      %v3429 = vpop.f32.mrf.mxu0
      %v3430 = vpop.f32.mrf.mxu0
      %v3431 = vadd.f32 0.0, %v3430
      %v3432 = vpop.f32.mrf.mxu0
      %3433 = vmatprep.mubr.bf16.mxu0 0
      %3434 = vmatmul.mubr.bf16.gmra.mxu0 %v3269
      %v3435 = vpop.f32.mrf.mxu0
      %v3436 = vadd.f32 0.0, %v3435
      %v3437 = vpop.f32.mrf.mxu0
      %v3438 = vpop.f32.mrf.mxu0
      %v3439 = vadd.f32 0.0, %v3438
      %v3440 = vpop.f32.mrf.mxu0
      %3441 = vmatprep.mubr.bf16.mxu0 0
      %3442 = vmatmul.mubr.bf16.gmra.mxu0 %v3270
      %v3443 = vpop.f32.mrf.mxu0
      %v3444 = vadd.f32 0.0, %v3443
      %v3445 = vpop.f32.mrf.mxu0
      %v3446 = vpop.f32.mrf.mxu0
      %v3447 = vadd.f32 0.0, %v3446
      %v3448 = vpop.f32.mrf.mxu0
      %3449 = vmatprep.mubr.bf16.mxu0 0
      %3450 = vmatmul.mubr.bf16.gmra.mxu0 %v3271
      %v3451 = vpop.f32.mrf.mxu0
      %v3452 = vadd.f32 0.0, %v3451
      %v3453 = vpop.f32.mrf.mxu0
      %v3454 = vpop.f32.mrf.mxu0
      %v3455 = vadd.f32 0.0, %v3454
      %v3456 = vpop.f32.mrf.mxu0
      %3457 = vmatprep.mubr.bf16.mxu0 0
      %3458 = vmatmul.mubr.bf16.gmra.mxu0 %v3272
      %v3459 = vpop.f32.mrf.mxu0
      %v3460 = vadd.f32 0.0, %v3459
      %v3461 = vpop.f32.mrf.mxu0
      %v3462 = vpop.f32.mrf.mxu0
      %v3463 = vadd.f32 0.0, %v3462
      %v3464 = vpop.f32.mrf.mxu0
      %3465 = vmatprep.mubr.bf16.mxu0 0
      %3466 = vmatmul.mubr.bf16.gmra.mxu0 %v3273
      %v3467 = vpop.f32.mrf.mxu0
      %v3468 = vadd.f32 0.0, %v3467
      %v3469 = vpop.f32.mrf.mxu0
      %v3470 = vpop.f32.mrf.mxu0
      %v3471 = vadd.f32 0.0, %v3470
      %v3472 = vpop.f32.mrf.mxu0
      %3473 = vmatprep.mubr.bf16.mxu0 0
      %3474 = vmatmul.mubr.bf16.gmra.mxu0 %v3274
      %v3475 = vpop.f32.mrf.mxu0
      %v3476 = vadd.f32 0.0, %v3475
      %v3477 = vpop.f32.mrf.mxu0
      %v3478 = vpop.f32.mrf.mxu0
      %v3479 = vadd.f32 0.0, %v3478
      %v3480 = vpop.f32.mrf.mxu0
      %3481 = vmatprep.mubr.bf16.mxu0 0
      %3482 = vmatmul.mubr.bf16.gmra.mxu0 %v3275
      %v3483 = vpop.f32.mrf.mxu0
      %v3484 = vadd.f32 0.0, %v3483
      %v3485 = vpop.f32.mrf.mxu0
      %v3486 = vpop.f32.mrf.mxu0
      %v3487 = vadd.f32 0.0, %v3486
      %v3488 = vpop.f32.mrf.mxu0
      %3489 = vmatprep.mubr.bf16.mxu0 0
      %3490 = vmatmul.mubr.bf16.gmra.mxu0 %v3276
      %v3491 = vpop.f32.mrf.mxu0
      %v3492 = vadd.f32 0.0, %v3491
      %v3493 = vpop.f32.mrf.mxu0
      %v3494 = vpop.f32.mrf.mxu0
      %v3495 = vadd.f32 0.0, %v3494
      %v3496 = vpop.f32.mrf.mxu0
      %3497 = vmatprep.mubr.bf16.mxu0 0
      %3498 = vmatmul.mubr.bf16.gmra.mxu0 %v3277
      %v3499 = vpop.f32.mrf.mxu0
      %v3500 = vadd.f32 0.0, %v3499
      %v3501 = vpop.f32.mrf.mxu0
      %v3502 = vpop.f32.mrf.mxu0
      %v3503 = vadd.f32 0.0, %v3502
      %v3504 = vpop.f32.mrf.mxu0
      %3505 = vmatprep.mubr.bf16.mxu0 0
      %3506 = vmatmul.mubr.bf16.gmra.mxu0 %v3278
      %v3507 = vpop.f32.mrf.mxu0
      %v3508 = vadd.f32 0.0, %v3507
      %v3509 = vpop.f32.mrf.mxu0
      %v3510 = vpop.f32.mrf.mxu0
      %v3511 = vadd.f32 0.0, %v3510
      %v3512 = vpop.f32.mrf.mxu0
      %3513 = vmatprep.mubr.bf16.mxu0 0
      %3514 = vmatmul.mubr.bf16.gmra.mxu0 %v3279
      %v3515 = vpop.f32.mrf.mxu0
      %v3516 = vadd.f32 0.0, %v3515
      %v3517 = vpop.f32.mrf.mxu0
      %v3518 = vpop.f32.mrf.mxu0
      %v3519 = vadd.f32 0.0, %v3518
      %v3520 = vpop.f32.mrf.mxu0
      %3521 = vdwg.mxu0
      %v3522 = vadd.f32 %v3190, %v3380
      %v3523 = vadd.f32 %v3191, %v3383
      %v3524 = vadd.f32 %v3192, %v3388
      %v3525 = vadd.f32 %v3193, %v3391
      %v3526 = vadd.f32 %v3194, %v3396
      %v3527 = vadd.f32 %v3195, %v3399
      %v3528 = vadd.f32 %v3196, %v3404
      %v3529 = vadd.f32 %v3197, %v3407
      %v3530 = vadd.f32 %v3198, %v3412
      %v3531 = vadd.f32 %v3199, %v3415
      %v3532 = vadd.f32 %v3200, %v3420
      %v3533 = vadd.f32 %v3201, %v3423
      %v3534 = vadd.f32 %v3202, %v3428
      %v3535 = vadd.f32 %v3203, %v3431
      %v3536 = vadd.f32 %v3204, %v3436
      %v3537 = vadd.f32 %v3205, %v3439
      %v3538 = vadd.f32 %v3206, %v3444
      %v3539 = vadd.f32 %v3207, %v3447
      %v3540 = vadd.f32 %v3208, %v3452
      %v3541 = vadd.f32 %v3209, %v3455
      %v3542 = vadd.f32 %v3210, %v3460
      %v3543 = vadd.f32 %v3211, %v3463
      %v3544 = vadd.f32 %v3212, %v3468
      %v3545 = vadd.f32 %v3213, %v3471
      %v3546 = vadd.f32 %v3214, %v3476
      %v3547 = vadd.f32 %v3215, %v3479
      %v3548 = vadd.f32 %v3216, %v3484
      %v3549 = vadd.f32 %v3217, %v3487
      %v3550 = vadd.f32 %v3218, %v3492
      %v3551 = vadd.f32 %v3219, %v3495
      %v3552 = vadd.f32 %v3220, %v3500
      %v3553 = vadd.f32 %v3221, %v3503
      %v3554 = vadd.f32 %v3222, %v3508
      %v3555 = vadd.f32 %v3223, %v3511
      %v3556 = vadd.f32 %v3224, %v3516
      %v3557 = vadd.f32 %v3225, %v3519
      %v3558 = vld [vmem:[#allocation2 + $0x31] sm:$0xff]
      %v3559 = vld [vmem:[#allocation2 + $0x39] sm:$0xff]
      %v3560 = vld [vmem:[#allocation2 + $0x41] sm:$0xff]
      %v3561 = vld [vmem:[#allocation2 + $0x49] sm:$0xff]
      %v3562 = vld [vmem:[#allocation2 + $0x51] sm:$0xff]
      %v3563 = vld [vmem:[#allocation2 + $0x59] sm:$0xff]
      %v3564 = vld [vmem:[#allocation2 + $0x61] sm:$0xff]
      %v3565 = vld [vmem:[#allocation2 + $0x69] sm:$0xff]
      %v3566 = vld [vmem:[#allocation2 + $0x71] sm:$0xff]
      %v3567 = vld [vmem:[#allocation2 + $0x79] sm:$0xff]
      %v3568 = vld [vmem:[#allocation2 + $0x81] sm:$0xff]
      %v3569 = vld [vmem:[#allocation2 + $0x89] sm:$0xff]
      %v3570 = vld [vmem:[#allocation2 + $0x91] sm:$0xff]
      %v3571 = vld [vmem:[#allocation2 + $0x99] sm:$0xff]
      %v3572 = vld [vmem:[#allocation2 + $0xa1] sm:$0xff]
      %v3573 = vld [vmem:[#allocation2 + $0xa9] sm:$0xff]
      %v3574 = vld [vmem:[#allocation2 + $0xb1] sm:$0xff]
      %v3575 = vld [vmem:[#allocation2 + $0xb9] sm:$0xff]
      %v3576 = vld [vmem:[#allocation2 + $0xc1] sm:$0xff]
      %v3577 = vld [vmem:[#allocation2 + $0xc9] sm:$0xff]
      %v3578 = vld [vmem:[#allocation2 + $0xd1] sm:$0xff]
      %v3579 = vld [vmem:[#allocation2 + $0xd9] sm:$0xff]
      %v3580 = vld [vmem:[#allocation2 + $0xe1] sm:$0xff]
      %v3581 = vld [vmem:[#allocation2 + $0xe9] sm:$0xff]
      %v3582 = vld [vmem:[#allocation2 + $0xf1] sm:$0xff]
      %v3583 = vld [vmem:[#allocation2 + $0xf9] sm:$0xff]
      %v3584 = vld [vmem:[#allocation2 + $0x101] sm:$0xff]
      %v3585 = vld [vmem:[#allocation2 + $0x109] sm:$0xff]
      %v3586 = vld [vmem:[#allocation2 + $0x111] sm:$0xff]
      %v3587 = vld [vmem:[#allocation2 + $0x119] sm:$0xff]
      %v3588 = vld [vmem:[#allocation2 + $0x121] sm:$0xff]
      %v3589 = vld [vmem:[#allocation2 + $0x129] sm:$0xff]
      %v3590 = vld [vmem:[#allocation2 + $0x131] sm:$0xff]
      %v3591 = vld [vmem:[#allocation2 + $0x139] sm:$0xff]
      %v3592 = vld [vmem:[#allocation2 + $0x141] sm:$0xff]
      %v3593 = vld [vmem:[#allocation2 + $0x149] sm:$0xff]
      %v3594 = vpack.c.bf16 %v3559, %v3558
      %v3595 = vpack.c.bf16 %v3561, %v3560
      %v3596 = vpack.c.bf16 %v3563, %v3562
      %v3597 = vpack.c.bf16 %v3565, %v3564
      %v3598 = vpack.c.bf16 %v3567, %v3566
      %v3599 = vpack.c.bf16 %v3569, %v3568
      %v3600 = vpack.c.bf16 %v3571, %v3570
      %v3601 = vpack.c.bf16 %v3573, %v3572
      %v3602 = vpack.c.bf16 %v3575, %v3574
      %v3603 = vpack.c.bf16 %v3577, %v3576
      %v3604 = vpack.c.bf16 %v3579, %v3578
      %v3605 = vpack.c.bf16 %v3581, %v3580
      %v3606 = vpack.c.bf16 %v3583, %v3582
      %v3607 = vpack.c.bf16 %v3585, %v3584
      %v3608 = vpack.c.bf16 %v3587, %v3586
      %v3609 = vpack.c.bf16 %v3589, %v3588
      %v3610 = vpack.c.bf16 %v3591, %v3590
      %v3611 = vpack.c.bf16 %v3593, %v3592
      %s3612 = scalar_lea.vmem %s4, 384
      %v3613 = vld [vmem:[%s3612] sm:$0xf]
      %v3614 = vld [vmem:[%s3612 + $0x4] sm:$0xf]
      %v3615 = vld [vmem:[%s3612 + $0x8] sm:$0xf]
      %v3616 = vld [vmem:[%s3612 + $0xc] sm:$0xf]
      %v3617 = vld [vmem:[%s3612 + $0x10] sm:$0xf]
      %v3618 = vld [vmem:[%s3612 + $0x14] sm:$0xf]
      %v3619 = vld [vmem:[%s3612 + $0x18] sm:$0xf]
      %v3620 = vld [vmem:[%s3612 + $0x1c] sm:$0xf]
      %v3621 = vld [vmem:[%s3612 + $0x20] sm:$0xf]
      %v3622 = vld [vmem:[%s3612 + $0x24] sm:$0xf]
      %v3623 = vld [vmem:[%s3612 + $0x28] sm:$0xf]
      %v3624 = vld [vmem:[%s3612 + $0x2c] sm:$0xf]
      %v3625 = vld [vmem:[%s3612 + $0x30] sm:$0xf]
      %v3626 = vld [vmem:[%s3612 + $0x34] sm:$0xf]
      %v3627 = vld [vmem:[%s3612 + $0x38] sm:$0xf]
      %v3628 = vld [vmem:[%s3612 + $0x3c] sm:$0xf]
      %v3645 = vunpack.c.l.b16 %v3613
      %v3646 = vunpack.c.l.b16 %v3614
      %v3647 = vunpack.c.l.b16 %v3615
      %v3648 = vunpack.c.l.b16 %v3616
      %v3649 = vunpack.c.l.b16 %v3617
      %v3650 = vunpack.c.l.b16 %v3618
      %v3651 = vunpack.c.l.b16 %v3619
      %v3652 = vunpack.c.l.b16 %v3620
      %v3653 = vunpack.c.l.b16 %v3621
      %v3654 = vunpack.c.l.b16 %v3622
      %v3655 = vunpack.c.l.b16 %v3623
      %v3656 = vunpack.c.l.b16 %v3624
      %v3657 = vunpack.c.l.b16 %v3625
      %v3658 = vunpack.c.l.b16 %v3626
      %v3659 = vunpack.c.l.b16 %v3627
      %v3660 = vunpack.c.l.b16 %v3628
      %v3661 = vpack.c.b16 %v3646, %v3645
      %v3662 = vpack.c.b16 %v3648, %v3647
      %v3663 = vpack.c.b16 %v3650, %v3649
      %v3664 = vpack.c.b16 %v3652, %v3651
      %v3665 = vpack.c.b16 %v3654, %v3653
      %v3666 = vpack.c.b16 %v3656, %v3655
      %v3667 = vpack.c.b16 %v3658, %v3657
      %v3668 = vpack.c.b16 %v3660, %v3659
      %3677 = vmatprep.subr.bf16.mxu0 0
      %3678 = vmatpush1.bf16.msra.mxu0 %v3668
      %3679 = vmatprep.subr.bf16.mxu0 0
      %3680 = vmatpush1.bf16.msra.mxu0 %v3667
      %3681 = vmatprep.subr.bf16.mxu0 0
      %3682 = vmatpush1.bf16.msra.mxu0 %v3666
      %3683 = vmatprep.subr.bf16.mxu0 0
      %3684 = vmatpush1.bf16.msra.mxu0 %v3665
      %3685 = vmatprep.subr.bf16.mxu0 0
      %3686 = vmatpush1.bf16.msra.mxu0 %v3664
      %3687 = vmatprep.subr.bf16.mxu0 0
      %3688 = vmatpush1.bf16.msra.mxu0 %v3663
      %3689 = vmatprep.subr.bf16.mxu0 0
      %3690 = vmatpush1.bf16.msra.mxu0 %v3662
      %3691 = vmatprep.subr.bf16.mxu0 0
      %3692 = vmatpush1.bf16.msra.mxu0 %v3661
      %3693 = vmatprep.subr.bf16.mxu0 0
      %3694 = vmatpush2.bf16.msra.mxu0 0
      %3695 = vmatprep.subr.bf16.mxu0 0
      %3696 = vmatpush2.bf16.msra.mxu0 0
      %3697 = vmatprep.subr.bf16.mxu0 0
      %3698 = vmatpush2.bf16.msra.mxu0 0
      %3699 = vmatprep.subr.bf16.mxu0 0
      %3700 = vmatpush2.bf16.msra.mxu0 0
      %3701 = vmatprep.subr.bf16.mxu0 0
      %3702 = vmatpush2.bf16.msra.mxu0 0
      %3703 = vmatprep.subr.bf16.mxu0 0
      %3704 = vmatpush2.bf16.msra.mxu0 0
      %3705 = vmatprep.subr.bf16.mxu0 0
      %3706 = vmatpush2.bf16.msra.mxu0 0
      %3707 = vmatprep.subr.bf16.mxu0 0
      %3708 = vmatpush2.bf16.msra.mxu0 0
      %3709 = vmatprep.mubr.bf16.mxu0 0
      %3710 = vmatmul.mubr.bf16.gmra.mxu0 %v3594
      %v3711 = vpop.f32.mrf.mxu0
      %v3712 = vadd.f32 0.0, %v3711
      %v3713 = vpop.f32.mrf.mxu0
      %v3714 = vpop.f32.mrf.mxu0
      %v3715 = vadd.f32 0.0, %v3714
      %v3716 = vpop.f32.mrf.mxu0
      %3717 = vmatprep.mubr.bf16.mxu0 0
      %3718 = vmatmul.mubr.bf16.gmra.mxu0 %v3595
      %v3719 = vpop.f32.mrf.mxu0
      %v3720 = vadd.f32 0.0, %v3719
      %v3721 = vpop.f32.mrf.mxu0
      %v3722 = vpop.f32.mrf.mxu0
      %v3723 = vadd.f32 0.0, %v3722
      %v3724 = vpop.f32.mrf.mxu0
      %3725 = vmatprep.mubr.bf16.mxu0 0
      %3726 = vmatmul.mubr.bf16.gmra.mxu0 %v3596
      %v3727 = vpop.f32.mrf.mxu0
      %v3728 = vadd.f32 0.0, %v3727
      %v3729 = vpop.f32.mrf.mxu0
      %v3730 = vpop.f32.mrf.mxu0
      %v3731 = vadd.f32 0.0, %v3730
      %v3732 = vpop.f32.mrf.mxu0
      %3733 = vmatprep.mubr.bf16.mxu0 0
      %3734 = vmatmul.mubr.bf16.gmra.mxu0 %v3597
      %v3735 = vpop.f32.mrf.mxu0
      %v3736 = vadd.f32 0.0, %v3735
      %v3737 = vpop.f32.mrf.mxu0
      %v3738 = vpop.f32.mrf.mxu0
      %v3739 = vadd.f32 0.0, %v3738
      %v3740 = vpop.f32.mrf.mxu0
      %3741 = vmatprep.mubr.bf16.mxu0 0
      %3742 = vmatmul.mubr.bf16.gmra.mxu0 %v3598
      %v3743 = vpop.f32.mrf.mxu0
      %v3744 = vadd.f32 0.0, %v3743
      %v3745 = vpop.f32.mrf.mxu0
      %v3746 = vpop.f32.mrf.mxu0
      %v3747 = vadd.f32 0.0, %v3746
      %v3748 = vpop.f32.mrf.mxu0
      %3749 = vmatprep.mubr.bf16.mxu0 0
      %3750 = vmatmul.mubr.bf16.gmra.mxu0 %v3599
      %v3751 = vpop.f32.mrf.mxu0
      %v3752 = vadd.f32 0.0, %v3751
      %v3753 = vpop.f32.mrf.mxu0
      %v3754 = vpop.f32.mrf.mxu0
      %v3755 = vadd.f32 0.0, %v3754
      %v3756 = vpop.f32.mrf.mxu0
      %3757 = vmatprep.mubr.bf16.mxu0 0
      %3758 = vmatmul.mubr.bf16.gmra.mxu0 %v3600
      %v3759 = vpop.f32.mrf.mxu0
      %v3760 = vadd.f32 0.0, %v3759
      %v3761 = vpop.f32.mrf.mxu0
      %v3762 = vpop.f32.mrf.mxu0
      %v3763 = vadd.f32 0.0, %v3762
      %v3764 = vpop.f32.mrf.mxu0
      %3765 = vmatprep.mubr.bf16.mxu0 0
      %3766 = vmatmul.mubr.bf16.gmra.mxu0 %v3601
      %v3767 = vpop.f32.mrf.mxu0
      %v3768 = vadd.f32 0.0, %v3767
      %v3769 = vpop.f32.mrf.mxu0
      %v3770 = vpop.f32.mrf.mxu0
      %v3771 = vadd.f32 0.0, %v3770
      %v3772 = vpop.f32.mrf.mxu0
      %3773 = vmatprep.mubr.bf16.mxu0 0
      %3774 = vmatmul.mubr.bf16.gmra.mxu0 %v3602
      %v3775 = vpop.f32.mrf.mxu0
      %v3776 = vadd.f32 0.0, %v3775
      %v3777 = vpop.f32.mrf.mxu0
      %v3778 = vpop.f32.mrf.mxu0
      %v3779 = vadd.f32 0.0, %v3778
      %v3780 = vpop.f32.mrf.mxu0
      %3781 = vmatprep.mubr.bf16.mxu0 0
      %3782 = vmatmul.mubr.bf16.gmra.mxu0 %v3603
      %v3783 = vpop.f32.mrf.mxu0
      %v3784 = vadd.f32 0.0, %v3783
      %v3785 = vpop.f32.mrf.mxu0
      %v3786 = vpop.f32.mrf.mxu0
      %v3787 = vadd.f32 0.0, %v3786
      %v3788 = vpop.f32.mrf.mxu0
      %3789 = vmatprep.mubr.bf16.mxu0 0
      %3790 = vmatmul.mubr.bf16.gmra.mxu0 %v3604
      %v3791 = vpop.f32.mrf.mxu0
      %v3792 = vadd.f32 0.0, %v3791
      %v3793 = vpop.f32.mrf.mxu0
      %v3794 = vpop.f32.mrf.mxu0
      %v3795 = vadd.f32 0.0, %v3794
      %v3796 = vpop.f32.mrf.mxu0
      %3797 = vmatprep.mubr.bf16.mxu0 0
      %3798 = vmatmul.mubr.bf16.gmra.mxu0 %v3605
      %v3799 = vpop.f32.mrf.mxu0
      %v3800 = vadd.f32 0.0, %v3799
      %v3801 = vpop.f32.mrf.mxu0
      %v3802 = vpop.f32.mrf.mxu0
      %v3803 = vadd.f32 0.0, %v3802
      %v3804 = vpop.f32.mrf.mxu0
      %3805 = vmatprep.mubr.bf16.mxu0 0
      %3806 = vmatmul.mubr.bf16.gmra.mxu0 %v3606
      %v3807 = vpop.f32.mrf.mxu0
      %v3808 = vadd.f32 0.0, %v3807
      %v3809 = vpop.f32.mrf.mxu0
      %v3810 = vpop.f32.mrf.mxu0
      %v3811 = vadd.f32 0.0, %v3810
      %v3812 = vpop.f32.mrf.mxu0
      %3813 = vmatprep.mubr.bf16.mxu0 0
      %3814 = vmatmul.mubr.bf16.gmra.mxu0 %v3607
      %v3815 = vpop.f32.mrf.mxu0
      %v3816 = vadd.f32 0.0, %v3815
      %v3817 = vpop.f32.mrf.mxu0
      %v3818 = vpop.f32.mrf.mxu0
      %v3819 = vadd.f32 0.0, %v3818
      %v3820 = vpop.f32.mrf.mxu0
      %3821 = vmatprep.mubr.bf16.mxu0 0
      %3822 = vmatmul.mubr.bf16.gmra.mxu0 %v3608
      %v3823 = vpop.f32.mrf.mxu0
      %v3824 = vadd.f32 0.0, %v3823
      %v3825 = vpop.f32.mrf.mxu0
      %v3826 = vpop.f32.mrf.mxu0
      %v3827 = vadd.f32 0.0, %v3826
      %v3828 = vpop.f32.mrf.mxu0
      %3829 = vmatprep.mubr.bf16.mxu0 0
      %3830 = vmatmul.mubr.bf16.gmra.mxu0 %v3609
      %v3831 = vpop.f32.mrf.mxu0
      %v3832 = vadd.f32 0.0, %v3831
      %v3833 = vpop.f32.mrf.mxu0
      %v3834 = vpop.f32.mrf.mxu0
      %v3835 = vadd.f32 0.0, %v3834
      %v3836 = vpop.f32.mrf.mxu0
      %3837 = vmatprep.mubr.bf16.mxu0 0
      %3838 = vmatmul.mubr.bf16.gmra.mxu0 %v3610
      %v3839 = vpop.f32.mrf.mxu0
      %v3840 = vadd.f32 0.0, %v3839
      %v3841 = vpop.f32.mrf.mxu0
      %v3842 = vpop.f32.mrf.mxu0
      %v3843 = vadd.f32 0.0, %v3842
      %v3844 = vpop.f32.mrf.mxu0
      %3845 = vmatprep.mubr.bf16.mxu0 0
      %3846 = vmatmul.mubr.bf16.gmra.mxu0 %v3611
      %v3847 = vpop.f32.mrf.mxu0
      %v3848 = vadd.f32 0.0, %v3847
      %v3849 = vpop.f32.mrf.mxu0
      %v3850 = vpop.f32.mrf.mxu0
      %v3851 = vadd.f32 0.0, %v3850
      %v3852 = vpop.f32.mrf.mxu0
      %3853 = vdwg.mxu0
      %v3854 = vadd.f32 %v3522, %v3712
      %v3855 = vadd.f32 %v3523, %v3715
      %v3856 = vadd.f32 %v3524, %v3720
      %v3857 = vadd.f32 %v3525, %v3723
      %v3858 = vadd.f32 %v3526, %v3728
      %v3859 = vadd.f32 %v3527, %v3731
      %v3860 = vadd.f32 %v3528, %v3736
      %v3861 = vadd.f32 %v3529, %v3739
      %v3862 = vadd.f32 %v3530, %v3744
      %v3863 = vadd.f32 %v3531, %v3747
      %v3864 = vadd.f32 %v3532, %v3752
      %v3865 = vadd.f32 %v3533, %v3755
      %v3866 = vadd.f32 %v3534, %v3760
      %v3867 = vadd.f32 %v3535, %v3763
      %v3868 = vadd.f32 %v3536, %v3768
      %v3869 = vadd.f32 %v3537, %v3771
      %v3870 = vadd.f32 %v3538, %v3776
      %v3871 = vadd.f32 %v3539, %v3779
      %v3872 = vadd.f32 %v3540, %v3784
      %v3873 = vadd.f32 %v3541, %v3787
      %v3874 = vadd.f32 %v3542, %v3792
      %v3875 = vadd.f32 %v3543, %v3795
      %v3876 = vadd.f32 %v3544, %v3800
      %v3877 = vadd.f32 %v3545, %v3803
      %v3878 = vadd.f32 %v3546, %v3808
      %v3879 = vadd.f32 %v3547, %v3811
      %v3880 = vadd.f32 %v3548, %v3816
      %v3881 = vadd.f32 %v3549, %v3819
      %v3882 = vadd.f32 %v3550, %v3824
      %v3883 = vadd.f32 %v3551, %v3827
      %v3884 = vadd.f32 %v3552, %v3832
      %v3885 = vadd.f32 %v3553, %v3835
      %v3886 = vadd.f32 %v3554, %v3840
      %v3887 = vadd.f32 %v3555, %v3843
      %v3888 = vadd.f32 %v3556, %v3848
      %v3889 = vadd.f32 %v3557, %v3851
      %v3890 = vld [vmem:[#allocation2 + $0x32] sm:$0xff]
      %v3891 = vld [vmem:[#allocation2 + $0x3a] sm:$0xff]
      %v3892 = vld [vmem:[#allocation2 + $0x42] sm:$0xff]
      %v3893 = vld [vmem:[#allocation2 + $0x4a] sm:$0xff]
      %v3894 = vld [vmem:[#allocation2 + $0x52] sm:$0xff]
      %v3895 = vld [vmem:[#allocation2 + $0x5a] sm:$0xff]
      %v3896 = vld [vmem:[#allocation2 + $0x62] sm:$0xff]
      %v3897 = vld [vmem:[#allocation2 + $0x6a] sm:$0xff]
      %v3898 = vld [vmem:[#allocation2 + $0x72] sm:$0xff]
      %v3899 = vld [vmem:[#allocation2 + $0x7a] sm:$0xff]
      %v3900 = vld [vmem:[#allocation2 + $0x82] sm:$0xff]
      %v3901 = vld [vmem:[#allocation2 + $0x8a] sm:$0xff]
      %v3902 = vld [vmem:[#allocation2 + $0x92] sm:$0xff]
      %v3903 = vld [vmem:[#allocation2 + $0x9a] sm:$0xff]
      %v3904 = vld [vmem:[#allocation2 + $0xa2] sm:$0xff]
      %v3905 = vld [vmem:[#allocation2 + $0xaa] sm:$0xff]
      %v3906 = vld [vmem:[#allocation2 + $0xb2] sm:$0xff]
      %v3907 = vld [vmem:[#allocation2 + $0xba] sm:$0xff]
      %v3908 = vld [vmem:[#allocation2 + $0xc2] sm:$0xff]
      %v3909 = vld [vmem:[#allocation2 + $0xca] sm:$0xff]
      %v3910 = vld [vmem:[#allocation2 + $0xd2] sm:$0xff]
      %v3911 = vld [vmem:[#allocation2 + $0xda] sm:$0xff]
      %v3912 = vld [vmem:[#allocation2 + $0xe2] sm:$0xff]
      %v3913 = vld [vmem:[#allocation2 + $0xea] sm:$0xff]
      %v3914 = vld [vmem:[#allocation2 + $0xf2] sm:$0xff]
      %v3915 = vld [vmem:[#allocation2 + $0xfa] sm:$0xff]
      %v3916 = vld [vmem:[#allocation2 + $0x102] sm:$0xff]
      %v3917 = vld [vmem:[#allocation2 + $0x10a] sm:$0xff]
      %v3918 = vld [vmem:[#allocation2 + $0x112] sm:$0xff]
      %v3919 = vld [vmem:[#allocation2 + $0x11a] sm:$0xff]
      %v3920 = vld [vmem:[#allocation2 + $0x122] sm:$0xff]
      %v3921 = vld [vmem:[#allocation2 + $0x12a] sm:$0xff]
      %v3922 = vld [vmem:[#allocation2 + $0x132] sm:$0xff]
      %v3923 = vld [vmem:[#allocation2 + $0x13a] sm:$0xff]
      %v3924 = vld [vmem:[#allocation2 + $0x142] sm:$0xff]
      %v3925 = vld [vmem:[#allocation2 + $0x14a] sm:$0xff]
      %v3926 = vpack.c.bf16 %v3891, %v3890
      %v3927 = vpack.c.bf16 %v3893, %v3892
      %v3928 = vpack.c.bf16 %v3895, %v3894
      %v3929 = vpack.c.bf16 %v3897, %v3896
      %v3930 = vpack.c.bf16 %v3899, %v3898
      %v3931 = vpack.c.bf16 %v3901, %v3900
      %v3932 = vpack.c.bf16 %v3903, %v3902
      %v3933 = vpack.c.bf16 %v3905, %v3904
      %v3934 = vpack.c.bf16 %v3907, %v3906
      %v3935 = vpack.c.bf16 %v3909, %v3908
      %v3936 = vpack.c.bf16 %v3911, %v3910
      %v3937 = vpack.c.bf16 %v3913, %v3912
      %v3938 = vpack.c.bf16 %v3915, %v3914
      %v3939 = vpack.c.bf16 %v3917, %v3916
      %v3940 = vpack.c.bf16 %v3919, %v3918
      %v3941 = vpack.c.bf16 %v3921, %v3920
      %v3942 = vpack.c.bf16 %v3923, %v3922
      %v3943 = vpack.c.bf16 %v3925, %v3924
      %s3944 = scalar_lea.vmem %s4, 448
      %v3945 = vld [vmem:[%s3944] sm:$0xf]
      %v3946 = vld [vmem:[%s3944 + $0x4] sm:$0xf]
      %v3947 = vld [vmem:[%s3944 + $0x8] sm:$0xf]
      %v3948 = vld [vmem:[%s3944 + $0xc] sm:$0xf]
      %v3949 = vld [vmem:[%s3944 + $0x10] sm:$0xf]
      %v3950 = vld [vmem:[%s3944 + $0x14] sm:$0xf]
      %v3951 = vld [vmem:[%s3944 + $0x18] sm:$0xf]
      %v3952 = vld [vmem:[%s3944 + $0x1c] sm:$0xf]
      %v3953 = vld [vmem:[%s3944 + $0x20] sm:$0xf]
      %v3954 = vld [vmem:[%s3944 + $0x24] sm:$0xf]
      %v3955 = vld [vmem:[%s3944 + $0x28] sm:$0xf]
      %v3956 = vld [vmem:[%s3944 + $0x2c] sm:$0xf]
      %v3957 = vld [vmem:[%s3944 + $0x30] sm:$0xf]
      %v3958 = vld [vmem:[%s3944 + $0x34] sm:$0xf]
      %v3959 = vld [vmem:[%s3944 + $0x38] sm:$0xf]
      %v3960 = vld [vmem:[%s3944 + $0x3c] sm:$0xf]
      %v3977 = vunpack.c.l.b16 %v3945
      %v3978 = vunpack.c.l.b16 %v3946
      %v3979 = vunpack.c.l.b16 %v3947
      %v3980 = vunpack.c.l.b16 %v3948
      %v3981 = vunpack.c.l.b16 %v3949
      %v3982 = vunpack.c.l.b16 %v3950
      %v3983 = vunpack.c.l.b16 %v3951
      %v3984 = vunpack.c.l.b16 %v3952
      %v3985 = vunpack.c.l.b16 %v3953
      %v3986 = vunpack.c.l.b16 %v3954
      %v3987 = vunpack.c.l.b16 %v3955
      %v3988 = vunpack.c.l.b16 %v3956
      %v3989 = vunpack.c.l.b16 %v3957
      %v3990 = vunpack.c.l.b16 %v3958
      %v3991 = vunpack.c.l.b16 %v3959
      %v3992 = vunpack.c.l.b16 %v3960
      %v3993 = vpack.c.b16 %v3978, %v3977
      %v3994 = vpack.c.b16 %v3980, %v3979
      %v3995 = vpack.c.b16 %v3982, %v3981
      %v3996 = vpack.c.b16 %v3984, %v3983
      %v3997 = vpack.c.b16 %v3986, %v3985
      %v3998 = vpack.c.b16 %v3988, %v3987
      %v3999 = vpack.c.b16 %v3990, %v3989
      %v4000 = vpack.c.b16 %v3992, %v3991
      %4009 = vmatprep.subr.bf16.mxu0 0
      %4010 = vmatpush1.bf16.msra.mxu0 %v4000
      %4011 = vmatprep.subr.bf16.mxu0 0
      %4012 = vmatpush1.bf16.msra.mxu0 %v3999
      %4013 = vmatprep.subr.bf16.mxu0 0
      %4014 = vmatpush1.bf16.msra.mxu0 %v3998
      %4015 = vmatprep.subr.bf16.mxu0 0
      %4016 = vmatpush1.bf16.msra.mxu0 %v3997
      %4017 = vmatprep.subr.bf16.mxu0 0
      %4018 = vmatpush1.bf16.msra.mxu0 %v3996
      %4019 = vmatprep.subr.bf16.mxu0 0
      %4020 = vmatpush1.bf16.msra.mxu0 %v3995
      %4021 = vmatprep.subr.bf16.mxu0 0
      %4022 = vmatpush1.bf16.msra.mxu0 %v3994
      %4023 = vmatprep.subr.bf16.mxu0 0
      %4024 = vmatpush1.bf16.msra.mxu0 %v3993
      %4025 = vmatprep.subr.bf16.mxu0 0
      %4026 = vmatpush2.bf16.msra.mxu0 0
      %4027 = vmatprep.subr.bf16.mxu0 0
      %4028 = vmatpush2.bf16.msra.mxu0 0
      %4029 = vmatprep.subr.bf16.mxu0 0
      %4030 = vmatpush2.bf16.msra.mxu0 0
      %4031 = vmatprep.subr.bf16.mxu0 0
      %4032 = vmatpush2.bf16.msra.mxu0 0
      %4033 = vmatprep.subr.bf16.mxu0 0
      %4034 = vmatpush2.bf16.msra.mxu0 0
      %4035 = vmatprep.subr.bf16.mxu0 0
      %4036 = vmatpush2.bf16.msra.mxu0 0
      %4037 = vmatprep.subr.bf16.mxu0 0
      %4038 = vmatpush2.bf16.msra.mxu0 0
      %4039 = vmatprep.subr.bf16.mxu0 0
      %4040 = vmatpush2.bf16.msra.mxu0 0
      %4041 = vmatprep.mubr.bf16.mxu0 0
      %4042 = vmatmul.mubr.bf16.gmra.mxu0 %v3926
      %v4043 = vpop.f32.mrf.mxu0
      %v4044 = vadd.f32 0.0, %v4043
      %v4045 = vpop.f32.mrf.mxu0
      %v4046 = vpop.f32.mrf.mxu0
      %v4047 = vadd.f32 0.0, %v4046
      %v4048 = vpop.f32.mrf.mxu0
      %4049 = vmatprep.mubr.bf16.mxu0 0
      %4050 = vmatmul.mubr.bf16.gmra.mxu0 %v3927
      %v4051 = vpop.f32.mrf.mxu0
      %v4052 = vadd.f32 0.0, %v4051
      %v4053 = vpop.f32.mrf.mxu0
      %v4054 = vpop.f32.mrf.mxu0
      %v4055 = vadd.f32 0.0, %v4054
      %v4056 = vpop.f32.mrf.mxu0
      %4057 = vmatprep.mubr.bf16.mxu0 0
      %4058 = vmatmul.mubr.bf16.gmra.mxu0 %v3928
      %v4059 = vpop.f32.mrf.mxu0
      %v4060 = vadd.f32 0.0, %v4059
      %v4061 = vpop.f32.mrf.mxu0
      %v4062 = vpop.f32.mrf.mxu0
      %v4063 = vadd.f32 0.0, %v4062
      %v4064 = vpop.f32.mrf.mxu0
      %4065 = vmatprep.mubr.bf16.mxu0 0
      %4066 = vmatmul.mubr.bf16.gmra.mxu0 %v3929
      %v4067 = vpop.f32.mrf.mxu0
      %v4068 = vadd.f32 0.0, %v4067
      %v4069 = vpop.f32.mrf.mxu0
      %v4070 = vpop.f32.mrf.mxu0
      %v4071 = vadd.f32 0.0, %v4070
      %v4072 = vpop.f32.mrf.mxu0
      %4073 = vmatprep.mubr.bf16.mxu0 0
      %4074 = vmatmul.mubr.bf16.gmra.mxu0 %v3930
      %v4075 = vpop.f32.mrf.mxu0
      %v4076 = vadd.f32 0.0, %v4075
      %v4077 = vpop.f32.mrf.mxu0
      %v4078 = vpop.f32.mrf.mxu0
      %v4079 = vadd.f32 0.0, %v4078
      %v4080 = vpop.f32.mrf.mxu0
      %4081 = vmatprep.mubr.bf16.mxu0 0
      %4082 = vmatmul.mubr.bf16.gmra.mxu0 %v3931
      %v4083 = vpop.f32.mrf.mxu0
      %v4084 = vadd.f32 0.0, %v4083
      %v4085 = vpop.f32.mrf.mxu0
      %v4086 = vpop.f32.mrf.mxu0
      %v4087 = vadd.f32 0.0, %v4086
      %v4088 = vpop.f32.mrf.mxu0
      %4089 = vmatprep.mubr.bf16.mxu0 0
      %4090 = vmatmul.mubr.bf16.gmra.mxu0 %v3932
      %v4091 = vpop.f32.mrf.mxu0
      %v4092 = vadd.f32 0.0, %v4091
      %v4093 = vpop.f32.mrf.mxu0
      %v4094 = vpop.f32.mrf.mxu0
      %v4095 = vadd.f32 0.0, %v4094
      %v4096 = vpop.f32.mrf.mxu0
      %4097 = vmatprep.mubr.bf16.mxu0 0
      %4098 = vmatmul.mubr.bf16.gmra.mxu0 %v3933
      %v4099 = vpop.f32.mrf.mxu0
      %v4100 = vadd.f32 0.0, %v4099
      %v4101 = vpop.f32.mrf.mxu0
      %v4102 = vpop.f32.mrf.mxu0
      %v4103 = vadd.f32 0.0, %v4102
      %v4104 = vpop.f32.mrf.mxu0
      %4105 = vmatprep.mubr.bf16.mxu0 0
      %4106 = vmatmul.mubr.bf16.gmra.mxu0 %v3934
      %v4107 = vpop.f32.mrf.mxu0
      %v4108 = vadd.f32 0.0, %v4107
      %v4109 = vpop.f32.mrf.mxu0
      %v4110 = vpop.f32.mrf.mxu0
      %v4111 = vadd.f32 0.0, %v4110
      %v4112 = vpop.f32.mrf.mxu0
      %4113 = vmatprep.mubr.bf16.mxu0 0
      %4114 = vmatmul.mubr.bf16.gmra.mxu0 %v3935
      %v4115 = vpop.f32.mrf.mxu0
      %v4116 = vadd.f32 0.0, %v4115
      %v4117 = vpop.f32.mrf.mxu0
      %v4118 = vpop.f32.mrf.mxu0
      %v4119 = vadd.f32 0.0, %v4118
      %v4120 = vpop.f32.mrf.mxu0
      %4121 = vmatprep.mubr.bf16.mxu0 0
      %4122 = vmatmul.mubr.bf16.gmra.mxu0 %v3936
      %v4123 = vpop.f32.mrf.mxu0
      %v4124 = vadd.f32 0.0, %v4123
      %v4125 = vpop.f32.mrf.mxu0
      %v4126 = vpop.f32.mrf.mxu0
      %v4127 = vadd.f32 0.0, %v4126
      %v4128 = vpop.f32.mrf.mxu0
      %4129 = vmatprep.mubr.bf16.mxu0 0
      %4130 = vmatmul.mubr.bf16.gmra.mxu0 %v3937
      %v4131 = vpop.f32.mrf.mxu0
      %v4132 = vadd.f32 0.0, %v4131
      %v4133 = vpop.f32.mrf.mxu0
      %v4134 = vpop.f32.mrf.mxu0
      %v4135 = vadd.f32 0.0, %v4134
      %v4136 = vpop.f32.mrf.mxu0
      %4137 = vmatprep.mubr.bf16.mxu0 0
      %4138 = vmatmul.mubr.bf16.gmra.mxu0 %v3938
      %v4139 = vpop.f32.mrf.mxu0
      %v4140 = vadd.f32 0.0, %v4139
      %v4141 = vpop.f32.mrf.mxu0
      %v4142 = vpop.f32.mrf.mxu0
      %v4143 = vadd.f32 0.0, %v4142
      %v4144 = vpop.f32.mrf.mxu0
      %4145 = vmatprep.mubr.bf16.mxu0 0
      %4146 = vmatmul.mubr.bf16.gmra.mxu0 %v3939
      %v4147 = vpop.f32.mrf.mxu0
      %v4148 = vadd.f32 0.0, %v4147
      %v4149 = vpop.f32.mrf.mxu0
      %v4150 = vpop.f32.mrf.mxu0
      %v4151 = vadd.f32 0.0, %v4150
      %v4152 = vpop.f32.mrf.mxu0
      %4153 = vmatprep.mubr.bf16.mxu0 0
      %4154 = vmatmul.mubr.bf16.gmra.mxu0 %v3940
      %v4155 = vpop.f32.mrf.mxu0
      %v4156 = vadd.f32 0.0, %v4155
      %v4157 = vpop.f32.mrf.mxu0
      %v4158 = vpop.f32.mrf.mxu0
      %v4159 = vadd.f32 0.0, %v4158
      %v4160 = vpop.f32.mrf.mxu0
      %4161 = vmatprep.mubr.bf16.mxu0 0
      %4162 = vmatmul.mubr.bf16.gmra.mxu0 %v3941
      %v4163 = vpop.f32.mrf.mxu0
      %v4164 = vadd.f32 0.0, %v4163
      %v4165 = vpop.f32.mrf.mxu0
      %v4166 = vpop.f32.mrf.mxu0
      %v4167 = vadd.f32 0.0, %v4166
      %v4168 = vpop.f32.mrf.mxu0
      %4169 = vmatprep.mubr.bf16.mxu0 0
      %4170 = vmatmul.mubr.bf16.gmra.mxu0 %v3942
      %v4171 = vpop.f32.mrf.mxu0
      %v4172 = vadd.f32 0.0, %v4171
      %v4173 = vpop.f32.mrf.mxu0
      %v4174 = vpop.f32.mrf.mxu0
      %v4175 = vadd.f32 0.0, %v4174
      %v4176 = vpop.f32.mrf.mxu0
      %4177 = vmatprep.mubr.bf16.mxu0 0
      %4178 = vmatmul.mubr.bf16.gmra.mxu0 %v3943
      %v4179 = vpop.f32.mrf.mxu0
      %v4180 = vadd.f32 0.0, %v4179
      %v4181 = vpop.f32.mrf.mxu0
      %v4182 = vpop.f32.mrf.mxu0
      %v4183 = vadd.f32 0.0, %v4182
      %v4184 = vpop.f32.mrf.mxu0
      %4185 = vdwg.mxu0
      %v4186 = vadd.f32 %v3854, %v4044
      %v4187 = vadd.f32 %v3855, %v4047
      %v4188 = vadd.f32 %v3856, %v4052
      %v4189 = vadd.f32 %v3857, %v4055
      %v4190 = vadd.f32 %v3858, %v4060
      %v4191 = vadd.f32 %v3859, %v4063
      %v4192 = vadd.f32 %v3860, %v4068
      %v4193 = vadd.f32 %v3861, %v4071
      %v4194 = vadd.f32 %v3862, %v4076
      %v4195 = vadd.f32 %v3863, %v4079
      %v4196 = vadd.f32 %v3864, %v4084
      %v4197 = vadd.f32 %v3865, %v4087
      %v4198 = vadd.f32 %v3866, %v4092
      %v4199 = vadd.f32 %v3867, %v4095
      %v4200 = vadd.f32 %v3868, %v4100
      %v4201 = vadd.f32 %v3869, %v4103
      %v4202 = vadd.f32 %v3870, %v4108
      %v4203 = vadd.f32 %v3871, %v4111
      %v4204 = vadd.f32 %v3872, %v4116
      %v4205 = vadd.f32 %v3873, %v4119
      %v4206 = vadd.f32 %v3874, %v4124
      %v4207 = vadd.f32 %v3875, %v4127
      %v4208 = vadd.f32 %v3876, %v4132
      %v4209 = vadd.f32 %v3877, %v4135
      %v4210 = vadd.f32 %v3878, %v4140
      %v4211 = vadd.f32 %v3879, %v4143
      %v4212 = vadd.f32 %v3880, %v4148
      %v4213 = vadd.f32 %v3881, %v4151
      %v4214 = vadd.f32 %v3882, %v4156
      %v4215 = vadd.f32 %v3883, %v4159
      %v4216 = vadd.f32 %v3884, %v4164
      %v4217 = vadd.f32 %v3885, %v4167
      %v4218 = vadd.f32 %v3886, %v4172
      %v4219 = vadd.f32 %v3887, %v4175
      %v4220 = vadd.f32 %v3888, %v4180
      %v4221 = vadd.f32 %v3889, %v4183
      %v4222 = vld [vmem:[#allocation2 + $0x33] sm:$0xff]
      %v4223 = vld [vmem:[#allocation2 + $0x3b] sm:$0xff]
      %v4224 = vld [vmem:[#allocation2 + $0x43] sm:$0xff]
      %v4225 = vld [vmem:[#allocation2 + $0x4b] sm:$0xff]
      %v4226 = vld [vmem:[#allocation2 + $0x53] sm:$0xff]
      %v4227 = vld [vmem:[#allocation2 + $0x5b] sm:$0xff]
      %v4228 = vld [vmem:[#allocation2 + $0x63] sm:$0xff]
      %v4229 = vld [vmem:[#allocation2 + $0x6b] sm:$0xff]
      %v4230 = vld [vmem:[#allocation2 + $0x73] sm:$0xff]
      %v4231 = vld [vmem:[#allocation2 + $0x7b] sm:$0xff]
      %v4232 = vld [vmem:[#allocation2 + $0x83] sm:$0xff]
      %v4233 = vld [vmem:[#allocation2 + $0x8b] sm:$0xff]
      %v4234 = vld [vmem:[#allocation2 + $0x93] sm:$0xff]
      %v4235 = vld [vmem:[#allocation2 + $0x9b] sm:$0xff]
      %v4236 = vld [vmem:[#allocation2 + $0xa3] sm:$0xff]
      %v4237 = vld [vmem:[#allocation2 + $0xab] sm:$0xff]
      %v4238 = vld [vmem:[#allocation2 + $0xb3] sm:$0xff]
      %v4239 = vld [vmem:[#allocation2 + $0xbb] sm:$0xff]
      %v4240 = vld [vmem:[#allocation2 + $0xc3] sm:$0xff]
      %v4241 = vld [vmem:[#allocation2 + $0xcb] sm:$0xff]
      %v4242 = vld [vmem:[#allocation2 + $0xd3] sm:$0xff]
      %v4243 = vld [vmem:[#allocation2 + $0xdb] sm:$0xff]
      %v4244 = vld [vmem:[#allocation2 + $0xe3] sm:$0xff]
      %v4245 = vld [vmem:[#allocation2 + $0xeb] sm:$0xff]
      %v4246 = vld [vmem:[#allocation2 + $0xf3] sm:$0xff]
      %v4247 = vld [vmem:[#allocation2 + $0xfb] sm:$0xff]
      %v4248 = vld [vmem:[#allocation2 + $0x103] sm:$0xff]
      %v4249 = vld [vmem:[#allocation2 + $0x10b] sm:$0xff]
      %v4250 = vld [vmem:[#allocation2 + $0x113] sm:$0xff]
      %v4251 = vld [vmem:[#allocation2 + $0x11b] sm:$0xff]
      %v4252 = vld [vmem:[#allocation2 + $0x123] sm:$0xff]
      %v4253 = vld [vmem:[#allocation2 + $0x12b] sm:$0xff]
      %v4254 = vld [vmem:[#allocation2 + $0x133] sm:$0xff]
      %v4255 = vld [vmem:[#allocation2 + $0x13b] sm:$0xff]
      %v4256 = vld [vmem:[#allocation2 + $0x143] sm:$0xff]
      %v4257 = vld [vmem:[#allocation2 + $0x14b] sm:$0xff]
      %v4258 = vpack.c.bf16 %v4223, %v4222
      %v4259 = vpack.c.bf16 %v4225, %v4224
      %v4260 = vpack.c.bf16 %v4227, %v4226
      %v4261 = vpack.c.bf16 %v4229, %v4228
      %v4262 = vpack.c.bf16 %v4231, %v4230
      %v4263 = vpack.c.bf16 %v4233, %v4232
      %v4264 = vpack.c.bf16 %v4235, %v4234
      %v4265 = vpack.c.bf16 %v4237, %v4236
      %v4266 = vpack.c.bf16 %v4239, %v4238
      %v4267 = vpack.c.bf16 %v4241, %v4240
      %v4268 = vpack.c.bf16 %v4243, %v4242
      %v4269 = vpack.c.bf16 %v4245, %v4244
      %v4270 = vpack.c.bf16 %v4247, %v4246
      %v4271 = vpack.c.bf16 %v4249, %v4248
      %v4272 = vpack.c.bf16 %v4251, %v4250
      %v4273 = vpack.c.bf16 %v4253, %v4252
      %v4274 = vpack.c.bf16 %v4255, %v4254
      %v4275 = vpack.c.bf16 %v4257, %v4256
      %s4276 = scalar_lea.vmem %s4, 512
      %v4277 = vld [vmem:[%s4276] sm:$0xf]
      %v4278 = vld [vmem:[%s4276 + $0x4] sm:$0xf]
      %v4279 = vld [vmem:[%s4276 + $0x8] sm:$0xf]
      %v4280 = vld [vmem:[%s4276 + $0xc] sm:$0xf]
      %v4281 = vld [vmem:[%s4276 + $0x10] sm:$0xf]
      %v4282 = vld [vmem:[%s4276 + $0x14] sm:$0xf]
      %v4283 = vld [vmem:[%s4276 + $0x18] sm:$0xf]
      %v4284 = vld [vmem:[%s4276 + $0x1c] sm:$0xf]
      %v4285 = vld [vmem:[%s4276 + $0x20] sm:$0xf]
      %v4286 = vld [vmem:[%s4276 + $0x24] sm:$0xf]
      %v4287 = vld [vmem:[%s4276 + $0x28] sm:$0xf]
      %v4288 = vld [vmem:[%s4276 + $0x2c] sm:$0xf]
      %v4289 = vld [vmem:[%s4276 + $0x30] sm:$0xf]
      %v4290 = vld [vmem:[%s4276 + $0x34] sm:$0xf]
      %v4291 = vld [vmem:[%s4276 + $0x38] sm:$0xf]
      %v4292 = vld [vmem:[%s4276 + $0x3c] sm:$0xf]
      %v4309 = vunpack.c.l.b16 %v4277
      %v4310 = vunpack.c.l.b16 %v4278
      %v4311 = vunpack.c.l.b16 %v4279
      %v4312 = vunpack.c.l.b16 %v4280
      %v4313 = vunpack.c.l.b16 %v4281
      %v4314 = vunpack.c.l.b16 %v4282
      %v4315 = vunpack.c.l.b16 %v4283
      %v4316 = vunpack.c.l.b16 %v4284
      %v4317 = vunpack.c.l.b16 %v4285
      %v4318 = vunpack.c.l.b16 %v4286
      %v4319 = vunpack.c.l.b16 %v4287
      %v4320 = vunpack.c.l.b16 %v4288
      %v4321 = vunpack.c.l.b16 %v4289
      %v4322 = vunpack.c.l.b16 %v4290
      %v4323 = vunpack.c.l.b16 %v4291
      %v4324 = vunpack.c.l.b16 %v4292
      %v4325 = vpack.c.b16 %v4310, %v4309
      %v4326 = vpack.c.b16 %v4312, %v4311
      %v4327 = vpack.c.b16 %v4314, %v4313
      %v4328 = vpack.c.b16 %v4316, %v4315
      %v4329 = vpack.c.b16 %v4318, %v4317
      %v4330 = vpack.c.b16 %v4320, %v4319
      %v4331 = vpack.c.b16 %v4322, %v4321
      %v4332 = vpack.c.b16 %v4324, %v4323
      %4341 = vmatprep.subr.bf16.mxu0 0
      %4342 = vmatpush1.bf16.msra.mxu0 %v4332
      %4343 = vmatprep.subr.bf16.mxu0 0
      %4344 = vmatpush1.bf16.msra.mxu0 %v4331
      %4345 = vmatprep.subr.bf16.mxu0 0
      %4346 = vmatpush1.bf16.msra.mxu0 %v4330
      %4347 = vmatprep.subr.bf16.mxu0 0
      %4348 = vmatpush1.bf16.msra.mxu0 %v4329
      %4349 = vmatprep.subr.bf16.mxu0 0
      %4350 = vmatpush1.bf16.msra.mxu0 %v4328
      %4351 = vmatprep.subr.bf16.mxu0 0
      %4352 = vmatpush1.bf16.msra.mxu0 %v4327
      %4353 = vmatprep.subr.bf16.mxu0 0
      %4354 = vmatpush1.bf16.msra.mxu0 %v4326
      %4355 = vmatprep.subr.bf16.mxu0 0
      %4356 = vmatpush1.bf16.msra.mxu0 %v4325
      %4357 = vmatprep.subr.bf16.mxu0 0
      %4358 = vmatpush2.bf16.msra.mxu0 0
      %4359 = vmatprep.subr.bf16.mxu0 0
      %4360 = vmatpush2.bf16.msra.mxu0 0
      %4361 = vmatprep.subr.bf16.mxu0 0
      %4362 = vmatpush2.bf16.msra.mxu0 0
      %4363 = vmatprep.subr.bf16.mxu0 0
      %4364 = vmatpush2.bf16.msra.mxu0 0
      %4365 = vmatprep.subr.bf16.mxu0 0
      %4366 = vmatpush2.bf16.msra.mxu0 0
      %4367 = vmatprep.subr.bf16.mxu0 0
      %4368 = vmatpush2.bf16.msra.mxu0 0
      %4369 = vmatprep.subr.bf16.mxu0 0
      %4370 = vmatpush2.bf16.msra.mxu0 0
      %4371 = vmatprep.subr.bf16.mxu0 0
      %4372 = vmatpush2.bf16.msra.mxu0 0
      %4373 = vmatprep.mubr.bf16.mxu0 0
      %4374 = vmatmul.mubr.bf16.gmra.mxu0 %v4258
      %v4375 = vpop.f32.mrf.mxu0
      %v4376 = vadd.f32 0.0, %v4375
      %v4377 = vpop.f32.mrf.mxu0
      %v4378 = vpop.f32.mrf.mxu0
      %v4379 = vadd.f32 0.0, %v4378
      %v4380 = vpop.f32.mrf.mxu0
      %4381 = vmatprep.mubr.bf16.mxu0 0
      %4382 = vmatmul.mubr.bf16.gmra.mxu0 %v4259
      %v4383 = vpop.f32.mrf.mxu0
      %v4384 = vadd.f32 0.0, %v4383
      %v4385 = vpop.f32.mrf.mxu0
      %v4386 = vpop.f32.mrf.mxu0
      %v4387 = vadd.f32 0.0, %v4386
      %v4388 = vpop.f32.mrf.mxu0
      %4389 = vmatprep.mubr.bf16.mxu0 0
      %4390 = vmatmul.mubr.bf16.gmra.mxu0 %v4260
      %v4391 = vpop.f32.mrf.mxu0
      %v4392 = vadd.f32 0.0, %v4391
      %v4393 = vpop.f32.mrf.mxu0
      %v4394 = vpop.f32.mrf.mxu0
      %v4395 = vadd.f32 0.0, %v4394
      %v4396 = vpop.f32.mrf.mxu0
      %4397 = vmatprep.mubr.bf16.mxu0 0
      %4398 = vmatmul.mubr.bf16.gmra.mxu0 %v4261
      %v4399 = vpop.f32.mrf.mxu0
      %v4400 = vadd.f32 0.0, %v4399
      %v4401 = vpop.f32.mrf.mxu0
      %v4402 = vpop.f32.mrf.mxu0
      %v4403 = vadd.f32 0.0, %v4402
      %v4404 = vpop.f32.mrf.mxu0
      %4405 = vmatprep.mubr.bf16.mxu0 0
      %4406 = vmatmul.mubr.bf16.gmra.mxu0 %v4262
      %v4407 = vpop.f32.mrf.mxu0
      %v4408 = vadd.f32 0.0, %v4407
      %v4409 = vpop.f32.mrf.mxu0
      %v4410 = vpop.f32.mrf.mxu0
      %v4411 = vadd.f32 0.0, %v4410
      %v4412 = vpop.f32.mrf.mxu0
      %4413 = vmatprep.mubr.bf16.mxu0 0
      %4414 = vmatmul.mubr.bf16.gmra.mxu0 %v4263
      %v4415 = vpop.f32.mrf.mxu0
      %v4416 = vadd.f32 0.0, %v4415
      %v4417 = vpop.f32.mrf.mxu0
      %v4418 = vpop.f32.mrf.mxu0
      %v4419 = vadd.f32 0.0, %v4418
      %v4420 = vpop.f32.mrf.mxu0
      %4421 = vmatprep.mubr.bf16.mxu0 0
      %4422 = vmatmul.mubr.bf16.gmra.mxu0 %v4264
      %v4423 = vpop.f32.mrf.mxu0
      %v4424 = vadd.f32 0.0, %v4423
      %v4425 = vpop.f32.mrf.mxu0
      %v4426 = vpop.f32.mrf.mxu0
      %v4427 = vadd.f32 0.0, %v4426
      %v4428 = vpop.f32.mrf.mxu0
      %4429 = vmatprep.mubr.bf16.mxu0 0
      %4430 = vmatmul.mubr.bf16.gmra.mxu0 %v4265
      %v4431 = vpop.f32.mrf.mxu0
      %v4432 = vadd.f32 0.0, %v4431
      %v4433 = vpop.f32.mrf.mxu0
      %v4434 = vpop.f32.mrf.mxu0
      %v4435 = vadd.f32 0.0, %v4434
      %v4436 = vpop.f32.mrf.mxu0
      %4437 = vmatprep.mubr.bf16.mxu0 0
      %4438 = vmatmul.mubr.bf16.gmra.mxu0 %v4266
      %v4439 = vpop.f32.mrf.mxu0
      %v4440 = vadd.f32 0.0, %v4439
      %v4441 = vpop.f32.mrf.mxu0
      %v4442 = vpop.f32.mrf.mxu0
      %v4443 = vadd.f32 0.0, %v4442
      %v4444 = vpop.f32.mrf.mxu0
      %4445 = vmatprep.mubr.bf16.mxu0 0
      %4446 = vmatmul.mubr.bf16.gmra.mxu0 %v4267
      %v4447 = vpop.f32.mrf.mxu0
      %v4448 = vadd.f32 0.0, %v4447
      %v4449 = vpop.f32.mrf.mxu0
      %v4450 = vpop.f32.mrf.mxu0
      %v4451 = vadd.f32 0.0, %v4450
      %v4452 = vpop.f32.mrf.mxu0
      %4453 = vmatprep.mubr.bf16.mxu0 0
      %4454 = vmatmul.mubr.bf16.gmra.mxu0 %v4268
      %v4455 = vpop.f32.mrf.mxu0
      %v4456 = vadd.f32 0.0, %v4455
      %v4457 = vpop.f32.mrf.mxu0
      %v4458 = vpop.f32.mrf.mxu0
      %v4459 = vadd.f32 0.0, %v4458
      %v4460 = vpop.f32.mrf.mxu0
      %4461 = vmatprep.mubr.bf16.mxu0 0
      %4462 = vmatmul.mubr.bf16.gmra.mxu0 %v4269
      %v4463 = vpop.f32.mrf.mxu0
      %v4464 = vadd.f32 0.0, %v4463
      %v4465 = vpop.f32.mrf.mxu0
      %v4466 = vpop.f32.mrf.mxu0
      %v4467 = vadd.f32 0.0, %v4466
      %v4468 = vpop.f32.mrf.mxu0
      %4469 = vmatprep.mubr.bf16.mxu0 0
      %4470 = vmatmul.mubr.bf16.gmra.mxu0 %v4270
      %v4471 = vpop.f32.mrf.mxu0
      %v4472 = vadd.f32 0.0, %v4471
      %v4473 = vpop.f32.mrf.mxu0
      %v4474 = vpop.f32.mrf.mxu0
      %v4475 = vadd.f32 0.0, %v4474
      %v4476 = vpop.f32.mrf.mxu0
      %4477 = vmatprep.mubr.bf16.mxu0 0
      %4478 = vmatmul.mubr.bf16.gmra.mxu0 %v4271
      %v4479 = vpop.f32.mrf.mxu0
      %v4480 = vadd.f32 0.0, %v4479
      %v4481 = vpop.f32.mrf.mxu0
      %v4482 = vpop.f32.mrf.mxu0
      %v4483 = vadd.f32 0.0, %v4482
      %v4484 = vpop.f32.mrf.mxu0
      %4485 = vmatprep.mubr.bf16.mxu0 0
      %4486 = vmatmul.mubr.bf16.gmra.mxu0 %v4272
      %v4487 = vpop.f32.mrf.mxu0
      %v4488 = vadd.f32 0.0, %v4487
      %v4489 = vpop.f32.mrf.mxu0
      %v4490 = vpop.f32.mrf.mxu0
      %v4491 = vadd.f32 0.0, %v4490
      %v4492 = vpop.f32.mrf.mxu0
      %4493 = vmatprep.mubr.bf16.mxu0 0
      %4494 = vmatmul.mubr.bf16.gmra.mxu0 %v4273
      %v4495 = vpop.f32.mrf.mxu0
      %v4496 = vadd.f32 0.0, %v4495
      %v4497 = vpop.f32.mrf.mxu0
      %v4498 = vpop.f32.mrf.mxu0
      %v4499 = vadd.f32 0.0, %v4498
      %v4500 = vpop.f32.mrf.mxu0
      %4501 = vmatprep.mubr.bf16.mxu0 0
      %4502 = vmatmul.mubr.bf16.gmra.mxu0 %v4274
      %v4503 = vpop.f32.mrf.mxu0
      %v4504 = vadd.f32 0.0, %v4503
      %v4505 = vpop.f32.mrf.mxu0
      %v4506 = vpop.f32.mrf.mxu0
      %v4507 = vadd.f32 0.0, %v4506
      %v4508 = vpop.f32.mrf.mxu0
      %4509 = vmatprep.mubr.bf16.mxu0 0
      %4510 = vmatmul.mubr.bf16.gmra.mxu0 %v4275
      %v4511 = vpop.f32.mrf.mxu0
      %v4512 = vadd.f32 0.0, %v4511
      %v4513 = vpop.f32.mrf.mxu0
      %v4514 = vpop.f32.mrf.mxu0
      %v4515 = vadd.f32 0.0, %v4514
      %v4516 = vpop.f32.mrf.mxu0
      %4517 = vdwg.mxu0
      %v4518 = vadd.f32 %v4186, %v4376
      %v4519 = vadd.f32 %v4187, %v4379
      %v4520 = vadd.f32 %v4188, %v4384
      %v4521 = vadd.f32 %v4189, %v4387
      %v4522 = vadd.f32 %v4190, %v4392
      %v4523 = vadd.f32 %v4191, %v4395
      %v4524 = vadd.f32 %v4192, %v4400
      %v4525 = vadd.f32 %v4193, %v4403
      %v4526 = vadd.f32 %v4194, %v4408
      %v4527 = vadd.f32 %v4195, %v4411
      %v4528 = vadd.f32 %v4196, %v4416
      %v4529 = vadd.f32 %v4197, %v4419
      %v4530 = vadd.f32 %v4198, %v4424
      %v4531 = vadd.f32 %v4199, %v4427
      %v4532 = vadd.f32 %v4200, %v4432
      %v4533 = vadd.f32 %v4201, %v4435
      %v4534 = vadd.f32 %v4202, %v4440
      %v4535 = vadd.f32 %v4203, %v4443
      %v4536 = vadd.f32 %v4204, %v4448
      %v4537 = vadd.f32 %v4205, %v4451
      %v4538 = vadd.f32 %v4206, %v4456
      %v4539 = vadd.f32 %v4207, %v4459
      %v4540 = vadd.f32 %v4208, %v4464
      %v4541 = vadd.f32 %v4209, %v4467
      %v4542 = vadd.f32 %v4210, %v4472
      %v4543 = vadd.f32 %v4211, %v4475
      %v4544 = vadd.f32 %v4212, %v4480
      %v4545 = vadd.f32 %v4213, %v4483
      %v4546 = vadd.f32 %v4214, %v4488
      %v4547 = vadd.f32 %v4215, %v4491
      %v4548 = vadd.f32 %v4216, %v4496
      %v4549 = vadd.f32 %v4217, %v4499
      %v4550 = vadd.f32 %v4218, %v4504
      %v4551 = vadd.f32 %v4219, %v4507
      %v4552 = vadd.f32 %v4220, %v4512
      %v4553 = vadd.f32 %v4221, %v4515
      %v4554 = vld [vmem:[%s5] sm:$0x1]
      %v4556 = vlaneseq
      %v4557 = vshrl.u32 %v4556, 7
      %v4558 = vsub.s32 0, %v4557
      %v4559 = vrot.slane %v4554, %v4558
      %v4561 = vmul.f32 %v4518, %v4559
      %v4562 = vmul.f32 %v4519, %v4559
      %v4563 = vmul.f32 %v4520, %v4559
      %v4564 = vmul.f32 %v4521, %v4559
      %v4565 = vmul.f32 %v4522, %v4559
      %v4566 = vmul.f32 %v4523, %v4559
      %v4567 = vmul.f32 %v4524, %v4559
      %v4568 = vmul.f32 %v4525, %v4559
      %v4569 = vmul.f32 %v4526, %v4559
      %v4570 = vmul.f32 %v4527, %v4559
      %v4571 = vmul.f32 %v4528, %v4559
      %v4572 = vmul.f32 %v4529, %v4559
      %v4573 = vmul.f32 %v4530, %v4559
      %v4574 = vmul.f32 %v4531, %v4559
      %v4575 = vmul.f32 %v4532, %v4559
      %v4576 = vmul.f32 %v4533, %v4559
      %v4577 = vmul.f32 %v4534, %v4559
      %v4578 = vmul.f32 %v4535, %v4559
      %v4579 = vmul.f32 %v4536, %v4559
      %v4580 = vmul.f32 %v4537, %v4559
      %v4581 = vmul.f32 %v4538, %v4559
      %v4582 = vmul.f32 %v4539, %v4559
      %v4583 = vmul.f32 %v4540, %v4559
      %v4584 = vmul.f32 %v4541, %v4559
      %v4585 = vmul.f32 %v4542, %v4559
      %v4586 = vmul.f32 %v4543, %v4559
      %v4587 = vmul.f32 %v4544, %v4559
      %v4588 = vmul.f32 %v4545, %v4559
      %v4589 = vmul.f32 %v4546, %v4559
      %v4590 = vmul.f32 %v4547, %v4559
      %v4591 = vmul.f32 %v4548, %v4559
      %v4592 = vmul.f32 %v4549, %v4559
      %v4593 = vmul.f32 %v4550, %v4559
      %v4594 = vmul.f32 %v4551, %v4559
      %v4595 = vmul.f32 %v4552, %v4559
      %v4596 = vmul.f32 %v4553, %v4559
      %v4597 = vld [vmem:[%s6] sm:$0x1]
      %v4599 = vlaneseq
      %v4600 = vshrl.u32 %v4599, 7
      %v4601 = vsub.s32 0, %v4600
      %v4602 = vrot.slane %v4597, %v4601
      %v4604 = vadd.f32 %v4561, %v4602
      %v4605 = vadd.f32 %v4562, %v4602
      %v4606 = vadd.f32 %v4563, %v4602
      %v4607 = vadd.f32 %v4564, %v4602
      %v4608 = vadd.f32 %v4565, %v4602
      %v4609 = vadd.f32 %v4566, %v4602
      %v4610 = vadd.f32 %v4567, %v4602
      %v4611 = vadd.f32 %v4568, %v4602
      %v4612 = vadd.f32 %v4569, %v4602
      %v4613 = vadd.f32 %v4570, %v4602
      %v4614 = vadd.f32 %v4571, %v4602
      %v4615 = vadd.f32 %v4572, %v4602
      %v4616 = vadd.f32 %v4573, %v4602
      %v4617 = vadd.f32 %v4574, %v4602
      %v4618 = vadd.f32 %v4575, %v4602
      %v4619 = vadd.f32 %v4576, %v4602
      %v4620 = vadd.f32 %v4577, %v4602
      %v4621 = vadd.f32 %v4578, %v4602
      %v4622 = vadd.f32 %v4579, %v4602
      %v4623 = vadd.f32 %v4580, %v4602
      %v4624 = vadd.f32 %v4581, %v4602
      %v4625 = vadd.f32 %v4582, %v4602
      %v4626 = vadd.f32 %v4583, %v4602
      %v4627 = vadd.f32 %v4584, %v4602
      %v4628 = vadd.f32 %v4585, %v4602
      %v4629 = vadd.f32 %v4586, %v4602
      %v4630 = vadd.f32 %v4587, %v4602
      %v4631 = vadd.f32 %v4588, %v4602
      %v4632 = vadd.f32 %v4589, %v4602
      %v4633 = vadd.f32 %v4590, %v4602
      %v4634 = vadd.f32 %v4591, %v4602
      %v4635 = vadd.f32 %v4592, %v4602
      %v4636 = vadd.f32 %v4593, %v4602
      %v4637 = vadd.f32 %v4594, %v4602
      %v4638 = vadd.f32 %v4595, %v4602
      %v4639 = vadd.f32 %v4596, %v4602
      %v4640 = vmax.f32 %v4604, 0.0
      %v4641 = vmax.f32 %v4605, 0.0
      %v4642 = vmax.f32 %v4606, 0.0
      %v4643 = vmax.f32 %v4607, 0.0
      %v4644 = vmax.f32 %v4608, 0.0
      %v4645 = vmax.f32 %v4609, 0.0
      %v4646 = vmax.f32 %v4610, 0.0
      %v4647 = vmax.f32 %v4611, 0.0
      %v4648 = vmax.f32 %v4612, 0.0
      %v4649 = vmax.f32 %v4613, 0.0
      %v4650 = vmax.f32 %v4614, 0.0
      %v4651 = vmax.f32 %v4615, 0.0
      %v4652 = vmax.f32 %v4616, 0.0
      %v4653 = vmax.f32 %v4617, 0.0
      %v4654 = vmax.f32 %v4618, 0.0
      %v4655 = vmax.f32 %v4619, 0.0
      %v4656 = vmax.f32 %v4620, 0.0
      %v4657 = vmax.f32 %v4621, 0.0
      %v4658 = vmax.f32 %v4622, 0.0
      %v4659 = vmax.f32 %v4623, 0.0
      %v4660 = vmax.f32 %v4624, 0.0
      %v4661 = vmax.f32 %v4625, 0.0
      %v4662 = vmax.f32 %v4626, 0.0
      %v4663 = vmax.f32 %v4627, 0.0
      %v4664 = vmax.f32 %v4628, 0.0
      %v4665 = vmax.f32 %v4629, 0.0
      %v4666 = vmax.f32 %v4630, 0.0
      %v4667 = vmax.f32 %v4631, 0.0
      %v4668 = vmax.f32 %v4632, 0.0
      %v4669 = vmax.f32 %v4633, 0.0
      %v4670 = vmax.f32 %v4634, 0.0
      %v4671 = vmax.f32 %v4635, 0.0
      %v4672 = vmax.f32 %v4636, 0.0
      %v4673 = vmax.f32 %v4637, 0.0
      %v4674 = vmax.f32 %v4638, 0.0
      %v4675 = vmax.f32 %v4639, 0.0
      %4676 = vst [vmem:[%s278] sm:$0xff] %v4640
      %4677 = vst [vmem:[%s278 + $0x8] sm:$0xff] %v4641
      %4678 = vst [vmem:[%s278 + $0x10] sm:$0xff] %v4642
      %4679 = vst [vmem:[%s278 + $0x18] sm:$0xff] %v4643
      %4680 = vst [vmem:[%s278 + $0x20] sm:$0xff] %v4644
      %4681 = vst [vmem:[%s278 + $0x28] sm:$0xff] %v4645
      %4682 = vst [vmem:[%s278 + $0x30] sm:$0xff] %v4646
      %4683 = vst [vmem:[%s278 + $0x38] sm:$0xff] %v4647
      %4684 = vst [vmem:[%s278 + $0x40] sm:$0xff] %v4648
      %4685 = vst [vmem:[%s278 + $0x48] sm:$0xff] %v4649
      %4686 = vst [vmem:[%s278 + $0x50] sm:$0xff] %v4650
      %4687 = vst [vmem:[%s278 + $0x58] sm:$0xff] %v4651
      %4688 = vst [vmem:[%s278 + $0x60] sm:$0xff] %v4652
      %4689 = vst [vmem:[%s278 + $0x68] sm:$0xff] %v4653
      %4690 = vst [vmem:[%s278 + $0x70] sm:$0xff] %v4654
      %4691 = vst [vmem:[%s278 + $0x78] sm:$0xff] %v4655
      %4692 = vst [vmem:[%s278 + $0x80] sm:$0xff] %v4656
      %4693 = vst [vmem:[%s278 + $0x88] sm:$0xff] %v4657
      %4694 = vst [vmem:[%s278 + $0x90] sm:$0xff] %v4658
      %4695 = vst [vmem:[%s278 + $0x98] sm:$0xff] %v4659
      %4696 = vst [vmem:[%s278 + $0xa0] sm:$0xff] %v4660
      %4697 = vst [vmem:[%s278 + $0xa8] sm:$0xff] %v4661
      %4698 = vst [vmem:[%s278 + $0xb0] sm:$0xff] %v4662
      %4699 = vst [vmem:[%s278 + $0xb8] sm:$0xff] %v4663
      %4700 = vst [vmem:[%s278 + $0xc0] sm:$0xff] %v4664
      %4701 = vst [vmem:[%s278 + $0xc8] sm:$0xff] %v4665
      %4702 = vst [vmem:[%s278 + $0xd0] sm:$0xff] %v4666
      %4703 = vst [vmem:[%s278 + $0xd8] sm:$0xff] %v4667
      %4704 = vst [vmem:[%s278 + $0xe0] sm:$0xff] %v4668
      %4705 = vst [vmem:[%s278 + $0xe8] sm:$0xff] %v4669
      %4706 = vst [vmem:[%s278 + $0xf0] sm:$0xff] %v4670
      %4707 = vst [vmem:[%s278 + $0xf8] sm:$0xff] %v4671
      %4708 = vst [vmem:[%s278 + $0x100] sm:$0xff] %v4672
      %4709 = vst [vmem:[%s278 + $0x108] sm:$0xff] %v4673
      %4710 = vst [vmem:[%s278 + $0x110] sm:$0xff] %v4674
      %4711 = vst [vmem:[%s278 + $0x118] sm:$0xff] %v4675
      %p4712 = scmp.lt.s32.totalorder %s18, 1
      %s4713 = scalar_select %p4712, %s18, 1
      %s4714 = smul.addr %s4713, 36
      %s4715 = smul.addr %s4714, 8
      %s4716 = scalar_lea.vmem %s7, %s4715
      // Predicated region
      $region49: #{conv_block_fwd.1} parent=47 // pred_check
        %p4717 = pneg %p188
      $region50: #{conv_block_fwd.1} parent=47 // pred_check_branch
        %4719 = sbr.rel (%p4717) target = $region52
      $region51: #{conv_block_fwd.1} parent=47 // pred_region
        _
      $region52: #{conv_block_fwd.1} parent=47 // pred_fallthru
        _
    $region48: #{conv_block_fwd.1} parent=5 // pred_fallthru
      _
    %p4720 = scmp.le.s32.totalorder 2, %s13
    // Predicated region
    $region53: #{conv_block_fwd.1} parent=5 // pred_check
      %p4721 = pneg %p4720
    $region54: #{conv_block_fwd.1} parent=5 // pred_check_branch
      %4723 = sbr.rel (%p4721) target = $region56
    $region55: #{conv_block_fwd.1} parent=5 // pred_region
      %s4724 = ssub.s32 %s13, 2
      // Predicated region
      $region57: #{conv_block_fwd.1} parent=55 // pred_check
        %p4725 = pneg %p194
      $region58: #{conv_block_fwd.1} parent=55 // pred_check_branch
        %4727 = sbr.rel (%p4725) target = $region60
      $region59: #{conv_block_fwd.1} parent=55 // pred_region
        %p4728 = scmp.lt.s32.totalorder %s19, 1
        %s4729 = scalar_select %p4728, %s19, 1
        %s4730 = smul.addr %s4729, 36
        %s4731 = smul.addr %s4730, 8
        %s4732 = scalar_lea.vmem %s7, %s4731
      $region60: #{conv_block_fwd.1} parent=55 // pred_fallthru
        _
    $region56: #{conv_block_fwd.1} parent=5 // pred_fallthru
      _
  $region6: #{conv_block_fwd.1} parent=0 // loop_footer
    %s17 = sadd.s32 1, %s13
  $region7: #{conv_block_fwd.1} parent=0 // loop_footer_branch
    %12 = sbr.rel target = $region3
  $region8: #{conv_block_fwd.1} parent=0 // loop_exit
    _

</llo_original>
